<compile_context>
chip_gen: v7x
topology: tpu7x:2x2x1
jax: 0.10.0
libtpu: 0.0.40
codegen_flags: <defaults>
</compile_context>

<pallas_src>
import jax
import jax.numpy as jnp
from jax import lax
from jax.experimental import pallas as pl
from jax.experimental.pallas import tpu as pltpu

ODE_UNFOLDS = 6
EPS = 1e-8
LANES = 128


def _round_up(n, m):
    return ((n + m - 1) // m) * m


# ----------------------------------------------------------------------------
# Parameter packing: one lane-dense (rows, 128) f32 buffer (single DMA).
# Synapse block columns (4*U == 128 for U == 32):
#   [0:U] mu   [U:2U] sigma   [2U:3U] w*erev   [3U:4U] w
# ([2U:4U] is the pre-concatenated weight for the fused num/den reduce).
# Misc block rows: 0 input_w, 1 input_b, 2 gleak, 3 vleak, 4 cm.
# ----------------------------------------------------------------------------
def _syn_block(mu, sigma, w, erev, S, U):
    blk = jnp.zeros((_round_up(S, 8), LANES), jnp.float32)
    blk = blk.at[:S, 0 * U:1 * U].set(mu)
    blk = blk.at[:S, 1 * U:2 * U].set(sigma)
    blk = blk.at[:S, 2 * U:3 * U].set(w * erev)
    blk = blk.at[:S, 3 * U:4 * U].set(w)
    return blk


def _misc_block(in_w, in_b, gleak, vleak, cm, S, U):
    blk = jnp.zeros((8, LANES), jnp.float32)
    blk = blk.at[0, :S].set(in_w)
    blk = blk.at[1, :S].set(in_b)
    blk = blk.at[2, :U].set(gleak)
    blk = blk.at[3, :U].set(vleak)
    blk = blk.at[4, :U].set(cm)
    return blk


def pack_params(params, S1, U, C):
    assert 4 * U <= LANES and U % 8 == 0, "packing assumes units <= 32"
    p1, p2 = params["ltc1"], params["ltc2"]
    # Fold layer-1's elementwise output map into layer-2's input map (exact).
    in_w2 = p1["output_w"] * p2["input_w"]
    in_b2 = p1["output_b"] * p2["input_w"] + p2["input_b"]
    blocks = [
        ("L1_SENS", _syn_block(p1["sens_mu"], p1["sens_sigma"],
                               p1["sens_w"], p1["sens_erev"], S1, U)),
        ("L1_REC", _syn_block(p1["mu"], p1["sigma"], p1["w"], p1["erev"], U, U)),
        ("L1_MISC", _misc_block(p1["input_w"], p1["input_b"],
                                p1["gleak"], p1["vleak"], p1["cm"], S1, U)),
        ("L2_SENS", _syn_block(p2["sens_mu"], p2["sens_sigma"],
                               p2["sens_w"], p2["sens_erev"], U, U)),
        ("L2_REC", _syn_block(p2["mu"], p2["sigma"], p2["w"], p2["erev"], U, U)),
        ("L2_MISC", _misc_block(in_w2, in_b2,
                                p2["gleak"], p2["vleak"], p2["cm"], U, U)),
        ("DENSE_W", jnp.zeros((U, LANES), jnp.float32).at[:, :C].set(
            params["dense_w"])),
        ("DENSE_B", jnp.zeros((8, LANES), jnp.float32).at[0, :C].set(
            params["dense_b"])),
    ]
    offsets, row = {}, 0
    for name, blk in blocks:
        offsets[name] = row
        row += blk.shape[0]
    return jnp.concatenate([b for _, b in blocks], axis=0), offsets


# ----------------------------------------------------------------------------
# Fused model kernel (one batch block per grid step).
# ----------------------------------------------------------------------------
def make_kernel(offs, *, S1, U, C, T, bb):
    L1_SENS, L1_REC, L1_MISC = offs["L1_SENS"], offs["L1_REC"], offs["L1_MISC"]
    L2_SENS, L2_REC, L2_MISC = offs["L2_SENS"], offs["L2_REC"], offs["L2_MISC"]
    DENSE_W, DENSE_B = offs["DENSE_W"], offs["DENSE_B"]
    U2 = 2 * U

    def sigmoid(z):
        # one EUP op per call (instead of exp + divide)
        return 0.5 * jnp.tanh(0.5 * z) + 0.5

    def kernel(x_ref, p_ref, o_ref, ws_ref, seq_ref):
        # x_ref  : (T, bb, S1)  time-major input block
        # p_ref  : (rows, 128)  packed parameters (single DMA)
        # o_ref  : (bb, C)      logits block
        # ws_ref : (T, bb, 2U)  per-step sensory [num | den] terms   (scratch)
        # seq_ref: (T, bb, U)   layer-1 raw state sequence           (scratch)

        def sensory_prepass(inp_ref, S, row_syn, row_misc):
            # Independent of the recurrent state -> off the serial chain.
            iw = p_ref[row_misc:row_misc + 1, 0:S]              # (1, S)
            ib = p_ref[row_misc + 1:row_misc + 2, 0:S]          # (1, S)
            mu = p_ref[row_syn:row_syn + S, 0:U][None]          # (1, S, U)
            sg = p_ref[row_syn:row_syn + S, U:U2][None]         # (1, S, U)
            wc = p_ref[row_syn:row_syn + S, U2:4 * U][None]     # (1, S, 2U)

            @pl.loop(0, T)
            def _(t):
                m = inp_ref[t] * iw + ib                        # (bb, S)
                s = sigmoid(sg * (m[:, :, None] - mu))          # (bb, S, U)
                s2 = jnp.concatenate([s, s], axis=-1)           # (bb, S, 2U)
                ws_ref[t] = jnp.sum(s2 * wc, axis=1)            # (bb, 2U)

        def recurrence(row_syn, row_misc, store_seq):
            mu = p_ref[row_syn:row_syn + U, 0:U][None]          # (1, U, U)
            sg = p_ref[row_syn:row_syn + U, U:U2][None]
            wc = p_ref[row_syn:row_syn + U, U2:4 * U][None]     # (1, U, 2U)
            gleak = p_ref[row_misc + 2:row_misc + 3, 0:U]       # (1, U)
            vleak = p_ref[row_misc + 3:row_misc + 4, 0:U]
            cm = p_ref[row_misc + 4:row_misc + 5, 0:U]
            # hoisted loop invariants (elapsed_time = 1.0)
            cm_t = cm * float(ODE_UNFOLDS)
            gl_vl = gleak * vleak
            den_const = cm_t + gleak + EPS

            def step(t, v):
                ws = ws_ref[t]                                  # (bb, 2U)
                wns = ws[:, 0:U]
                wds = ws[:, U:U2]
                for _ in range(ODE_UNFOLDS):                    # fused ODE solver
                    s = sigmoid(sg * (v[:, :, None] - mu))      # (bb, U, U)
                    s2 = jnp.concatenate([s, s], axis=-1)       # (bb, U, 2U)
                    red = jnp.sum(s2 * wc, axis=1)              # ONE XLU reduce
                    num = cm_t * v + gl_vl + red[:, 0:U] + wns
                    den = den_const + red[:, U:U2] + wds
                    r = pl.reciprocal(den, approx=True)         # EUP slot
                    r = r * (2.0 - den * r)                     # Newton -> ~f32 exact
                    v = num * r
                if store_seq:
                    seq_ref[t] = v              # raw state; out-map folded into L2
                return v

            return lax.fori_loop(0, T, step, jnp.zeros((bb, U), jnp.float32))

        # ---- layer 1 ----
        sensory_prepass(x_ref, S1, L1_SENS, L1_MISC)
        recurrence(L1_REC, L1_MISC, store_seq=True)
        # ---- layer 2 (input map already fused with layer-1 output map) ----
        sensory_prepass(seq_ref, U, L2_SENS, L2_MISC)
        v2 = recurrence(L2_REC, L2_MISC, store_seq=False)
        # ---- dense head on the VPU (dropout is identity at inference) ----
        # TODO(synk): nn.Dropout(p=0.1) train-mode RNG not implemented (eval path).
        dw = p_ref[DENSE_W:DENSE_W + U, 0:C]                    # (U, C)
        db = p_ref[DENSE_B:DENSE_B + 1, 0:C]                    # (1, C)
        o_ref[...] = jnp.sum(v2[:, :, None] * dw[None], axis=1) + db

    return kernel


# ----------------------------------------------------------------------------
# Model forward: single fused pallas_call, batch grid axis ("parallel").
# ----------------------------------------------------------------------------
def model_forward(params, x, l):
    # x: (B, T, n_features+1), batch_first; `l` is unused in the reference forward.
    del l
    B, T, S1 = x.shape
    U = params["ltc1"]["w"].shape[0]
    C = params["dense_w"].shape[1]

    p_buf, offs = pack_params(params, S1, U, C)
    rows = p_buf.shape[0]

    bb = 8 if B % 8 == 0 else B           # batch block per grid step
    nb = B // bb

    x_t = jnp.transpose(x, (1, 0, 2)).astype(jnp.float32)      # (T, B, S1)

    kernel = make_kernel(offs, S1=S1, U=U, C=C, T=T, bb=bb)

    return pl.pallas_call(
        kernel,
        out_shape=jax.ShapeDtypeStruct((B, C), jnp.float32),
        grid=(nb,),
        in_specs=[
            pl.BlockSpec((T, bb, S1), lambda i: (0, i, 0)),
            pl.BlockSpec((rows, LANES), lambda i: (0, 0)),
        ],
        out_specs=pl.BlockSpec((bb, C), lambda i: (i, 0)),
        scratch_shapes=[
            pltpu.VMEM((T, bb, 2 * U), jnp.float32),   # sensory [num|den] per step
            pltpu.VMEM((T, bb, U), jnp.float32),       # layer-1 state sequence
        ],
        compiler_params=pltpu.CompilerParams(dimension_semantics=("parallel",)),
    )(x_t, p_buf)


# ----------------------------------------------------------------------------
# Deterministic parameter init (ncps init ranges; input/output maps = identity)
# ----------------------------------------------------------------------------
def init_ltc_params(key, input_size, units):
    ks = jax.random.split(key, 11)
    u = lambda k, shp, lo, hi: jax.random.uniform(k, shp, jnp.float32, lo, hi)
    pm1 = lambda k, shp: jnp.where(jax.random.bernoulli(k, 0.5, shp),
                                   1.0, -1.0).astype(jnp.float32)
    return {
        "sens_w": u(ks[0], (input_size, units), 0.001, 1.0),
        "sens_mu": u(ks[1], (input_size, units), 0.3, 0.8),
        "sens_sigma": u(ks[2], (input_size, units), 3.0, 8.0),
        "sens_erev": pm1(ks[3], (input_size, units)),
        "w": u(ks[4], (units, units), 0.001, 1.0),
        "mu": u(ks[5], (units, units), 0.3, 0.8),
        "sigma": u(ks[6], (units, units), 3.0, 8.0),
        "erev": pm1(ks[7], (units, units)),
        "gleak": u(ks[8], (units,), 0.001, 1.0),
        "vleak": u(ks[9], (units,), -0.2, 0.2),
        "cm": u(ks[10], (units,), 0.4, 0.6),
        "input_w": jnp.ones((input_size,), jnp.float32),
        "input_b": jnp.zeros((input_size,), jnp.float32),
        "output_w": jnp.ones((units,), jnp.float32),
        "output_b": jnp.zeros((units,), jnp.float32),
    }


def init_model_params(key, n_features=8, model_size=32, n_classes=10):
    k1, k2, k3, k4 = jax.random.split(key, 4)
    bound = 1.0 / jnp.sqrt(model_size)
    return {
        "ltc1": init_ltc_params(k1, n_features + 1, model_size),
        "ltc2": init_ltc_params(k2, model_size, model_size),
        "dense_w": jax.random.uniform(k3, (model_size, n_classes),
                                      jnp.float32, -bound, bound),
        "dense_b": jax.random.uniform(k4, (n_classes,),
                                      jnp.float32, -bound, bound),
    }


# ----------------------------------------------------------------------------
# Pure-JAX reference (mirrors ncps math directly from raw params)
# ----------------------------------------------------------------------------
def _ltc_ref(p, x_seq):
    B, T, _ = x_seq.shape
    U = p["w"].shape[0]

    def sigm(v, mu, sigma):
        return jax.nn.sigmoid(sigma * (v[..., None] - mu))

    v = jnp.zeros((B, U), jnp.float32)
    outs = []
    cm_t = p["cm"] * ODE_UNFOLDS
    for t in range(T):
        inp = x_seq[:, t, :] * p["input_w"] + p["input_b"]
        sens_act = p["sens_w"] * sigm(inp, p["sens_mu"], p["sens_sigma"])
        w_num_s = jnp.sum(sens_act * p["sens_erev"], axis=1)
        w_den_s = jnp.sum(sens_act, axis=1)
        for _ in range(ODE_UNFOLDS):
            act = p["w"] * sigm(v, p["mu"], p["sigma"])
            w_num = jnp.sum(act * p["erev"], axis=1) + w_num_s
            w_den = jnp.sum(act, axis=1) + w_den_s
            num = cm_t * v + p["gleak"] * p["vleak"] + w_num
            den = cm_t + p["gleak"] + w_den
            v = num / (den + EPS)
        outs.append(v * p["output_w"] + p["output_b"])
    return jnp.stack(outs, axis=1), v


def model_ref(params, x):
    seq1, _ = _ltc_ref(params["ltc1"], x)
    _, h2 = _ltc_ref(params["ltc2"], seq1)
    return h2 @ params["dense_w"] + params["dense_b"]


if __name__ == "__main__":
    key = jax.random.PRNGKey(0)
    B, T = 2, 8
    n_features, model_size, n_classes = 8, 32, 10
    S1 = n_features + 1

    kx, kp = jax.random.split(key, 2)
    x = jax.random.normal(kx, (B, T, S1), dtype=jnp.float32)
    l = jnp.full((B,), T, dtype=jnp.int32)          # lengths, unused by forward

    params = init_model_params(kp, n_features, model_size, n_classes)

    logits = jax.block_until_ready(model_forward(params, x, l))
    assert logits.shape == (B, n_classes)
    assert bool(jnp.all(jnp.isfinite(logits)))

    ref = jax.block_until_ready(jax.jit(model_ref)(params, x))
    max_err = float(jnp.max(jnp.abs(logits - ref)))
    assert max_err < 1e-3, f"mismatch vs reference: {max_err}"

    print("KERNEL_OK")
</pallas_src>

<mosaic_0001>
module attributes {stable_mosaic.version = 11 : i64} {
  func.func @kernel(%arg0: i32, %arg1: memref<8x2x9xf32, #tpu.memory_space<vmem>>, %arg2: memref<168x128xf32, #tpu.memory_space<vmem>>, %arg3: memref<2x10xf32, #tpu.memory_space<vmem>>, %arg4: memref<8x2x64xf32, #tpu.memory_space<vmem>>, %arg5: memref<8x2x32xf32, #tpu.memory_space<vmem>>) attributes {dimension_semantics = [#tpu.dimension_semantics<parallel>], iteration_bounds = array<i64: 1>, scalar_prefetch = 0 : i64, scratch_operands = 2 : i64, tpu.core_type = #tpu.core_type<tc>, window_params = [{transform_indices = @transform_0, window_bounds = array<i64: 8, 2, 9>}, {pipeline_mode = #tpu.pipeline_mode<synchronous>, transform_indices = @transform_1, window_bounds = array<i64: 168, 128>}, {transform_indices = @transform_2, window_bounds = array<i64: 2, 10>}]} {
    %c48 = arith.constant 48 : index
    %c0 = arith.constant 0 : index
    %0 = vector.load %arg2[%c48, %c0] : memref<168x128xf32, #tpu.memory_space<vmem>>, vector<1x9xf32>
    %c49 = arith.constant 49 : index
    %c0_0 = arith.constant 0 : index
    %1 = vector.load %arg2[%c49, %c0_0] : memref<168x128xf32, #tpu.memory_space<vmem>>, vector<1x9xf32>
    %c0_1 = arith.constant 0 : index
    %c0_2 = arith.constant 0 : index
    %2 = vector.load %arg2[%c0_1, %c0_2] : memref<168x128xf32, #tpu.memory_space<vmem>>, vector<9x32xf32>
    %3 = vector.shape_cast %2 : vector<9x32xf32> to vector<1x9x32xf32>
    %c0_3 = arith.constant 0 : index
    %c32 = arith.constant 32 : index
    %4 = vector.load %arg2[%c0_3, %c32] : memref<168x128xf32, #tpu.memory_space<vmem>>, vector<9x32xf32>
    %5 = vector.shape_cast %4 : vector<9x32xf32> to vector<1x9x32xf32>
    %c0_4 = arith.constant 0 : index
    %c64 = arith.constant 64 : index
    %6 = vector.load %arg2[%c0_4, %c64] : memref<168x128xf32, #tpu.memory_space<vmem>>, vector<9x64xf32>
    %7 = vector.shape_cast %6 : vector<9x64xf32> to vector<1x9x64xf32>
    %c0_i32 = arith.constant 0 : i32
    %c8_i32 = arith.constant 8 : i32
    %8 = arith.addi %c0_i32, %c8_i32 : i32
    %c1_i32 = arith.constant 1 : i32
    scf.for %arg6 = %c0_i32 to %8 step %c1_i32  : i32 {
      %c1_i32_51 = arith.constant 1 : i32
      %65 = arith.muli %arg6, %c1_i32_51 : i32
      %c0_i32_52 = arith.constant 0 : i32
      %66 = arith.addi %c0_i32_52, %65 : i32
      %67 = arith.index_cast %66 : i32 to index
      %c0_53 = arith.constant 0 : index
      %c0_54 = arith.constant 0 : index
      %68 = vector.load %arg1[%67, %c0_53, %c0_54] : memref<8x2x9xf32, #tpu.memory_space<vmem>>, vector<1x2x9xf32>
      %69 = vector.shape_cast %68 : vector<1x2x9xf32> to vector<2x9xf32>
      %70 = vector.broadcast %0 : vector<1x9xf32> to vector<2x9xf32>
      %71 = arith.mulf %69, %70 : vector<2x9xf32>
      %72 = vector.broadcast %1 : vector<1x9xf32> to vector<2x9xf32>
      %73 = arith.addf %71, %72 : vector<2x9xf32>
      %74 = vector.shape_cast %73 : vector<2x9xf32> to vector<2x9x1xf32>
      %75 = vector.broadcast %74 : vector<2x9x1xf32> to vector<2x9x32xf32>
      %76 = vector.broadcast %3 : vector<1x9x32xf32> to vector<2x9x32xf32>
      %77 = arith.subf %75, %76 : vector<2x9x32xf32>
      %78 = vector.broadcast %5 : vector<1x9x32xf32> to vector<2x9x32xf32>
      %79 = arith.mulf %78, %77 : vector<2x9x32xf32>
      %cst_55 = arith.constant 5.000000e-01 : f32
      %80 = vector.broadcast %cst_55 : f32 to vector<2x9x32xf32>
      %81 = arith.mulf %80, %79 : vector<2x9x32xf32>
      %82 = math.tanh %81 : vector<2x9x32xf32>
      %cst_56 = arith.constant 5.000000e-01 : f32
      %83 = vector.broadcast %cst_56 : f32 to vector<2x9x32xf32>
      %84 = arith.mulf %83, %82 : vector<2x9x32xf32>
      %cst_57 = arith.constant 5.000000e-01 : f32
      %85 = vector.broadcast %cst_57 : f32 to vector<2x9x32xf32>
      %86 = arith.addf %84, %85 : vector<2x9x32xf32>
      %87 = tpu.concatenate %86, %86 in 2 : vector<2x9x32xf32>, vector<2x9x32xf32> -> vector<2x9x64xf32>
      %88 = vector.broadcast %7 : vector<1x9x64xf32> to vector<2x9x64xf32>
      %89 = arith.mulf %87, %88 : vector<2x9x64xf32>
      %cst_58 = arith.constant dense<0.000000e+00> : vector<2x64xf32>
      %90 = vector.multi_reduction <add>, %89, %cst_58 [1] : vector<2x9x64xf32> to vector<2x64xf32>
      %91 = arith.index_cast %66 : i32 to index
      %c0_59 = arith.constant 0 : index
      %c0_60 = arith.constant 0 : index
      %92 = vector.load %arg4[%91, %c0_59, %c0_60] : memref<8x2x64xf32, #tpu.memory_space<vmem>>, vector<1x2x64xf32>
      %93 = vector.shape_cast %92 : vector<1x2x64xf32> to vector<2x64xf32>
      %94 = vector.shape_cast %90 : vector<2x64xf32> to vector<1x2x64xf32>
      tpu.vector_store %arg4[%91, %c0_59, %c0_60], %94 {strides = array<i32>} : memref<8x2x64xf32, #tpu.memory_space<vmem>>, vector<1x2x64xf32>,
    }
    %c8_i32_5 = arith.constant 8 : i32
    %c16 = arith.constant 16 : index
    %c0_6 = arith.constant 0 : index
    %9 = vector.load %arg2[%c16, %c0_6] : memref<168x128xf32, #tpu.memory_space<vmem>>, vector<32x32xf32>
    %10 = vector.shape_cast %9 : vector<32x32xf32> to vector<1x32x32xf32>
    %c16_7 = arith.constant 16 : index
    %c32_8 = arith.constant 32 : index
    %11 = vector.load %arg2[%c16_7, %c32_8] : memref<168x128xf32, #tpu.memory_space<vmem>>, vector<32x32xf32>
    %12 = vector.shape_cast %11 : vector<32x32xf32> to vector<1x32x32xf32>
    %c16_9 = arith.constant 16 : index
    %c64_10 = arith.constant 64 : index
    %13 = vector.load %arg2[%c16_9, %c64_10] : memref<168x128xf32, #tpu.memory_space<vmem>>, vector<32x64xf32>
    %14 = vector.shape_cast %13 : vector<32x64xf32> to vector<1x32x64xf32>
    %c50 = arith.constant 50 : index
    %c0_11 = arith.constant 0 : index
    %15 = vector.load %arg2[%c50, %c0_11] : memref<168x128xf32, #tpu.memory_space<vmem>>, vector<1x32xf32>
    %c51 = arith.constant 51 : index
    %c0_12 = arith.constant 0 : index
    %16 = vector.load %arg2[%c51, %c0_12] : memref<168x128xf32, #tpu.memory_space<vmem>>, vector<1x32xf32>
    %c52 = arith.constant 52 : index
    %c0_13 = arith.constant 0 : index
    %17 = vector.load %arg2[%c52, %c0_13] : memref<168x128xf32, #tpu.memory_space<vmem>>, vector<1x32xf32>
    %cst = arith.constant 6.000000e+00 : f32
    %18 = vector.broadcast %cst : f32 to vector<1x32xf32>
    %19 = arith.mulf %17, %18 : vector<1x32xf32>
    %20 = arith.mulf %15, %16 : vector<1x32xf32>
    %21 = arith.addf %19, %15 : vector<1x32xf32>
    %cst_14 = arith.constant 9.99999993E-9 : f32
    %22 = vector.broadcast %cst_14 : f32 to vector<1x32xf32>
    %23 = arith.addf %21, %22 : vector<1x32xf32>
    %cst_15 = arith.constant 0.000000e+00 : f32
    %24 = vector.broadcast %cst_15 : f32 to vector<2x32xf32>
    %c0_i32_16 = arith.constant 0 : i32
    %c8_i32_17 = arith.constant 8 : i32
    %25 = arith.addi %c0_i32_16, %c8_i32_17 : i32
    %c1_i32_18 = arith.constant 1 : i32
    %26 = scf.for %arg6 = %c0_i32_16 to %25 step %c1_i32_18 iter_args(%arg7 = %24) -> (vector<2x32xf32>)  : i32 {
      %65 = arith.index_cast %arg6 : i32 to index
      %c0_51 = arith.constant 0 : index
      %c0_52 = arith.constant 0 : index
      %66 = vector.load %arg4[%65, %c0_51, %c0_52] : memref<8x2x64xf32, #tpu.memory_space<vmem>>, vector<1x2x64xf32>
      %67 = vector.shape_cast %66 : vector<1x2x64xf32> to vector<2x64xf32>
      %68 = vector.extract_strided_slice %67 {offsets = [0, 0], sizes = [2, 32], strides = [1, 1]} : vector<2x64xf32> to vector<2x32xf32>
      %69 = vector.extract_strided_slice %67 {offsets = [0, 32], sizes = [2, 32], strides = [1, 1]} : vector<2x64xf32> to vector<2x32xf32>
      %70 = vector.shape_cast %arg7 : vector<2x32xf32> to vector<2x32x1xf32>
      %71 = vector.broadcast %70 : vector<2x32x1xf32> to vector<2x32x32xf32>
      %72 = vector.broadcast %10 : vector<1x32x32xf32> to vector<2x32x32xf32>
      %73 = arith.subf %71, %72 : vector<2x32x32xf32>
      %74 = vector.broadcast %12 : vector<1x32x32xf32> to vector<2x32x32xf32>
      %75 = arith.mulf %74, %73 : vector<2x32x32xf32>
      %cst_53 = arith.constant 5.000000e-01 : f32
      %76 = vector.broadcast %cst_53 : f32 to vector<2x32x32xf32>
      %77 = arith.mulf %76, %75 : vector<2x32x32xf32>
      %78 = math.tanh %77 : vector<2x32x32xf32>
      %cst_54 = arith.constant 5.000000e-01 : f32
      %79 = vector.broadcast %cst_54 : f32 to vector<2x32x32xf32>
      %80 = arith.mulf %79, %78 : vector<2x32x32xf32>
      %cst_55 = arith.constant 5.000000e-01 : f32
      %81 = vector.broadcast %cst_55 : f32 to vector<2x32x32xf32>
      %82 = arith.addf %80, %81 : vector<2x32x32xf32>
      %83 = tpu.concatenate %82, %82 in 2 : vector<2x32x32xf32>, vector<2x32x32xf32> -> vector<2x32x64xf32>
      %84 = vector.broadcast %14 : vector<1x32x64xf32> to vector<2x32x64xf32>
      %85 = arith.mulf %83, %84 : vector<2x32x64xf32>
      %cst_56 = arith.constant dense<0.000000e+00> : vector<2x64xf32>
      %86 = vector.multi_reduction <add>, %85, %cst_56 [1] : vector<2x32x64xf32> to vector<2x64xf32>
      %87 = vector.broadcast %19 : vector<1x32xf32> to vector<2x32xf32>
      %88 = arith.mulf %87, %arg7 : vector<2x32xf32>
      %89 = vector.broadcast %20 : vector<1x32xf32> to vector<2x32xf32>
      %90 = arith.addf %88, %89 : vector<2x32xf32>
      %91 = vector.extract_strided_slice %86 {offsets = [0, 0], sizes = [2, 32], strides = [1, 1]} : vector<2x64xf32> to vector<2x32xf32>
      %92 = arith.addf %90, %91 : vector<2x32xf32>
      %93 = arith.addf %92, %68 : vector<2x32xf32>
      %94 = vector.extract_strided_slice %86 {offsets = [0, 32], sizes = [2, 32], strides = [1, 1]} : vector<2x64xf32> to vector<2x32xf32>
      %95 = vector.broadcast %23 : vector<1x32xf32> to vector<2x32xf32>
      %96 = arith.addf %95, %94 : vector<2x32xf32>
      %97 = arith.addf %96, %69 : vector<2x32xf32>
      %98 = tpu.reciprocal %97 {approx = true} : vector<2x32xf32> -> vector<2x32xf32>
      %99 = arith.mulf %97, %98 : vector<2x32xf32>
      %cst_57 = arith.constant 2.000000e+00 : f32
      %100 = vector.broadcast %cst_57 : f32 to vector<2x32xf32>
      %101 = arith.subf %100, %99 : vector<2x32xf32>
      %102 = arith.mulf %98, %101 : vector<2x32xf32>
      %103 = arith.mulf %93, %102 : vector<2x32xf32>
      %104 = vector.shape_cast %103 : vector<2x32xf32> to vector<2x32x1xf32>
      %105 = vector.broadcast %104 : vector<2x32x1xf32> to vector<2x32x32xf32>
      %106 = vector.broadcast %10 : vector<1x32x32xf32> to vector<2x32x32xf32>
      %107 = arith.subf %105, %106 : vector<2x32x32xf32>
      %108 = vector.broadcast %12 : vector<1x32x32xf32> to vector<2x32x32xf32>
      %109 = arith.mulf %108, %107 : vector<2x32x32xf32>
      %cst_58 = arith.constant 5.000000e-01 : f32
      %110 = vector.broadcast %cst_58 : f32 to vector<2x32x32xf32>
      %111 = arith.mulf %110, %109 : vector<2x32x32xf32>
      %112 = math.tanh %111 : vector<2x32x32xf32>
      %cst_59 = arith.constant 5.000000e-01 : f32
      %113 = vector.broadcast %cst_59 : f32 to vector<2x32x32xf32>
      %114 = arith.mulf %113, %112 : vector<2x32x32xf32>
      %cst_60 = arith.constant 5.000000e-01 : f32
      %115 = vector.broadcast %cst_60 : f32 to vector<2x32x32xf32>
      %116 = arith.addf %114, %115 : vector<2x32x32xf32>
      %117 = tpu.concatenate %116, %116 in 2 : vector<2x32x32xf32>, vector<2x32x32xf32> -> vector<2x32x64xf32>
      %118 = vector.broadcast %14 : vector<1x32x64xf32> to vector<2x32x64xf32>
      %119 = arith.mulf %117, %118 : vector<2x32x64xf32>
      %cst_61 = arith.constant dense<0.000000e+00> : vector<2x64xf32>
      %120 = vector.multi_reduction <add>, %119, %cst_61 [1] : vector<2x32x64xf32> to vector<2x64xf32>
      %121 = vector.broadcast %19 : vector<1x32xf32> to vector<2x32xf32>
      %122 = arith.mulf %121, %103 : vector<2x32xf32>
      %123 = vector.broadcast %20 : vector<1x32xf32> to vector<2x32xf32>
      %124 = arith.addf %122, %123 : vector<2x32xf32>
      %125 = vector.extract_strided_slice %120 {offsets = [0, 0], sizes = [2, 32], strides = [1, 1]} : vector<2x64xf32> to vector<2x32xf32>
      %126 = arith.addf %124, %125 : vector<2x32xf32>
      %127 = arith.addf %126, %68 : vector<2x32xf32>
      %128 = vector.extract_strided_slice %120 {offsets = [0, 32], sizes = [2, 32], strides = [1, 1]} : vector<2x64xf32> to vector<2x32xf32>
      %129 = vector.broadcast %23 : vector<1x32xf32> to vector<2x32xf32>
      %130 = arith.addf %129, %128 : vector<2x32xf32>
      %131 = arith.addf %130, %69 : vector<2x32xf32>
      %132 = tpu.reciprocal %131 {approx = true} : vector<2x32xf32> -> vector<2x32xf32>
      %133 = arith.mulf %131, %132 : vector<2x32xf32>
      %cst_62 = arith.constant 2.000000e+00 : f32
      %134 = vector.broadcast %cst_62 : f32 to vector<2x32xf32>
      %135 = arith.subf %134, %133 : vector<2x32xf32>
      %136 = arith.mulf %132, %135 : vector<2x32xf32>
      %137 = arith.mulf %127, %136 : vector<2x32xf32>
      %138 = vector.shape_cast %137 : vector<2x32xf32> to vector<2x32x1xf32>
      %139 = vector.broadcast %138 : vector<2x32x1xf32> to vector<2x32x32xf32>
      %140 = vector.broadcast %10 : vector<1x32x32xf32> to vector<2x32x32xf32>
      %141 = arith.subf %139, %140 : vector<2x32x32xf32>
      %142 = vector.broadcast %12 : vector<1x32x32xf32> to vector<2x32x32xf32>
      %143 = arith.mulf %142, %141 : vector<2x32x32xf32>
      %cst_63 = arith.constant 5.000000e-01 : f32
      %144 = vector.broadcast %cst_63 : f32 to vector<2x32x32xf32>
      %145 = arith.mulf %144, %143 : vector<2x32x32xf32>
      %146 = math.tanh %145 : vector<2x32x32xf32>
      %cst_64 = arith.constant 5.000000e-01 : f32
      %147 = vector.broadcast %cst_64 : f32 to vector<2x32x32xf32>
      %148 = arith.mulf %147, %146 : vector<2x32x32xf32>
      %cst_65 = arith.constant 5.000000e-01 : f32
      %149 = vector.broadcast %cst_65 : f32 to vector<2x32x32xf32>
      %150 = arith.addf %148, %149 : vector<2x32x32xf32>
      %151 = tpu.concatenate %150, %150 in 2 : vector<2x32x32xf32>, vector<2x32x32xf32> -> vector<2x32x64xf32>
      %152 = vector.broadcast %14 : vector<1x32x64xf32> to vector<2x32x64xf32>
      %153 = arith.mulf %151, %152 : vector<2x32x64xf32>
      %cst_66 = arith.constant dense<0.000000e+00> : vector<2x64xf32>
      %154 = vector.multi_reduction <add>, %153, %cst_66 [1] : vector<2x32x64xf32> to vector<2x64xf32>
      %155 = vector.broadcast %19 : vector<1x32xf32> to vector<2x32xf32>
      %156 = arith.mulf %155, %137 : vector<2x32xf32>
      %157 = vector.broadcast %20 : vector<1x32xf32> to vector<2x32xf32>
      %158 = arith.addf %156, %157 : vector<2x32xf32>
      %159 = vector.extract_strided_slice %154 {offsets = [0, 0], sizes = [2, 32], strides = [1, 1]} : vector<2x64xf32> to vector<2x32xf32>
      %160 = arith.addf %158, %159 : vector<2x32xf32>
      %161 = arith.addf %160, %68 : vector<2x32xf32>
      %162 = vector.extract_strided_slice %154 {offsets = [0, 32], sizes = [2, 32], strides = [1, 1]} : vector<2x64xf32> to vector<2x32xf32>
      %163 = vector.broadcast %23 : vector<1x32xf32> to vector<2x32xf32>
      %164 = arith.addf %163, %162 : vector<2x32xf32>
      %165 = arith.addf %164, %69 : vector<2x32xf32>
      %166 = tpu.reciprocal %165 {approx = true} : vector<2x32xf32> -> vector<2x32xf32>
      %167 = arith.mulf %165, %166 : vector<2x32xf32>
      %cst_67 = arith.constant 2.000000e+00 : f32
      %168 = vector.broadcast %cst_67 : f32 to vector<2x32xf32>
      %169 = arith.subf %168, %167 : vector<2x32xf32>
      %170 = arith.mulf %166, %169 : vector<2x32xf32>
      %171 = arith.mulf %161, %170 : vector<2x32xf32>
      %172 = vector.shape_cast %171 : vector<2x32xf32> to vector<2x32x1xf32>
      %173 = vector.broadcast %172 : vector<2x32x1xf32> to vector<2x32x32xf32>
      %174 = vector.broadcast %10 : vector<1x32x32xf32> to vector<2x32x32xf32>
      %175 = arith.subf %173, %174 : vector<2x32x32xf32>
      %176 = vector.broadcast %12 : vector<1x32x32xf32> to vector<2x32x32xf32>
      %177 = arith.mulf %176, %175 : vector<2x32x32xf32>
      %cst_68 = arith.constant 5.000000e-01 : f32
      %178 = vector.broadcast %cst_68 : f32 to vector<2x32x32xf32>
      %179 = arith.mulf %178, %177 : vector<2x32x32xf32>
      %180 = math.tanh %179 : vector<2x32x32xf32>
      %cst_69 = arith.constant 5.000000e-01 : f32
      %181 = vector.broadcast %cst_69 : f32 to vector<2x32x32xf32>
      %182 = arith.mulf %181, %180 : vector<2x32x32xf32>
      %cst_70 = arith.constant 5.000000e-01 : f32
      %183 = vector.broadcast %cst_70 : f32 to vector<2x32x32xf32>
      %184 = arith.addf %182, %183 : vector<2x32x32xf32>
      %185 = tpu.concatenate %184, %184 in 2 : vector<2x32x32xf32>, vector<2x32x32xf32> -> vector<2x32x64xf32>
      %186 = vector.broadcast %14 : vector<1x32x64xf32> to vector<2x32x64xf32>
      %187 = arith.mulf %185, %186 : vector<2x32x64xf32>
      %cst_71 = arith.constant dense<0.000000e+00> : vector<2x64xf32>
      %188 = vector.multi_reduction <add>, %187, %cst_71 [1] : vector<2x32x64xf32> to vector<2x64xf32>
      %189 = vector.broadcast %19 : vector<1x32xf32> to vector<2x32xf32>
      %190 = arith.mulf %189, %171 : vector<2x32xf32>
      %191 = vector.broadcast %20 : vector<1x32xf32> to vector<2x32xf32>
      %192 = arith.addf %190, %191 : vector<2x32xf32>
      %193 = vector.extract_strided_slice %188 {offsets = [0, 0], sizes = [2, 32], strides = [1, 1]} : vector<2x64xf32> to vector<2x32xf32>
      %194 = arith.addf %192, %193 : vector<2x32xf32>
      %195 = arith.addf %194, %68 : vector<2x32xf32>
      %196 = vector.extract_strided_slice %188 {offsets = [0, 32], sizes = [2, 32], strides = [1, 1]} : vector<2x64xf32> to vector<2x32xf32>
      %197 = vector.broadcast %23 : vector<1x32xf32> to vector<2x32xf32>
      %198 = arith.addf %197, %196 : vector<2x32xf32>
      %199 = arith.addf %198, %69 : vector<2x32xf32>
      %200 = tpu.reciprocal %199 {approx = true} : vector<2x32xf32> -> vector<2x32xf32>
      %201 = arith.mulf %199, %200 : vector<2x32xf32>
      %cst_72 = arith.constant 2.000000e+00 : f32
      %202 = vector.broadcast %cst_72 : f32 to vector<2x32xf32>
      %203 = arith.subf %202, %201 : vector<2x32xf32>
      %204 = arith.mulf %200, %203 : vector<2x32xf32>
      %205 = arith.mulf %195, %204 : vector<2x32xf32>
      %206 = vector.shape_cast %205 : vector<2x32xf32> to vector<2x32x1xf32>
      %207 = vector.broadcast %206 : vector<2x32x1xf32> to vector<2x32x32xf32>
      %208 = vector.broadcast %10 : vector<1x32x32xf32> to vector<2x32x32xf32>
      %209 = arith.subf %207, %208 : vector<2x32x32xf32>
      %210 = vector.broadcast %12 : vector<1x32x32xf32> to vector<2x32x32xf32>
      %211 = arith.mulf %210, %209 : vector<2x32x32xf32>
      %cst_73 = arith.constant 5.000000e-01 : f32
      %212 = vector.broadcast %cst_73 : f32 to vector<2x32x32xf32>
      %213 = arith.mulf %212, %211 : vector<2x32x32xf32>
      %214 = math.tanh %213 : vector<2x32x32xf32>
      %cst_74 = arith.constant 5.000000e-01 : f32
      %215 = vector.broadcast %cst_74 : f32 to vector<2x32x32xf32>
      %216 = arith.mulf %215, %214 : vector<2x32x32xf32>
      %cst_75 = arith.constant 5.000000e-01 : f32
      %217 = vector.broadcast %cst_75 : f32 to vector<2x32x32xf32>
      %218 = arith.addf %216, %217 : vector<2x32x32xf32>
      %219 = tpu.concatenate %218, %218 in 2 : vector<2x32x32xf32>, vector<2x32x32xf32> -> vector<2x32x64xf32>
      %220 = vector.broadcast %14 : vector<1x32x64xf32> to vector<2x32x64xf32>
      %221 = arith.mulf %219, %220 : vector<2x32x64xf32>
      %cst_76 = arith.constant dense<0.000000e+00> : vector<2x64xf32>
      %222 = vector.multi_reduction <add>, %221, %cst_76 [1] : vector<2x32x64xf32> to vector<2x64xf32>
      %223 = vector.broadcast %19 : vector<1x32xf32> to vector<2x32xf32>
      %224 = arith.mulf %223, %205 : vector<2x32xf32>
      %225 = vector.broadcast %20 : vector<1x32xf32> to vector<2x32xf32>
      %226 = arith.addf %224, %225 : vector<2x32xf32>
      %227 = vector.extract_strided_slice %222 {offsets = [0, 0], sizes = [2, 32], strides = [1, 1]} : vector<2x64xf32> to vector<2x32xf32>
      %228 = arith.addf %226, %227 : vector<2x32xf32>
      %229 = arith.addf %228, %68 : vector<2x32xf32>
      %230 = vector.extract_strided_slice %222 {offsets = [0, 32], sizes = [2, 32], strides = [1, 1]} : vector<2x64xf32> to vector<2x32xf32>
      %231 = vector.broadcast %23 : vector<1x32xf32> to vector<2x32xf32>
      %232 = arith.addf %231, %230 : vector<2x32xf32>
      %233 = arith.addf %232, %69 : vector<2x32xf32>
      %234 = tpu.reciprocal %233 {approx = true} : vector<2x32xf32> -> vector<2x32xf32>
      %235 = arith.mulf %233, %234 : vector<2x32xf32>
      %cst_77 = arith.constant 2.000000e+00 : f32
      %236 = vector.broadcast %cst_77 : f32 to vector<2x32xf32>
      %237 = arith.subf %236, %235 : vector<2x32xf32>
      %238 = arith.mulf %234, %237 : vector<2x32xf32>
      %239 = arith.mulf %229, %238 : vector<2x32xf32>
      %240 = vector.shape_cast %239 : vector<2x32xf32> to vector<2x32x1xf32>
      %241 = vector.broadcast %240 : vector<2x32x1xf32> to vector<2x32x32xf32>
      %242 = vector.broadcast %10 : vector<1x32x32xf32> to vector<2x32x32xf32>
      %243 = arith.subf %241, %242 : vector<2x32x32xf32>
      %244 = vector.broadcast %12 : vector<1x32x32xf32> to vector<2x32x32xf32>
      %245 = arith.mulf %244, %243 : vector<2x32x32xf32>
      %cst_78 = arith.constant 5.000000e-01 : f32
      %246 = vector.broadcast %cst_78 : f32 to vector<2x32x32xf32>
      %247 = arith.mulf %246, %245 : vector<2x32x32xf32>
      %248 = math.tanh %247 : vector<2x32x32xf32>
      %cst_79 = arith.constant 5.000000e-01 : f32
      %249 = vector.broadcast %cst_79 : f32 to vector<2x32x32xf32>
      %250 = arith.mulf %249, %248 : vector<2x32x32xf32>
      %cst_80 = arith.constant 5.000000e-01 : f32
      %251 = vector.broadcast %cst_80 : f32 to vector<2x32x32xf32>
      %252 = arith.addf %250, %251 : vector<2x32x32xf32>
      %253 = tpu.concatenate %252, %252 in 2 : vector<2x32x32xf32>, vector<2x32x32xf32> -> vector<2x32x64xf32>
      %254 = vector.broadcast %14 : vector<1x32x64xf32> to vector<2x32x64xf32>
      %255 = arith.mulf %253, %254 : vector<2x32x64xf32>
      %cst_81 = arith.constant dense<0.000000e+00> : vector<2x64xf32>
      %256 = vector.multi_reduction <add>, %255, %cst_81 [1] : vector<2x32x64xf32> to vector<2x64xf32>
      %257 = vector.broadcast %19 : vector<1x32xf32> to vector<2x32xf32>
      %258 = arith.mulf %257, %239 : vector<2x32xf32>
      %259 = vector.broadcast %20 : vector<1x32xf32> to vector<2x32xf32>
      %260 = arith.addf %258, %259 : vector<2x32xf32>
      %261 = vector.extract_strided_slice %256 {offsets = [0, 0], sizes = [2, 32], strides = [1, 1]} : vector<2x64xf32> to vector<2x32xf32>
      %262 = arith.addf %260, %261 : vector<2x32xf32>
      %263 = arith.addf %262, %68 : vector<2x32xf32>
      %264 = vector.extract_strided_slice %256 {offsets = [0, 32], sizes = [2, 32], strides = [1, 1]} : vector<2x64xf32> to vector<2x32xf32>
      %265 = vector.broadcast %23 : vector<1x32xf32> to vector<2x32xf32>
      %266 = arith.addf %265, %264 : vector<2x32xf32>
      %267 = arith.addf %266, %69 : vector<2x32xf32>
      %268 = tpu.reciprocal %267 {approx = true} : vector<2x32xf32> -> vector<2x32xf32>
      %269 = arith.mulf %267, %268 : vector<2x32xf32>
      %cst_82 = arith.constant 2.000000e+00 : f32
      %270 = vector.broadcast %cst_82 : f32 to vector<2x32xf32>
      %271 = arith.subf %270, %269 : vector<2x32xf32>
      %272 = arith.mulf %268, %271 : vector<2x32xf32>
      %273 = arith.mulf %263, %272 : vector<2x32xf32>
      %274 = arith.index_cast %arg6 : i32 to index
      %c0_83 = arith.constant 0 : index
      %c0_84 = arith.constant 0 : index
      %275 = vector.load %arg5[%274, %c0_83, %c0_84] : memref<8x2x32xf32, #tpu.memory_space<vmem>>, vector<1x2x32xf32>
      %276 = vector.shape_cast %275 : vector<1x2x32xf32> to vector<2x32xf32>
      %277 = vector.shape_cast %273 : vector<2x32xf32> to vector<1x2x32xf32>
      tpu.vector_store %arg5[%274, %c0_83, %c0_84], %277 {strides = array<i32>} : memref<8x2x32xf32, #tpu.memory_space<vmem>>, vector<1x2x32xf32>,
      scf.yield %273 : vector<2x32xf32>
    }
    %c8_i32_19 = arith.constant 8 : i32
    %c120 = arith.constant 120 : index
    %c0_20 = arith.constant 0 : index
    %27 = vector.load %arg2[%c120, %c0_20] : memref<168x128xf32, #tpu.memory_space<vmem>>, vector<1x32xf32>
    %c121 = arith.constant 121 : index
    %c0_21 = arith.constant 0 : index
    %28 = vector.load %arg2[%c121, %c0_21] : memref<168x128xf32, #tpu.memory_space<vmem>>, vector<1x32xf32>
    %c56 = arith.constant 56 : index
    %c0_22 = arith.constant 0 : index
    %29 = vector.load %arg2[%c56, %c0_22] : memref<168x128xf32, #tpu.memory_space<vmem>>, vector<32x32xf32>
    %30 = vector.shape_cast %29 : vector<32x32xf32> to vector<1x32x32xf32>
    %c56_23 = arith.constant 56 : index
    %c32_24 = arith.constant 32 : index
    %31 = vector.load %arg2[%c56_23, %c32_24] : memref<168x128xf32, #tpu.memory_space<vmem>>, vector<32x32xf32>
    %32 = vector.shape_cast %31 : vector<32x32xf32> to vector<1x32x32xf32>
    %c56_25 = arith.constant 56 : index
    %c64_26 = arith.constant 64 : index
    %33 = vector.load %arg2[%c56_25, %c64_26] : memref<168x128xf32, #tpu.memory_space<vmem>>, vector<32x64xf32>
    %34 = vector.shape_cast %33 : vector<32x64xf32> to vector<1x32x64xf32>
    %c0_i32_27 = arith.constant 0 : i32
    %c8_i32_28 = arith.constant 8 : i32
    %35 = arith.addi %c0_i32_27, %c8_i32_28 : i32
    %c1_i32_29 = arith.constant 1 : i32
    scf.for %arg6 = %c0_i32_27 to %35 step %c1_i32_29  : i32 {
      %c1_i32_51 = arith.constant 1 : i32
      %65 = arith.muli %arg6, %c1_i32_51 : i32
      %c0_i32_52 = arith.constant 0 : i32
      %66 = arith.addi %c0_i32_52, %65 : i32
      %67 = arith.index_cast %66 : i32 to index
      %c0_53 = arith.constant 0 : index
      %c0_54 = arith.constant 0 : index
      %68 = vector.load %arg5[%67, %c0_53, %c0_54] : memref<8x2x32xf32, #tpu.memory_space<vmem>>, vector<1x2x32xf32>
      %69 = vector.shape_cast %68 : vector<1x2x32xf32> to vector<2x32xf32>
      %70 = vector.broadcast %27 : vector<1x32xf32> to vector<2x32xf32>
      %71 = arith.mulf %69, %70 : vector<2x32xf32>
      %72 = vector.broadcast %28 : vector<1x32xf32> to vector<2x32xf32>
      %73 = arith.addf %71, %72 : vector<2x32xf32>
      %74 = vector.shape_cast %73 : vector<2x32xf32> to vector<2x32x1xf32>
      %75 = vector.broadcast %74 : vector<2x32x1xf32> to vector<2x32x32xf32>
      %76 = vector.broadcast %30 : vector<1x32x32xf32> to vector<2x32x32xf32>
      %77 = arith.subf %75, %76 : vector<2x32x32xf32>
      %78 = vector.broadcast %32 : vector<1x32x32xf32> to vector<2x32x32xf32>
      %79 = arith.mulf %78, %77 : vector<2x32x32xf32>
      %cst_55 = arith.constant 5.000000e-01 : f32
      %80 = vector.broadcast %cst_55 : f32 to vector<2x32x32xf32>
      %81 = arith.mulf %80, %79 : vector<2x32x32xf32>
      %82 = math.tanh %81 : vector<2x32x32xf32>
      %cst_56 = arith.constant 5.000000e-01 : f32
      %83 = vector.broadcast %cst_56 : f32 to vector<2x32x32xf32>
      %84 = arith.mulf %83, %82 : vector<2x32x32xf32>
      %cst_57 = arith.constant 5.000000e-01 : f32
      %85 = vector.broadcast %cst_57 : f32 to vector<2x32x32xf32>
      %86 = arith.addf %84, %85 : vector<2x32x32xf32>
      %87 = tpu.concatenate %86, %86 in 2 : vector<2x32x32xf32>, vector<2x32x32xf32> -> vector<2x32x64xf32>
      %88 = vector.broadcast %34 : vector<1x32x64xf32> to vector<2x32x64xf32>
      %89 = arith.mulf %87, %88 : vector<2x32x64xf32>
      %cst_58 = arith.constant dense<0.000000e+00> : vector<2x64xf32>
      %90 = vector.multi_reduction <add>, %89, %cst_58 [1] : vector<2x32x64xf32> to vector<2x64xf32>
      %91 = arith.index_cast %66 : i32 to index
      %c0_59 = arith.constant 0 : index
      %c0_60 = arith.constant 0 : index
      %92 = vector.load %arg4[%91, %c0_59, %c0_60] : memref<8x2x64xf32, #tpu.memory_space<vmem>>, vector<1x2x64xf32>
      %93 = vector.shape_cast %92 : vector<1x2x64xf32> to vector<2x64xf32>
      %94 = vector.shape_cast %90 : vector<2x64xf32> to vector<1x2x64xf32>
      tpu.vector_store %arg4[%91, %c0_59, %c0_60], %94 {strides = array<i32>} : memref<8x2x64xf32, #tpu.memory_space<vmem>>, vector<1x2x64xf32>,
    }
    %c8_i32_30 = arith.constant 8 : i32
    %c88 = arith.constant 88 : index
    %c0_31 = arith.constant 0 : index
    %36 = vector.load %arg2[%c88, %c0_31] : memref<168x128xf32, #tpu.memory_space<vmem>>, vector<32x32xf32>
    %37 = vector.shape_cast %36 : vector<32x32xf32> to vector<1x32x32xf32>
    %c88_32 = arith.constant 88 : index
    %c32_33 = arith.constant 32 : index
    %38 = vector.load %arg2[%c88_32, %c32_33] : memref<168x128xf32, #tpu.memory_space<vmem>>, vector<32x32xf32>
    %39 = vector.shape_cast %38 : vector<32x32xf32> to vector<1x32x32xf32>
    %c88_34 = arith.constant 88 : index
    %c64_35 = arith.constant 64 : index
    %40 = vector.load %arg2[%c88_34, %c64_35] : memref<168x128xf32, #tpu.memory_space<vmem>>, vector<32x64xf32>
    %41 = vector.shape_cast %40 : vector<32x64xf32> to vector<1x32x64xf32>
    %c122 = arith.constant 122 : index
    %c0_36 = arith.constant 0 : index
    %42 = vector.load %arg2[%c122, %c0_36] : memref<168x128xf32, #tpu.memory_space<vmem>>, vector<1x32xf32>
    %c123 = arith.constant 123 : index
    %c0_37 = arith.constant 0 : index
    %43 = vector.load %arg2[%c123, %c0_37] : memref<168x128xf32, #tpu.memory_space<vmem>>, vector<1x32xf32>
    %c124 = arith.constant 124 : index
    %c0_38 = arith.constant 0 : index
    %44 = vector.load %arg2[%c124, %c0_38] : memref<168x128xf32, #tpu.memory_space<vmem>>, vector<1x32xf32>
    %cst_39 = arith.constant 6.000000e+00 : f32
    %45 = vector.broadcast %cst_39 : f32 to vector<1x32xf32>
    %46 = arith.mulf %44, %45 : vector<1x32xf32>
    %47 = arith.mulf %42, %43 : vector<1x32xf32>
    %48 = arith.addf %46, %42 : vector<1x32xf32>
    %cst_40 = arith.constant 9.99999993E-9 : f32
    %49 = vector.broadcast %cst_40 : f32 to vector<1x32xf32>
    %50 = arith.addf %48, %49 : vector<1x32xf32>
    %cst_41 = arith.constant 0.000000e+00 : f32
    %51 = vector.broadcast %cst_41 : f32 to vector<2x32xf32>
    %c0_i32_42 = arith.constant 0 : i32
    %c8_i32_43 = arith.constant 8 : i32
    %52 = arith.addi %c0_i32_42, %c8_i32_43 : i32
    %c1_i32_44 = arith.constant 1 : i32
    %53 = scf.for %arg6 = %c0_i32_42 to %52 step %c1_i32_44 iter_args(%arg7 = %51) -> (vector<2x32xf32>)  : i32 {
      %65 = arith.index_cast %arg6 : i32 to index
      %c0_51 = arith.constant 0 : index
      %c0_52 = arith.constant 0 : index
      %66 = vector.load %arg4[%65, %c0_51, %c0_52] : memref<8x2x64xf32, #tpu.memory_space<vmem>>, vector<1x2x64xf32>
      %67 = vector.shape_cast %66 : vector<1x2x64xf32> to vector<2x64xf32>
      %68 = vector.extract_strided_slice %67 {offsets = [0, 0], sizes = [2, 32], strides = [1, 1]} : vector<2x64xf32> to vector<2x32xf32>
      %69 = vector.extract_strided_slice %67 {offsets = [0, 32], sizes = [2, 32], strides = [1, 1]} : vector<2x64xf32> to vector<2x32xf32>
      %70 = vector.shape_cast %arg7 : vector<2x32xf32> to vector<2x32x1xf32>
      %71 = vector.broadcast %70 : vector<2x32x1xf32> to vector<2x32x32xf32>
      %72 = vector.broadcast %37 : vector<1x32x32xf32> to vector<2x32x32xf32>
      %73 = arith.subf %71, %72 : vector<2x32x32xf32>
      %74 = vector.broadcast %39 : vector<1x32x32xf32> to vector<2x32x32xf32>
      %75 = arith.mulf %74, %73 : vector<2x32x32xf32>
      %cst_53 = arith.constant 5.000000e-01 : f32
      %76 = vector.broadcast %cst_53 : f32 to vector<2x32x32xf32>
      %77 = arith.mulf %76, %75 : vector<2x32x32xf32>
      %78 = math.tanh %77 : vector<2x32x32xf32>
      %cst_54 = arith.constant 5.000000e-01 : f32
      %79 = vector.broadcast %cst_54 : f32 to vector<2x32x32xf32>
      %80 = arith.mulf %79, %78 : vector<2x32x32xf32>
      %cst_55 = arith.constant 5.000000e-01 : f32
      %81 = vector.broadcast %cst_55 : f32 to vector<2x32x32xf32>
      %82 = arith.addf %80, %81 : vector<2x32x32xf32>
      %83 = tpu.concatenate %82, %82 in 2 : vector<2x32x32xf32>, vector<2x32x32xf32> -> vector<2x32x64xf32>
      %84 = vector.broadcast %41 : vector<1x32x64xf32> to vector<2x32x64xf32>
      %85 = arith.mulf %83, %84 : vector<2x32x64xf32>
      %cst_56 = arith.constant dense<0.000000e+00> : vector<2x64xf32>
      %86 = vector.multi_reduction <add>, %85, %cst_56 [1] : vector<2x32x64xf32> to vector<2x64xf32>
      %87 = vector.broadcast %46 : vector<1x32xf32> to vector<2x32xf32>
      %88 = arith.mulf %87, %arg7 : vector<2x32xf32>
      %89 = vector.broadcast %47 : vector<1x32xf32> to vector<2x32xf32>
      %90 = arith.addf %88, %89 : vector<2x32xf32>
      %91 = vector.extract_strided_slice %86 {offsets = [0, 0], sizes = [2, 32], strides = [1, 1]} : vector<2x64xf32> to vector<2x32xf32>
      %92 = arith.addf %90, %91 : vector<2x32xf32>
      %93 = arith.addf %92, %68 : vector<2x32xf32>
      %94 = vector.extract_strided_slice %86 {offsets = [0, 32], sizes = [2, 32], strides = [1, 1]} : vector<2x64xf32> to vector<2x32xf32>
      %95 = vector.broadcast %50 : vector<1x32xf32> to vector<2x32xf32>
      %96 = arith.addf %95, %94 : vector<2x32xf32>
      %97 = arith.addf %96, %69 : vector<2x32xf32>
      %98 = tpu.reciprocal %97 {approx = true} : vector<2x32xf32> -> vector<2x32xf32>
      %99 = arith.mulf %97, %98 : vector<2x32xf32>
      %cst_57 = arith.constant 2.000000e+00 : f32
      %100 = vector.broadcast %cst_57 : f32 to vector<2x32xf32>
      %101 = arith.subf %100, %99 : vector<2x32xf32>
      %102 = arith.mulf %98, %101 : vector<2x32xf32>
      %103 = arith.mulf %93, %102 : vector<2x32xf32>
      %104 = vector.shape_cast %103 : vector<2x32xf32> to vector<2x32x1xf32>
      %105 = vector.broadcast %104 : vector<2x32x1xf32> to vector<2x32x32xf32>
      %106 = vector.broadcast %37 : vector<1x32x32xf32> to vector<2x32x32xf32>
      %107 = arith.subf %105, %106 : vector<2x32x32xf32>
      %108 = vector.broadcast %39 : vector<1x32x32xf32> to vector<2x32x32xf32>
      %109 = arith.mulf %108, %107 : vector<2x32x32xf32>
      %cst_58 = arith.constant 5.000000e-01 : f32
      %110 = vector.broadcast %cst_58 : f32 to vector<2x32x32xf32>
      %111 = arith.mulf %110, %109 : vector<2x32x32xf32>
      %112 = math.tanh %111 : vector<2x32x32xf32>
      %cst_59 = arith.constant 5.000000e-01 : f32
      %113 = vector.broadcast %cst_59 : f32 to vector<2x32x32xf32>
      %114 = arith.mulf %113, %112 : vector<2x32x32xf32>
      %cst_60 = arith.constant 5.000000e-01 : f32
      %115 = vector.broadcast %cst_60 : f32 to vector<2x32x32xf32>
      %116 = arith.addf %114, %115 : vector<2x32x32xf32>
      %117 = tpu.concatenate %116, %116 in 2 : vector<2x32x32xf32>, vector<2x32x32xf32> -> vector<2x32x64xf32>
      %118 = vector.broadcast %41 : vector<1x32x64xf32> to vector<2x32x64xf32>
      %119 = arith.mulf %117, %118 : vector<2x32x64xf32>
      %cst_61 = arith.constant dense<0.000000e+00> : vector<2x64xf32>
      %120 = vector.multi_reduction <add>, %119, %cst_61 [1] : vector<2x32x64xf32> to vector<2x64xf32>
      %121 = vector.broadcast %46 : vector<1x32xf32> to vector<2x32xf32>
      %122 = arith.mulf %121, %103 : vector<2x32xf32>
      %123 = vector.broadcast %47 : vector<1x32xf32> to vector<2x32xf32>
      %124 = arith.addf %122, %123 : vector<2x32xf32>
      %125 = vector.extract_strided_slice %120 {offsets = [0, 0], sizes = [2, 32], strides = [1, 1]} : vector<2x64xf32> to vector<2x32xf32>
      %126 = arith.addf %124, %125 : vector<2x32xf32>
      %127 = arith.addf %126, %68 : vector<2x32xf32>
      %128 = vector.extract_strided_slice %120 {offsets = [0, 32], sizes = [2, 32], strides = [1, 1]} : vector<2x64xf32> to vector<2x32xf32>
      %129 = vector.broadcast %50 : vector<1x32xf32> to vector<2x32xf32>
      %130 = arith.addf %129, %128 : vector<2x32xf32>
      %131 = arith.addf %130, %69 : vector<2x32xf32>
      %132 = tpu.reciprocal %131 {approx = true} : vector<2x32xf32> -> vector<2x32xf32>
      %133 = arith.mulf %131, %132 : vector<2x32xf32>
      %cst_62 = arith.constant 2.000000e+00 : f32
      %134 = vector.broadcast %cst_62 : f32 to vector<2x32xf32>
      %135 = arith.subf %134, %133 : vector<2x32xf32>
      %136 = arith.mulf %132, %135 : vector<2x32xf32>
      %137 = arith.mulf %127, %136 : vector<2x32xf32>
      %138 = vector.shape_cast %137 : vector<2x32xf32> to vector<2x32x1xf32>
      %139 = vector.broadcast %138 : vector<2x32x1xf32> to vector<2x32x32xf32>
      %140 = vector.broadcast %37 : vector<1x32x32xf32> to vector<2x32x32xf32>
      %141 = arith.subf %139, %140 : vector<2x32x32xf32>
      %142 = vector.broadcast %39 : vector<1x32x32xf32> to vector<2x32x32xf32>
      %143 = arith.mulf %142, %141 : vector<2x32x32xf32>
      %cst_63 = arith.constant 5.000000e-01 : f32
      %144 = vector.broadcast %cst_63 : f32 to vector<2x32x32xf32>
      %145 = arith.mulf %144, %143 : vector<2x32x32xf32>
      %146 = math.tanh %145 : vector<2x32x32xf32>
      %cst_64 = arith.constant 5.000000e-01 : f32
      %147 = vector.broadcast %cst_64 : f32 to vector<2x32x32xf32>
      %148 = arith.mulf %147, %146 : vector<2x32x32xf32>
      %cst_65 = arith.constant 5.000000e-01 : f32
      %149 = vector.broadcast %cst_65 : f32 to vector<2x32x32xf32>
      %150 = arith.addf %148, %149 : vector<2x32x32xf32>
      %151 = tpu.concatenate %150, %150 in 2 : vector<2x32x32xf32>, vector<2x32x32xf32> -> vector<2x32x64xf32>
      %152 = vector.broadcast %41 : vector<1x32x64xf32> to vector<2x32x64xf32>
      %153 = arith.mulf %151, %152 : vector<2x32x64xf32>
      %cst_66 = arith.constant dense<0.000000e+00> : vector<2x64xf32>
      %154 = vector.multi_reduction <add>, %153, %cst_66 [1] : vector<2x32x64xf32> to vector<2x64xf32>
      %155 = vector.broadcast %46 : vector<1x32xf32> to vector<2x32xf32>
      %156 = arith.mulf %155, %137 : vector<2x32xf32>
      %157 = vector.broadcast %47 : vector<1x32xf32> to vector<2x32xf32>
      %158 = arith.addf %156, %157 : vector<2x32xf32>
      %159 = vector.extract_strided_slice %154 {offsets = [0, 0], sizes = [2, 32], strides = [1, 1]} : vector<2x64xf32> to vector<2x32xf32>
      %160 = arith.addf %158, %159 : vector<2x32xf32>
      %161 = arith.addf %160, %68 : vector<2x32xf32>
      %162 = vector.extract_strided_slice %154 {offsets = [0, 32], sizes = [2, 32], strides = [1, 1]} : vector<2x64xf32> to vector<2x32xf32>
      %163 = vector.broadcast %50 : vector<1x32xf32> to vector<2x32xf32>
      %164 = arith.addf %163, %162 : vector<2x32xf32>
      %165 = arith.addf %164, %69 : vector<2x32xf32>
      %166 = tpu.reciprocal %165 {approx = true} : vector<2x32xf32> -> vector<2x32xf32>
      %167 = arith.mulf %165, %166 : vector<2x32xf32>
      %cst_67 = arith.constant 2.000000e+00 : f32
      %168 = vector.broadcast %cst_67 : f32 to vector<2x32xf32>
      %169 = arith.subf %168, %167 : vector<2x32xf32>
      %170 = arith.mulf %166, %169 : vector<2x32xf32>
      %171 = arith.mulf %161, %170 : vector<2x32xf32>
      %172 = vector.shape_cast %171 : vector<2x32xf32> to vector<2x32x1xf32>
      %173 = vector.broadcast %172 : vector<2x32x1xf32> to vector<2x32x32xf32>
      %174 = vector.broadcast %37 : vector<1x32x32xf32> to vector<2x32x32xf32>
      %175 = arith.subf %173, %174 : vector<2x32x32xf32>
      %176 = vector.broadcast %39 : vector<1x32x32xf32> to vector<2x32x32xf32>
      %177 = arith.mulf %176, %175 : vector<2x32x32xf32>
      %cst_68 = arith.constant 5.000000e-01 : f32
      %178 = vector.broadcast %cst_68 : f32 to vector<2x32x32xf32>
      %179 = arith.mulf %178, %177 : vector<2x32x32xf32>
      %180 = math.tanh %179 : vector<2x32x32xf32>
      %cst_69 = arith.constant 5.000000e-01 : f32
      %181 = vector.broadcast %cst_69 : f32 to vector<2x32x32xf32>
      %182 = arith.mulf %181, %180 : vector<2x32x32xf32>
      %cst_70 = arith.constant 5.000000e-01 : f32
      %183 = vector.broadcast %cst_70 : f32 to vector<2x32x32xf32>
      %184 = arith.addf %182, %183 : vector<2x32x32xf32>
      %185 = tpu.concatenate %184, %184 in 2 : vector<2x32x32xf32>, vector<2x32x32xf32> -> vector<2x32x64xf32>
      %186 = vector.broadcast %41 : vector<1x32x64xf32> to vector<2x32x64xf32>
      %187 = arith.mulf %185, %186 : vector<2x32x64xf32>
      %cst_71 = arith.constant dense<0.000000e+00> : vector<2x64xf32>
      %188 = vector.multi_reduction <add>, %187, %cst_71 [1] : vector<2x32x64xf32> to vector<2x64xf32>
      %189 = vector.broadcast %46 : vector<1x32xf32> to vector<2x32xf32>
      %190 = arith.mulf %189, %171 : vector<2x32xf32>
      %191 = vector.broadcast %47 : vector<1x32xf32> to vector<2x32xf32>
      %192 = arith.addf %190, %191 : vector<2x32xf32>
      %193 = vector.extract_strided_slice %188 {offsets = [0, 0], sizes = [2, 32], strides = [1, 1]} : vector<2x64xf32> to vector<2x32xf32>
      %194 = arith.addf %192, %193 : vector<2x32xf32>
      %195 = arith.addf %194, %68 : vector<2x32xf32>
      %196 = vector.extract_strided_slice %188 {offsets = [0, 32], sizes = [2, 32], strides = [1, 1]} : vector<2x64xf32> to vector<2x32xf32>
      %197 = vector.broadcast %50 : vector<1x32xf32> to vector<2x32xf32>
      %198 = arith.addf %197, %196 : vector<2x32xf32>
      %199 = arith.addf %198, %69 : vector<2x32xf32>
      %200 = tpu.reciprocal %199 {approx = true} : vector<2x32xf32> -> vector<2x32xf32>
      %201 = arith.mulf %199, %200 : vector<2x32xf32>
      %cst_72 = arith.constant 2.000000e+00 : f32
      %202 = vector.broadcast %cst_72 : f32 to vector<2x32xf32>
      %203 = arith.subf %202, %201 : vector<2x32xf32>
      %204 = arith.mulf %200, %203 : vector<2x32xf32>
      %205 = arith.mulf %195, %204 : vector<2x32xf32>
      %206 = vector.shape_cast %205 : vector<2x32xf32> to vector<2x32x1xf32>
      %207 = vector.broadcast %206 : vector<2x32x1xf32> to vector<2x32x32xf32>
      %208 = vector.broadcast %37 : vector<1x32x32xf32> to vector<2x32x32xf32>
      %209 = arith.subf %207, %208 : vector<2x32x32xf32>
      %210 = vector.broadcast %39 : vector<1x32x32xf32> to vector<2x32x32xf32>
      %211 = arith.mulf %210, %209 : vector<2x32x32xf32>
      %cst_73 = arith.constant 5.000000e-01 : f32
      %212 = vector.broadcast %cst_73 : f32 to vector<2x32x32xf32>
      %213 = arith.mulf %212, %211 : vector<2x32x32xf32>
      %214 = math.tanh %213 : vector<2x32x32xf32>
      %cst_74 = arith.constant 5.000000e-01 : f32
      %215 = vector.broadcast %cst_74 : f32 to vector<2x32x32xf32>
      %216 = arith.mulf %215, %214 : vector<2x32x32xf32>
      %cst_75 = arith.constant 5.000000e-01 : f32
      %217 = vector.broadcast %cst_75 : f32 to vector<2x32x32xf32>
      %218 = arith.addf %216, %217 : vector<2x32x32xf32>
      %219 = tpu.concatenate %218, %218 in 2 : vector<2x32x32xf32>, vector<2x32x32xf32> -> vector<2x32x64xf32>
      %220 = vector.broadcast %41 : vector<1x32x64xf32> to vector<2x32x64xf32>
      %221 = arith.mulf %219, %220 : vector<2x32x64xf32>
      %cst_76 = arith.constant dense<0.000000e+00> : vector<2x64xf32>
      %222 = vector.multi_reduction <add>, %221, %cst_76 [1] : vector<2x32x64xf32> to vector<2x64xf32>
      %223 = vector.broadcast %46 : vector<1x32xf32> to vector<2x32xf32>
      %224 = arith.mulf %223, %205 : vector<2x32xf32>
      %225 = vector.broadcast %47 : vector<1x32xf32> to vector<2x32xf32>
      %226 = arith.addf %224, %225 : vector<2x32xf32>
      %227 = vector.extract_strided_slice %222 {offsets = [0, 0], sizes = [2, 32], strides = [1, 1]} : vector<2x64xf32> to vector<2x32xf32>
      %228 = arith.addf %226, %227 : vector<2x32xf32>
      %229 = arith.addf %228, %68 : vector<2x32xf32>
      %230 = vector.extract_strided_slice %222 {offsets = [0, 32], sizes = [2, 32], strides = [1, 1]} : vector<2x64xf32> to vector<2x32xf32>
      %231 = vector.broadcast %50 : vector<1x32xf32> to vector<2x32xf32>
      %232 = arith.addf %231, %230 : vector<2x32xf32>
      %233 = arith.addf %232, %69 : vector<2x32xf32>
      %234 = tpu.reciprocal %233 {approx = true} : vector<2x32xf32> -> vector<2x32xf32>
      %235 = arith.mulf %233, %234 : vector<2x32xf32>
      %cst_77 = arith.constant 2.000000e+00 : f32
      %236 = vector.broadcast %cst_77 : f32 to vector<2x32xf32>
      %237 = arith.subf %236, %235 : vector<2x32xf32>
      %238 = arith.mulf %234, %237 : vector<2x32xf32>
      %239 = arith.mulf %229, %238 : vector<2x32xf32>
      %240 = vector.shape_cast %239 : vector<2x32xf32> to vector<2x32x1xf32>
      %241 = vector.broadcast %240 : vector<2x32x1xf32> to vector<2x32x32xf32>
      %242 = vector.broadcast %37 : vector<1x32x32xf32> to vector<2x32x32xf32>
      %243 = arith.subf %241, %242 : vector<2x32x32xf32>
      %244 = vector.broadcast %39 : vector<1x32x32xf32> to vector<2x32x32xf32>
      %245 = arith.mulf %244, %243 : vector<2x32x32xf32>
      %cst_78 = arith.constant 5.000000e-01 : f32
      %246 = vector.broadcast %cst_78 : f32 to vector<2x32x32xf32>
      %247 = arith.mulf %246, %245 : vector<2x32x32xf32>
      %248 = math.tanh %247 : vector<2x32x32xf32>
      %cst_79 = arith.constant 5.000000e-01 : f32
      %249 = vector.broadcast %cst_79 : f32 to vector<2x32x32xf32>
      %250 = arith.mulf %249, %248 : vector<2x32x32xf32>
      %cst_80 = arith.constant 5.000000e-01 : f32
      %251 = vector.broadcast %cst_80 : f32 to vector<2x32x32xf32>
      %252 = arith.addf %250, %251 : vector<2x32x32xf32>
      %253 = tpu.concatenate %252, %252 in 2 : vector<2x32x32xf32>, vector<2x32x32xf32> -> vector<2x32x64xf32>
      %254 = vector.broadcast %41 : vector<1x32x64xf32> to vector<2x32x64xf32>
      %255 = arith.mulf %253, %254 : vector<2x32x64xf32>
      %cst_81 = arith.constant dense<0.000000e+00> : vector<2x64xf32>
      %256 = vector.multi_reduction <add>, %255, %cst_81 [1] : vector<2x32x64xf32> to vector<2x64xf32>
      %257 = vector.broadcast %46 : vector<1x32xf32> to vector<2x32xf32>
      %258 = arith.mulf %257, %239 : vector<2x32xf32>
      %259 = vector.broadcast %47 : vector<1x32xf32> to vector<2x32xf32>
      %260 = arith.addf %258, %259 : vector<2x32xf32>
      %261 = vector.extract_strided_slice %256 {offsets = [0, 0], sizes = [2, 32], strides = [1, 1]} : vector<2x64xf32> to vector<2x32xf32>
      %262 = arith.addf %260, %261 : vector<2x32xf32>
      %263 = arith.addf %262, %68 : vector<2x32xf32>
      %264 = vector.extract_strided_slice %256 {offsets = [0, 32], sizes = [2, 32], strides = [1, 1]} : vector<2x64xf32> to vector<2x32xf32>
      %265 = vector.broadcast %50 : vector<1x32xf32> to vector<2x32xf32>
      %266 = arith.addf %265, %264 : vector<2x32xf32>
      %267 = arith.addf %266, %69 : vector<2x32xf32>
      %268 = tpu.reciprocal %267 {approx = true} : vector<2x32xf32> -> vector<2x32xf32>
      %269 = arith.mulf %267, %268 : vector<2x32xf32>
      %cst_82 = arith.constant 2.000000e+00 : f32
      %270 = vector.broadcast %cst_82 : f32 to vector<2x32xf32>
      %271 = arith.subf %270, %269 : vector<2x32xf32>
      %272 = arith.mulf %268, %271 : vector<2x32xf32>
      %273 = arith.mulf %263, %272 : vector<2x32xf32>
      scf.yield %273 : vector<2x32xf32>
    }
    %c8_i32_45 = arith.constant 8 : i32
    %c128 = arith.constant 128 : index
    %c0_46 = arith.constant 0 : index
    %54 = vector.load %arg2[%c128, %c0_46] : memref<168x128xf32, #tpu.memory_space<vmem>>, vector<32x10xf32>
    %c160 = arith.constant 160 : index
    %c0_47 = arith.constant 0 : index
    %55 = vector.load %arg2[%c160, %c0_47] : memref<168x128xf32, #tpu.memory_space<vmem>>, vector<1x10xf32>
    %56 = vector.shape_cast %53 : vector<2x32xf32> to vector<2x32x1xf32>
    %57 = vector.shape_cast %54 : vector<32x10xf32> to vector<1x32x10xf32>
    %58 = vector.broadcast %56 : vector<2x32x1xf32> to vector<2x32x10xf32>
    %59 = vector.broadcast %57 : vector<1x32x10xf32> to vector<2x32x10xf32>
    %60 = arith.mulf %58, %59 : vector<2x32x10xf32>
    %cst_48 = arith.constant dense<0.000000e+00> : vector<2x10xf32>
    %61 = vector.multi_reduction <add>, %60, %cst_48 [1] : vector<2x32x10xf32> to vector<2x10xf32>
    %62 = vector.broadcast %55 : vector<1x10xf32> to vector<2x10xf32>
    %63 = arith.addf %61, %62 : vector<2x10xf32>
    %c0_49 = arith.constant 0 : index
    %c0_50 = arith.constant 0 : index
    %64 = vector.load %arg3[%c0_49, %c0_50] : memref<2x10xf32, #tpu.memory_space<vmem>>, vector<2x10xf32>
    tpu.vector_store %arg3[%c0_49, %c0_50], %63 {strides = array<i32>} : memref<2x10xf32, #tpu.memory_space<vmem>>, vector<2x10xf32>,
    return
  }
  func.func @transform_0(%arg0: i32) -> (i32, i32, i32) {
    %c0_i32 = arith.constant 0 : i32
    %c0_i32_0 = arith.constant 0 : i32
    %c0_i32_1 = arith.constant 0 : i32
    return %c0_i32, %arg0, %c0_i32_0 : i32, i32, i32
  }
  func.func @transform_1(%arg0: i32) -> (i32, i32) {
    %c0_i32 = arith.constant 0 : i32
    %c0_i32_0 = arith.constant 0 : i32
    %c0_i32_1 = arith.constant 0 : i32
    return %c0_i32, %c0_i32_0 : i32, i32
  }
  func.func @transform_2(%arg0: i32) -> (i32, i32) {
    %c0_i32 = arith.constant 0 : i32
    %c0_i32_0 = arith.constant 0 : i32
    return %arg0, %c0_i32 : i32, i32
  }
}

</mosaic_0001>

<llo_original>
// kernel: tpu_custom_call.1
$region0: #{tpu_custom_call.1}
  #allocation0 [shape = 'u32[]', space=smem, size = 0x4, offset = 0x4, fixed_abs, tag = 'smem constant byte address 0x4 - core index']
  #allocation1 [shape = 'u32[144,128]{1,0:T(1,128)}', space=vmem, size = 0x12000, scoped, tag = 'internal scratch']
  #allocation2 [shape = 'f32[8,2,64]{2,1,0:T(2,128)}', space=vmem, size = 0x2000, scoped, tag = 'scratch operand']
  #allocation3 [shape = 'f32[8,2,32]{2,1,0:T(2,128)}', space=vmem, size = 0x2000, scoped, tag = 'scratch operand']
  %s0 = inlined_call_operand.hbm [shape: f32[8,2,9], index: 0, kind: input, shape index: {}]
  %s1 = inlined_call_operand.hbm [shape: f32[168,128], index: 1, kind: input, shape index: {}]
  %s2 = inlined_call_operand.hbm [shape: f32[2,10], index: 2, kind: output, shape index: {}]
  %s3 = sld [smem:[#allocation0]]
  $region54: #{tpu_custom_call.1} parent=0
    _
  %s5 = ssub.s32 1, %s3
  %s6 = scalar_select 0, %s5, %s3
  $region1: #{tpu_custom_call.1} parent=0
    #allocation4 [shape = 'u8[8192]{0}', space=vmem, size = 0x2000, scoped, tag = 'input window, operand 0, single buffered']
    #allocation5 [shape = 's32[1]{0}', space=sflag, size = 0x4, scoped, tag = 'scoped memory for tpu_custom_call.1']
    #allocation6 [shape = 's32[1]{0}', space=sflag, size = 0x4, scoped, tag = 'scoped memory for tpu_custom_call.1']
    #allocation7 [shape = 'u8[86016]{0}', space=vmem, size = 0x15000, scoped, tag = 'input window, operand 1, single buffered']
    #allocation8 [shape = 's32[1]{0}', space=sflag, size = 0x4, scoped, tag = 'scoped memory for tpu_custom_call.1']
    #allocation9 [shape = 'u8[1024]{0}', space=vmem, size = 0x400, scoped, tag = 'output window, operand 0, single buffered']
    %7 = vsyncpa [#allocation5], 0
    %8 = vsyncpa [#allocation8], 0
    %9 = vsyncpa [#allocation6], 0
    // Predicated region
    $region2: #{tpu_custom_call.1} parent=1 // pred_check
      _
    $region3: #{tpu_custom_call.1} parent=1 // pred_check_branch
      %11 = sbr.rel (0) target = $region5
    $region4: #{tpu_custom_call.1} parent=1 // pred_region
      %s13 = ssub.s32 256, 256
      %14 = vsyncadd [#allocation5], %s13
      %s15 = sshll.u32 [#allocation4], 4
      %s16 = int_to_ptr.vmem [resolvable:$true] %s15
      %21 = dma.hbm_to_vmem [thread:$0]  %s0, 256, %s16, [#allocation5], 32, 32, 2
    $region5: #{tpu_custom_call.1} parent=1 // pred_fallthru
      _
    // Predicated region
    $region6: #{tpu_custom_call.1} parent=1 // pred_check
      _
    $region7: #{tpu_custom_call.1} parent=1 // pred_check_branch
      %23 = sbr.rel (0) target = $region9
    $region8: #{tpu_custom_call.1} parent=1 // pred_region
      %s25 = ssub.s32 2688, 2688
      %26 = vsyncadd [#allocation8], %s25
      %s27 = sshll.u32 [#allocation7], 4
      %s28 = int_to_ptr.vmem [resolvable:$true] %s27
      %33 = dma.hbm_to_vmem [thread:$0]  %s1, 2688, %s28, [#allocation8], 128, 128, 8
    $region9: #{tpu_custom_call.1} parent=1 // pred_fallthru
      _
    // Predicated region
    $region10: #{tpu_custom_call.1} parent=1 // pred_check
      _
    $region11: #{tpu_custom_call.1} parent=1 // pred_check_branch
      %35 = sbr.rel (0) target = $region13
    $region12: #{tpu_custom_call.1} parent=1 // pred_region
      %36 = dma.done [#allocation5], 256
    $region13: #{tpu_custom_call.1} parent=1 // pred_fallthru
      _
    // Predicated region
    $region14: #{tpu_custom_call.1} parent=1 // pred_check
      _
    $region15: #{tpu_custom_call.1} parent=1 // pred_check_branch
      %38 = sbr.rel (0) target = $region17
    $region16: #{tpu_custom_call.1} parent=1 // pred_region
      %39 = dma.done [#allocation8], 2688
    $region17: #{tpu_custom_call.1} parent=1 // pred_fallthru
      _
    %v40 = vld [vmem:[#allocation7 + $0x30] sm:$0x1]
    %v41 = vld [vmem:[#allocation7 + $0x31] sm:$0x1]
    %v42 = vld [vmem:[#allocation7] sm:$0xff]
    %v43 = vld [vmem:[#allocation7 + $0x8] sm:$0x1]
    loop: start=0, step=1, limit=8
    $region18: #{tpu_custom_call.1} parent=1 // loop_pre_header
      _
    $region19: #{tpu_custom_call.1} parent=1 // loop_header
      %s45 = sphi 0, %s49
      %p46 = scmp.ge.s32.totalorder %s45, 8
    $region20: #{tpu_custom_call.1} parent=1 // loop_header_branch
      %48 = sbr.rel (%p46) target = $region24
    $region21: #{tpu_custom_call.1} parent=1 // loop_body
      %s50 = smul.u32 %s45, 2
      %s51 = scalar_lea.vmem [#allocation4], %s50
      %v52 = vld [vmem:[%s51] sm:$0x3]
      %v53 = vlaneseq
      %v54 = vshrl.u32 %v53, 7
      %v55 = vsub.s32 0, %v54
      %v56 = vrot.slane %v40, %v55
      %v57 = vmul.f32 %v52, %v56
      %v58 = vlaneseq
      %v59 = vshrl.u32 %v58, 7
      %v60 = vsub.s32 0, %v59
      %v61 = vrot.slane %v41, %v60
      %v62 = vadd.f32 %v57, %v61
      %v63 = vlaneseq
      %v64 = vshrl.u32 %v63, 7
      %v65 = vsub.s32 0, %v64
      %v66 = vrot.slane %v62, %v65
      %68 = vbcast.lane.b32.xlu0 %v66, 256
      %v69 = vpop.permute.xlu0 %68
      %s71 = sor.u32 256, 8
      %72 = vbcast.lane.b32.xlu0 %v66, %s71
      %v73 = vpop.permute.xlu0 %72
      %v74 = vlaneseq
      %v75 = vshrl.u32 %v74, 7
      %v76 = vsub.s32 1, %v75
      %v77 = vrot.slane %v62, %v76
      %79 = vbcast.lane.b32.xlu0 %v77, 256
      %v80 = vpop.permute.xlu0 %79
      %s82 = sor.u32 256, 8
      %83 = vbcast.lane.b32.xlu0 %v77, %s82
      %v84 = vpop.permute.xlu0 %83
      %v85 = vsub.f32 %v69, %v42
      %v86 = vsub.f32 %v73, %v43
      %v87 = vsub.f32 %v80, %v42
      %v88 = vsub.f32 %v84, %v43
      %93 = vrot.lane.b32.xlu0 %v85, 32
      %v94 = vpop.permute.xlu0 %93
      %95 = vrot.lane.b32.xlu0 %v86, 32
      %v96 = vpop.permute.xlu0 %95
      %97 = vrot.lane.b32.xlu0 %v87, 32
      %v98 = vpop.permute.xlu0 %97
      %99 = vrot.lane.b32.xlu0 %v88, 32
      %v100 = vpop.permute.xlu0 %99
      %v105 = vmul.f32 %v42, %v94
      %v106 = vmul.f32 %v43, %v96
      %v107 = vmul.f32 %v42, %v98
      %v108 = vmul.f32 %v43, %v100
      %v109 = vmul.f32 %v105, 0.5
      %v110 = vmul.f32 %v106, 0.5
      %v111 = vmul.f32 %v107, 0.5
      %v112 = vmul.f32 %v108, 0.5
      %v113 = vtanh.pop %v109
      %v114 = vtanh.pop %v110
      %v115 = vtanh.pop %v111
      %v116 = vtanh.pop %v112
      %v117 = vmul.f32 %v113, 0.5
      %v118 = vmul.f32 %v114, 0.5
      %v119 = vmul.f32 %v115, 0.5
      %v120 = vmul.f32 %v116, 0.5
      %v121 = vadd.f32 %v117, 0.5
      %v122 = vadd.f32 %v118, 0.5
      %v123 = vadd.f32 %v119, 0.5
      %v124 = vadd.f32 %v120, 0.5
      %129 = vrot.lane.b32.xlu0 %v121, 96
      %v130 = vpop.permute.xlu0 %129
      %131 = vrot.lane.b32.xlu0 %v122, 96
      %v132 = vpop.permute.xlu0 %131
      %133 = vrot.lane.b32.xlu0 %v123, 96
      %v134 = vpop.permute.xlu0 %133
      %135 = vrot.lane.b32.xlu0 %v124, 96
      %v136 = vpop.permute.xlu0 %135
      %vm141 = vcmask 261120
      %v142 = vsel %vm141, %v130, %v121
      %v143 = vsel %vm141, %v132, %v122
      %v144 = vsel %vm141, %v134, %v123
      %v145 = vsel %vm141, %v136, %v124
      %148 = vrot.lane.b32.xlu0 %v42, 64
      %v149 = vpop.permute.xlu0 %148
      %150 = vrot.lane.b32.xlu0 %v43, 64
      %v151 = vpop.permute.xlu0 %150
      %v154 = vmul.f32 %v142, %v149
      %v155 = vmul.f32 %v143, %v151
      %v156 = vmul.f32 %v144, %v149
      %v157 = vmul.f32 %v145, %v151
      %vm158 = vcmask 523264
      %v159 = vsel %vm158, %v154, 0.0
      %vm160 = vcmask 516096
      %v161 = vsel %vm160, %v155, 0.0
      %v162 = vadd.f32 %v159, %v161
      %v163 = vrot.slane %v162, 4
      %v164 = vadd.f32 %v162, %v163
      %v165 = vrot.slane %v164, 2
      %v166 = vadd.f32 %v164, %v165
      %v167 = vrot.slane %v166, 1
      %v168 = vadd.f32 %v166, %v167
      %v169 = vsel %vm158, %v156, 0.0
      %v170 = vsel %vm160, %v157, 0.0
      %v171 = vadd.f32 %v169, %v170
      %v172 = vrot.slane %v171, 4
      %v173 = vadd.f32 %v171, %v172
      %v174 = vrot.slane %v173, 2
      %v175 = vadd.f32 %v173, %v174
      %v176 = vrot.slane %v175, 1
      %v177 = vadd.f32 %v175, %v176
      %vm180 = vcmask 1041409
      %v181 = vsel %vm180, %v177, %v168
      %s183 = scalar_lea.vmem [#allocation2], %s50
      %vm184 = vcmask 517120
      %185 = vst.msk [vmem:[%s183] sm:$0x3] %vm184, %v181
    $region22: #{tpu_custom_call.1} parent=1 // loop_footer
      %s49 = sadd.s32 1, %s45
    $region23: #{tpu_custom_call.1} parent=1 // loop_footer_branch
      %44 = sbr.rel target = $region19
    $region24: #{tpu_custom_call.1} parent=1 // loop_exit
      _
    %v186 = vld [vmem:[#allocation7 + $0x10] sm:$0xff]
    %v187 = vld [vmem:[#allocation7 + $0x18] sm:$0xff]
    %v188 = vld [vmem:[#allocation7 + $0x20] sm:$0xff]
    %v189 = vld [vmem:[#allocation7 + $0x28] sm:$0xff]
    %v190 = vld [vmem:[#allocation7 + $0x32] sm:$0x1]
    %v191 = vld [vmem:[#allocation7 + $0x33] sm:$0x1]
    %v192 = vld [vmem:[#allocation7 + $0x34] sm:$0x1]
    %v193 = vmul.f32 %v192, 6.0
    %v194 = vmul.f32 %v190, %v191
    %v195 = vadd.f32 %v193, %v190
    %v196 = vadd.f32 %v195, 1e-08
    loop: start=0, step=1, limit=8
    $region25: #{tpu_custom_call.1} parent=1 // loop_pre_header
      _
    $region26: #{tpu_custom_call.1} parent=1 // loop_header
      %s198 = sphi 0, %s202
      %p199 = scmp.ge.s32.totalorder %s198, 8
      %v203 = vphi 0.0, %v1501
    $region27: #{tpu_custom_call.1} parent=1 // loop_header_branch
      %201 = sbr.rel (%p199) target = $region31
    $region28: #{tpu_custom_call.1} parent=1 // loop_body
      %s204 = smul.u32 %s198, 2
      %s205 = scalar_lea.vmem [#allocation2], %s204
      %v206 = vld [vmem:[%s205] sm:$0x3]
      %v207 = vlaneseq
      %v208 = vshrl.u32 %v207, 7
      %v209 = vsub.s32 0, %v208
      %v210 = vrot.slane %v203, %v209
      %212 = vbcast.lane.b32.xlu0 %v210, 256
      %v213 = vpop.permute.xlu0 %212
      %s215 = sor.u32 256, 8
      %216 = vbcast.lane.b32.xlu0 %v210, %s215
      %v217 = vpop.permute.xlu0 %216
      %s219 = sor.u32 256, 16
      %220 = vbcast.lane.b32.xlu0 %v210, %s219
      %v221 = vpop.permute.xlu0 %220
      %s223 = sor.u32 256, 24
      %224 = vbcast.lane.b32.xlu0 %v210, %s223
      %v225 = vpop.permute.xlu0 %224
      %v226 = vlaneseq
      %v227 = vshrl.u32 %v226, 7
      %v228 = vsub.s32 1, %v227
      %v229 = vrot.slane %v203, %v228
      %231 = vbcast.lane.b32.xlu0 %v229, 256
      %v232 = vpop.permute.xlu0 %231
      %s234 = sor.u32 256, 8
      %235 = vbcast.lane.b32.xlu0 %v229, %s234
      %v236 = vpop.permute.xlu0 %235
      %s238 = sor.u32 256, 16
      %239 = vbcast.lane.b32.xlu0 %v229, %s238
      %v240 = vpop.permute.xlu0 %239
      %s242 = sor.u32 256, 24
      %243 = vbcast.lane.b32.xlu0 %v229, %s242
      %v244 = vpop.permute.xlu0 %243
      %v245 = vsub.f32 %v213, %v186
      %v246 = vsub.f32 %v217, %v187
      %v247 = vsub.f32 %v221, %v188
      %v248 = vsub.f32 %v225, %v189
      %v249 = vsub.f32 %v232, %v186
      %v250 = vsub.f32 %v236, %v187
      %v251 = vsub.f32 %v240, %v188
      %v252 = vsub.f32 %v244, %v189
      %261 = vrot.lane.b32.xlu0 %v245, 32
      %v262 = vpop.permute.xlu0 %261
      %263 = vrot.lane.b32.xlu0 %v246, 32
      %v264 = vpop.permute.xlu0 %263
      %265 = vrot.lane.b32.xlu0 %v247, 32
      %v266 = vpop.permute.xlu0 %265
      %267 = vrot.lane.b32.xlu0 %v248, 32
      %v268 = vpop.permute.xlu0 %267
      %269 = vrot.lane.b32.xlu0 %v249, 32
      %v270 = vpop.permute.xlu0 %269
      %271 = vrot.lane.b32.xlu0 %v250, 32
      %v272 = vpop.permute.xlu0 %271
      %273 = vrot.lane.b32.xlu0 %v251, 32
      %v274 = vpop.permute.xlu0 %273
      %275 = vrot.lane.b32.xlu0 %v252, 32
      %v276 = vpop.permute.xlu0 %275
      %v285 = vmul.f32 %v186, %v262
      %v286 = vmul.f32 %v187, %v264
      %v287 = vmul.f32 %v188, %v266
      %v288 = vmul.f32 %v189, %v268
      %v289 = vmul.f32 %v186, %v270
      %v290 = vmul.f32 %v187, %v272
      %v291 = vmul.f32 %v188, %v274
      %v292 = vmul.f32 %v189, %v276
      %v293 = vmul.f32 %v285, 0.5
      %v294 = vmul.f32 %v286, 0.5
      %v295 = vmul.f32 %v287, 0.5
      %v296 = vmul.f32 %v288, 0.5
      %v297 = vmul.f32 %v289, 0.5
      %v298 = vmul.f32 %v290, 0.5
      %v299 = vmul.f32 %v291, 0.5
      %v300 = vmul.f32 %v292, 0.5
      %v301 = vtanh.pop %v293
      %v302 = vtanh.pop %v294
      %v303 = vtanh.pop %v295
      %v304 = vtanh.pop %v296
      %v305 = vtanh.pop %v297
      %v306 = vtanh.pop %v298
      %v307 = vtanh.pop %v299
      %v308 = vtanh.pop %v300
      %v309 = vmul.f32 %v301, 0.5
      %v310 = vmul.f32 %v302, 0.5
      %v311 = vmul.f32 %v303, 0.5
      %v312 = vmul.f32 %v304, 0.5
      %v313 = vmul.f32 %v305, 0.5
      %v314 = vmul.f32 %v306, 0.5
      %v315 = vmul.f32 %v307, 0.5
      %v316 = vmul.f32 %v308, 0.5
      %v317 = vadd.f32 %v309, 0.5
      %v318 = vadd.f32 %v310, 0.5
      %v319 = vadd.f32 %v311, 0.5
      %v320 = vadd.f32 %v312, 0.5
      %v321 = vadd.f32 %v313, 0.5
      %v322 = vadd.f32 %v314, 0.5
      %v323 = vadd.f32 %v315, 0.5
      %v324 = vadd.f32 %v316, 0.5
      %333 = vrot.lane.b32.xlu0 %v317, 96
      %v334 = vpop.permute.xlu0 %333
      %335 = vrot.lane.b32.xlu0 %v318, 96
      %v336 = vpop.permute.xlu0 %335
      %337 = vrot.lane.b32.xlu0 %v319, 96
      %v338 = vpop.permute.xlu0 %337
      %339 = vrot.lane.b32.xlu0 %v320, 96
      %v340 = vpop.permute.xlu0 %339
      %341 = vrot.lane.b32.xlu0 %v321, 96
      %v342 = vpop.permute.xlu0 %341
      %343 = vrot.lane.b32.xlu0 %v322, 96
      %v344 = vpop.permute.xlu0 %343
      %345 = vrot.lane.b32.xlu0 %v323, 96
      %v346 = vpop.permute.xlu0 %345
      %347 = vrot.lane.b32.xlu0 %v324, 96
      %v348 = vpop.permute.xlu0 %347
      %vm357 = vcmask 261120
      %v358 = vsel %vm357, %v334, %v317
      %v359 = vsel %vm357, %v336, %v318
      %v360 = vsel %vm357, %v338, %v319
      %v361 = vsel %vm357, %v340, %v320
      %v362 = vsel %vm357, %v342, %v321
      %v363 = vsel %vm357, %v344, %v322
      %v364 = vsel %vm357, %v346, %v323
      %v365 = vsel %vm357, %v348, %v324
      %370 = vrot.lane.b32.xlu0 %v186, 64
      %v371 = vpop.permute.xlu0 %370
      %372 = vrot.lane.b32.xlu0 %v187, 64
      %v373 = vpop.permute.xlu0 %372
      %374 = vrot.lane.b32.xlu0 %v188, 64
      %v375 = vpop.permute.xlu0 %374
      %376 = vrot.lane.b32.xlu0 %v189, 64
      %v377 = vpop.permute.xlu0 %376
      %v382 = vmul.f32 %v358, %v371
      %v383 = vmul.f32 %v359, %v373
      %v384 = vmul.f32 %v360, %v375
      %v385 = vmul.f32 %v361, %v377
      %v386 = vmul.f32 %v362, %v371
      %v387 = vmul.f32 %v363, %v373
      %v388 = vmul.f32 %v364, %v375
      %v389 = vmul.f32 %v365, %v377
      %vm390 = vcmask 523264
      %v391 = vsel %vm390, %v382, 0.0
      %v392 = vsel %vm390, %v383, 0.0
      %v393 = vadd.f32 %v391, %v392
      %v394 = vsel %vm390, %v384, 0.0
      %v395 = vadd.f32 %v393, %v394
      %v396 = vsel %vm390, %v385, 0.0
      %v397 = vadd.f32 %v395, %v396
      %v398 = vrot.slane %v397, 4
      %v399 = vadd.f32 %v397, %v398
      %v400 = vrot.slane %v399, 2
      %v401 = vadd.f32 %v399, %v400
      %v402 = vrot.slane %v401, 1
      %v403 = vadd.f32 %v401, %v402
      %v404 = vsel %vm390, %v386, 0.0
      %v405 = vsel %vm390, %v387, 0.0
      %v406 = vadd.f32 %v404, %v405
      %v407 = vsel %vm390, %v388, 0.0
      %v408 = vadd.f32 %v406, %v407
      %v409 = vsel %vm390, %v389, 0.0
      %v410 = vadd.f32 %v408, %v409
      %v411 = vrot.slane %v410, 4
      %v412 = vadd.f32 %v410, %v411
      %v413 = vrot.slane %v412, 2
      %v414 = vadd.f32 %v412, %v413
      %v415 = vrot.slane %v414, 1
      %v416 = vadd.f32 %v414, %v415
      %v417 = vlaneseq
      %v418 = vshrl.u32 %v417, 7
      %v419 = vsub.s32 0, %v418
      %v420 = vrot.slane %v193, %v419
      %v421 = vmul.f32 %v420, %v203
      %v422 = vlaneseq
      %v423 = vshrl.u32 %v422, 7
      %v424 = vsub.s32 0, %v423
      %v425 = vrot.slane %v194, %v424
      %v426 = vadd.f32 %v421, %v425
      %vm429 = vcmask 1041409
      %v430 = vsel %vm429, %v416, %v403
      %v432 = vadd.f32 %v426, %v430
      %v433 = vadd.f32 %v432, %v206
      %v434 = vlaneseq
      %v435 = vshrl.u32 %v434, 7
      %v436 = vsub.s32 0, %v435
      %v437 = vrot.slane %v196, %v436
      %438 = vrot.lane.b32.xlu0 %v430, 96
      %v439 = vpop.permute.xlu0 %438
      %v441 = vadd.f32 %v437, %v439
      %443 = vrot.lane.b32.xlu0 %v206, 96
      %v444 = vpop.permute.xlu0 %443
      %v446 = vadd.f32 %v441, %v444
      %v447 = vrcp.pop %v446
      %v448 = vmul.f32 %v446, %v447
      %v449 = vsub.f32 2.0, %v448
      %v450 = vmul.f32 %v447, %v449
      %v451 = vmul.f32 %v433, %v450
      %v452 = vlaneseq
      %v453 = vshrl.u32 %v452, 7
      %v454 = vsub.s32 0, %v453
      %v455 = vrot.slane %v451, %v454
      %457 = vbcast.lane.b32.xlu0 %v455, 256
      %v458 = vpop.permute.xlu0 %457
      %s460 = sor.u32 256, 8
      %461 = vbcast.lane.b32.xlu0 %v455, %s460
      %v462 = vpop.permute.xlu0 %461
      %s464 = sor.u32 256, 16
      %465 = vbcast.lane.b32.xlu0 %v455, %s464
      %v466 = vpop.permute.xlu0 %465
      %s468 = sor.u32 256, 24
      %469 = vbcast.lane.b32.xlu0 %v455, %s468
      %v470 = vpop.permute.xlu0 %469
      %v471 = vlaneseq
      %v472 = vshrl.u32 %v471, 7
      %v473 = vsub.s32 1, %v472
      %v474 = vrot.slane %v451, %v473
      %476 = vbcast.lane.b32.xlu0 %v474, 256
      %v477 = vpop.permute.xlu0 %476
      %s479 = sor.u32 256, 8
      %480 = vbcast.lane.b32.xlu0 %v474, %s479
      %v481 = vpop.permute.xlu0 %480
      %s483 = sor.u32 256, 16
      %484 = vbcast.lane.b32.xlu0 %v474, %s483
      %v485 = vpop.permute.xlu0 %484
      %s487 = sor.u32 256, 24
      %488 = vbcast.lane.b32.xlu0 %v474, %s487
      %v489 = vpop.permute.xlu0 %488
      %v490 = vsub.f32 %v458, %v186
      %v491 = vsub.f32 %v462, %v187
      %v492 = vsub.f32 %v466, %v188
      %v493 = vsub.f32 %v470, %v189
      %v494 = vsub.f32 %v477, %v186
      %v495 = vsub.f32 %v481, %v187
      %v496 = vsub.f32 %v485, %v188
      %v497 = vsub.f32 %v489, %v189
      %506 = vrot.lane.b32.xlu0 %v490, 32
      %v507 = vpop.permute.xlu0 %506
      %508 = vrot.lane.b32.xlu0 %v491, 32
      %v509 = vpop.permute.xlu0 %508
      %510 = vrot.lane.b32.xlu0 %v492, 32
      %v511 = vpop.permute.xlu0 %510
      %512 = vrot.lane.b32.xlu0 %v493, 32
      %v513 = vpop.permute.xlu0 %512
      %514 = vrot.lane.b32.xlu0 %v494, 32
      %v515 = vpop.permute.xlu0 %514
      %516 = vrot.lane.b32.xlu0 %v495, 32
      %v517 = vpop.permute.xlu0 %516
      %518 = vrot.lane.b32.xlu0 %v496, 32
      %v519 = vpop.permute.xlu0 %518
      %520 = vrot.lane.b32.xlu0 %v497, 32
      %v521 = vpop.permute.xlu0 %520
      %v530 = vmul.f32 %v186, %v507
      %v531 = vmul.f32 %v187, %v509
      %v532 = vmul.f32 %v188, %v511
      %v533 = vmul.f32 %v189, %v513
      %v534 = vmul.f32 %v186, %v515
      %v535 = vmul.f32 %v187, %v517
      %v536 = vmul.f32 %v188, %v519
      %v537 = vmul.f32 %v189, %v521
      %v538 = vmul.f32 %v530, 0.5
      %v539 = vmul.f32 %v531, 0.5
      %v540 = vmul.f32 %v532, 0.5
      %v541 = vmul.f32 %v533, 0.5
      %v542 = vmul.f32 %v534, 0.5
      %v543 = vmul.f32 %v535, 0.5
      %v544 = vmul.f32 %v536, 0.5
      %v545 = vmul.f32 %v537, 0.5
      %v546 = vtanh.pop %v538
      %v547 = vtanh.pop %v539
      %v548 = vtanh.pop %v540
      %v549 = vtanh.pop %v541
      %v550 = vtanh.pop %v542
      %v551 = vtanh.pop %v543
      %v552 = vtanh.pop %v544
      %v553 = vtanh.pop %v545
      %v554 = vmul.f32 %v546, 0.5
      %v555 = vmul.f32 %v547, 0.5
      %v556 = vmul.f32 %v548, 0.5
      %v557 = vmul.f32 %v549, 0.5
      %v558 = vmul.f32 %v550, 0.5
      %v559 = vmul.f32 %v551, 0.5
      %v560 = vmul.f32 %v552, 0.5
      %v561 = vmul.f32 %v553, 0.5
      %v562 = vadd.f32 %v554, 0.5
      %v563 = vadd.f32 %v555, 0.5
      %v564 = vadd.f32 %v556, 0.5
      %v565 = vadd.f32 %v557, 0.5
      %v566 = vadd.f32 %v558, 0.5
      %v567 = vadd.f32 %v559, 0.5
      %v568 = vadd.f32 %v560, 0.5
      %v569 = vadd.f32 %v561, 0.5
      %578 = vrot.lane.b32.xlu0 %v562, 96
      %v579 = vpop.permute.xlu0 %578
      %580 = vrot.lane.b32.xlu0 %v563, 96
      %v581 = vpop.permute.xlu0 %580
      %582 = vrot.lane.b32.xlu0 %v564, 96
      %v583 = vpop.permute.xlu0 %582
      %584 = vrot.lane.b32.xlu0 %v565, 96
      %v585 = vpop.permute.xlu0 %584
      %586 = vrot.lane.b32.xlu0 %v566, 96
      %v587 = vpop.permute.xlu0 %586
      %588 = vrot.lane.b32.xlu0 %v567, 96
      %v589 = vpop.permute.xlu0 %588
      %590 = vrot.lane.b32.xlu0 %v568, 96
      %v591 = vpop.permute.xlu0 %590
      %592 = vrot.lane.b32.xlu0 %v569, 96
      %v593 = vpop.permute.xlu0 %592
      %v602 = vsel %vm357, %v579, %v562
      %v603 = vsel %vm357, %v581, %v563
      %v604 = vsel %vm357, %v583, %v564
      %v605 = vsel %vm357, %v585, %v565
      %v606 = vsel %vm357, %v587, %v566
      %v607 = vsel %vm357, %v589, %v567
      %v608 = vsel %vm357, %v591, %v568
      %v609 = vsel %vm357, %v593, %v569
      %v610 = vmul.f32 %v602, %v371
      %v611 = vmul.f32 %v603, %v373
      %v612 = vmul.f32 %v604, %v375
      %v613 = vmul.f32 %v605, %v377
      %v614 = vmul.f32 %v606, %v371
      %v615 = vmul.f32 %v607, %v373
      %v616 = vmul.f32 %v608, %v375
      %v617 = vmul.f32 %v609, %v377
      %v618 = vsel %vm390, %v610, 0.0
      %v619 = vsel %vm390, %v611, 0.0
      %v620 = vadd.f32 %v618, %v619
      %v621 = vsel %vm390, %v612, 0.0
      %v622 = vadd.f32 %v620, %v621
      %v623 = vsel %vm390, %v613, 0.0
      %v624 = vadd.f32 %v622, %v623
      %v625 = vrot.slane %v624, 4
      %v626 = vadd.f32 %v624, %v625
      %v627 = vrot.slane %v626, 2
      %v628 = vadd.f32 %v626, %v627
      %v629 = vrot.slane %v628, 1
      %v630 = vadd.f32 %v628, %v629
      %v631 = vsel %vm390, %v614, 0.0
      %v632 = vsel %vm390, %v615, 0.0
      %v633 = vadd.f32 %v631, %v632
      %v634 = vsel %vm390, %v616, 0.0
      %v635 = vadd.f32 %v633, %v634
      %v636 = vsel %vm390, %v617, 0.0
      %v637 = vadd.f32 %v635, %v636
      %v638 = vrot.slane %v637, 4
      %v639 = vadd.f32 %v637, %v638
      %v640 = vrot.slane %v639, 2
      %v641 = vadd.f32 %v639, %v640
      %v642 = vrot.slane %v641, 1
      %v643 = vadd.f32 %v641, %v642
      %v644 = vmul.f32 %v420, %v451
      %v645 = vadd.f32 %v644, %v425
      %v648 = vsel %vm429, %v643, %v630
      %v650 = vadd.f32 %v645, %v648
      %v651 = vadd.f32 %v650, %v206
      %652 = vrot.lane.b32.xlu0 %v648, 96
      %v653 = vpop.permute.xlu0 %652
      %v655 = vadd.f32 %v437, %v653
      %v656 = vadd.f32 %v655, %v444
      %v657 = vrcp.pop %v656
      %v658 = vmul.f32 %v656, %v657
      %v659 = vsub.f32 2.0, %v658
      %v660 = vmul.f32 %v657, %v659
      %v661 = vmul.f32 %v651, %v660
      %v662 = vlaneseq
      %v663 = vshrl.u32 %v662, 7
      %v664 = vsub.s32 0, %v663
      %v665 = vrot.slane %v661, %v664
      %667 = vbcast.lane.b32.xlu0 %v665, 256
      %v668 = vpop.permute.xlu0 %667
      %s670 = sor.u32 256, 8
      %671 = vbcast.lane.b32.xlu0 %v665, %s670
      %v672 = vpop.permute.xlu0 %671
      %s674 = sor.u32 256, 16
      %675 = vbcast.lane.b32.xlu0 %v665, %s674
      %v676 = vpop.permute.xlu0 %675
      %s678 = sor.u32 256, 24
      %679 = vbcast.lane.b32.xlu0 %v665, %s678
      %v680 = vpop.permute.xlu0 %679
      %v681 = vlaneseq
      %v682 = vshrl.u32 %v681, 7
      %v683 = vsub.s32 1, %v682
      %v684 = vrot.slane %v661, %v683
      %686 = vbcast.lane.b32.xlu0 %v684, 256
      %v687 = vpop.permute.xlu0 %686
      %s689 = sor.u32 256, 8
      %690 = vbcast.lane.b32.xlu0 %v684, %s689
      %v691 = vpop.permute.xlu0 %690
      %s693 = sor.u32 256, 16
      %694 = vbcast.lane.b32.xlu0 %v684, %s693
      %v695 = vpop.permute.xlu0 %694
      %s697 = sor.u32 256, 24
      %698 = vbcast.lane.b32.xlu0 %v684, %s697
      %v699 = vpop.permute.xlu0 %698
      %v700 = vsub.f32 %v668, %v186
      %v701 = vsub.f32 %v672, %v187
      %v702 = vsub.f32 %v676, %v188
      %v703 = vsub.f32 %v680, %v189
      %v704 = vsub.f32 %v687, %v186
      %v705 = vsub.f32 %v691, %v187
      %v706 = vsub.f32 %v695, %v188
      %v707 = vsub.f32 %v699, %v189
      %716 = vrot.lane.b32.xlu0 %v700, 32
      %v717 = vpop.permute.xlu0 %716
      %718 = vrot.lane.b32.xlu0 %v701, 32
      %v719 = vpop.permute.xlu0 %718
      %720 = vrot.lane.b32.xlu0 %v702, 32
      %v721 = vpop.permute.xlu0 %720
      %722 = vrot.lane.b32.xlu0 %v703, 32
      %v723 = vpop.permute.xlu0 %722
      %724 = vrot.lane.b32.xlu0 %v704, 32
      %v725 = vpop.permute.xlu0 %724
      %726 = vrot.lane.b32.xlu0 %v705, 32
      %v727 = vpop.permute.xlu0 %726
      %728 = vrot.lane.b32.xlu0 %v706, 32
      %v729 = vpop.permute.xlu0 %728
      %730 = vrot.lane.b32.xlu0 %v707, 32
      %v731 = vpop.permute.xlu0 %730
      %v740 = vmul.f32 %v186, %v717
      %v741 = vmul.f32 %v187, %v719
      %v742 = vmul.f32 %v188, %v721
      %v743 = vmul.f32 %v189, %v723
      %v744 = vmul.f32 %v186, %v725
      %v745 = vmul.f32 %v187, %v727
      %v746 = vmul.f32 %v188, %v729
      %v747 = vmul.f32 %v189, %v731
      %v748 = vmul.f32 %v740, 0.5
      %v749 = vmul.f32 %v741, 0.5
      %v750 = vmul.f32 %v742, 0.5
      %v751 = vmul.f32 %v743, 0.5
      %v752 = vmul.f32 %v744, 0.5
      %v753 = vmul.f32 %v745, 0.5
      %v754 = vmul.f32 %v746, 0.5
      %v755 = vmul.f32 %v747, 0.5
      %v756 = vtanh.pop %v748
      %v757 = vtanh.pop %v749
      %v758 = vtanh.pop %v750
      %v759 = vtanh.pop %v751
      %v760 = vtanh.pop %v752
      %v761 = vtanh.pop %v753
      %v762 = vtanh.pop %v754
      %v763 = vtanh.pop %v755
      %v764 = vmul.f32 %v756, 0.5
      %v765 = vmul.f32 %v757, 0.5
      %v766 = vmul.f32 %v758, 0.5
      %v767 = vmul.f32 %v759, 0.5
      %v768 = vmul.f32 %v760, 0.5
      %v769 = vmul.f32 %v761, 0.5
      %v770 = vmul.f32 %v762, 0.5
      %v771 = vmul.f32 %v763, 0.5
      %v772 = vadd.f32 %v764, 0.5
      %v773 = vadd.f32 %v765, 0.5
      %v774 = vadd.f32 %v766, 0.5
      %v775 = vadd.f32 %v767, 0.5
      %v776 = vadd.f32 %v768, 0.5
      %v777 = vadd.f32 %v769, 0.5
      %v778 = vadd.f32 %v770, 0.5
      %v779 = vadd.f32 %v771, 0.5
      %788 = vrot.lane.b32.xlu0 %v772, 96
      %v789 = vpop.permute.xlu0 %788
      %790 = vrot.lane.b32.xlu0 %v773, 96
      %v791 = vpop.permute.xlu0 %790
      %792 = vrot.lane.b32.xlu0 %v774, 96
      %v793 = vpop.permute.xlu0 %792
      %794 = vrot.lane.b32.xlu0 %v775, 96
      %v795 = vpop.permute.xlu0 %794
      %796 = vrot.lane.b32.xlu0 %v776, 96
      %v797 = vpop.permute.xlu0 %796
      %798 = vrot.lane.b32.xlu0 %v777, 96
      %v799 = vpop.permute.xlu0 %798
      %800 = vrot.lane.b32.xlu0 %v778, 96
      %v801 = vpop.permute.xlu0 %800
      %802 = vrot.lane.b32.xlu0 %v779, 96
      %v803 = vpop.permute.xlu0 %802
      %v812 = vsel %vm357, %v789, %v772
      %v813 = vsel %vm357, %v791, %v773
      %v814 = vsel %vm357, %v793, %v774
      %v815 = vsel %vm357, %v795, %v775
      %v816 = vsel %vm357, %v797, %v776
      %v817 = vsel %vm357, %v799, %v777
      %v818 = vsel %vm357, %v801, %v778
      %v819 = vsel %vm357, %v803, %v779
      %v820 = vmul.f32 %v812, %v371
      %v821 = vmul.f32 %v813, %v373
      %v822 = vmul.f32 %v814, %v375
      %v823 = vmul.f32 %v815, %v377
      %v824 = vmul.f32 %v816, %v371
      %v825 = vmul.f32 %v817, %v373
      %v826 = vmul.f32 %v818, %v375
      %v827 = vmul.f32 %v819, %v377
      %v828 = vsel %vm390, %v820, 0.0
      %v829 = vsel %vm390, %v821, 0.0
      %v830 = vadd.f32 %v828, %v829
      %v831 = vsel %vm390, %v822, 0.0
      %v832 = vadd.f32 %v830, %v831
      %v833 = vsel %vm390, %v823, 0.0
      %v834 = vadd.f32 %v832, %v833
      %v835 = vrot.slane %v834, 4
      %v836 = vadd.f32 %v834, %v835
      %v837 = vrot.slane %v836, 2
      %v838 = vadd.f32 %v836, %v837
      %v839 = vrot.slane %v838, 1
      %v840 = vadd.f32 %v838, %v839
      %v841 = vsel %vm390, %v824, 0.0
      %v842 = vsel %vm390, %v825, 0.0
      %v843 = vadd.f32 %v841, %v842
      %v844 = vsel %vm390, %v826, 0.0
      %v845 = vadd.f32 %v843, %v844
      %v846 = vsel %vm390, %v827, 0.0
      %v847 = vadd.f32 %v845, %v846
      %v848 = vrot.slane %v847, 4
      %v849 = vadd.f32 %v847, %v848
      %v850 = vrot.slane %v849, 2
      %v851 = vadd.f32 %v849, %v850
      %v852 = vrot.slane %v851, 1
      %v853 = vadd.f32 %v851, %v852
      %v854 = vmul.f32 %v420, %v661
      %v855 = vadd.f32 %v854, %v425
      %v858 = vsel %vm429, %v853, %v840
      %v860 = vadd.f32 %v855, %v858
      %v861 = vadd.f32 %v860, %v206
      %862 = vrot.lane.b32.xlu0 %v858, 96
      %v863 = vpop.permute.xlu0 %862
      %v865 = vadd.f32 %v437, %v863
      %v866 = vadd.f32 %v865, %v444
      %v867 = vrcp.pop %v866
      %v868 = vmul.f32 %v866, %v867
      %v869 = vsub.f32 2.0, %v868
      %v870 = vmul.f32 %v867, %v869
      %v871 = vmul.f32 %v861, %v870
      %v872 = vlaneseq
      %v873 = vshrl.u32 %v872, 7
      %v874 = vsub.s32 0, %v873
      %v875 = vrot.slane %v871, %v874
      %877 = vbcast.lane.b32.xlu0 %v875, 256
      %v878 = vpop.permute.xlu0 %877
      %s880 = sor.u32 256, 8
      %881 = vbcast.lane.b32.xlu0 %v875, %s880
      %v882 = vpop.permute.xlu0 %881
      %s884 = sor.u32 256, 16
      %885 = vbcast.lane.b32.xlu0 %v875, %s884
      %v886 = vpop.permute.xlu0 %885
      %s888 = sor.u32 256, 24
      %889 = vbcast.lane.b32.xlu0 %v875, %s888
      %v890 = vpop.permute.xlu0 %889
      %v891 = vlaneseq
      %v892 = vshrl.u32 %v891, 7
      %v893 = vsub.s32 1, %v892
      %v894 = vrot.slane %v871, %v893
      %896 = vbcast.lane.b32.xlu0 %v894, 256
      %v897 = vpop.permute.xlu0 %896
      %s899 = sor.u32 256, 8
      %900 = vbcast.lane.b32.xlu0 %v894, %s899
      %v901 = vpop.permute.xlu0 %900
      %s903 = sor.u32 256, 16
      %904 = vbcast.lane.b32.xlu0 %v894, %s903
      %v905 = vpop.permute.xlu0 %904
      %s907 = sor.u32 256, 24
      %908 = vbcast.lane.b32.xlu0 %v894, %s907
      %v909 = vpop.permute.xlu0 %908
      %v910 = vsub.f32 %v878, %v186
      %v911 = vsub.f32 %v882, %v187
      %v912 = vsub.f32 %v886, %v188
      %v913 = vsub.f32 %v890, %v189
      %v914 = vsub.f32 %v897, %v186
      %v915 = vsub.f32 %v901, %v187
      %v916 = vsub.f32 %v905, %v188
      %v917 = vsub.f32 %v909, %v189
      %926 = vrot.lane.b32.xlu0 %v910, 32
      %v927 = vpop.permute.xlu0 %926
      %928 = vrot.lane.b32.xlu0 %v911, 32
      %v929 = vpop.permute.xlu0 %928
      %930 = vrot.lane.b32.xlu0 %v912, 32
      %v931 = vpop.permute.xlu0 %930
      %932 = vrot.lane.b32.xlu0 %v913, 32
      %v933 = vpop.permute.xlu0 %932
      %934 = vrot.lane.b32.xlu0 %v914, 32
      %v935 = vpop.permute.xlu0 %934
      %936 = vrot.lane.b32.xlu0 %v915, 32
      %v937 = vpop.permute.xlu0 %936
      %938 = vrot.lane.b32.xlu0 %v916, 32
      %v939 = vpop.permute.xlu0 %938
      %940 = vrot.lane.b32.xlu0 %v917, 32
      %v941 = vpop.permute.xlu0 %940
      %v950 = vmul.f32 %v186, %v927
      %v951 = vmul.f32 %v187, %v929
      %v952 = vmul.f32 %v188, %v931
      %v953 = vmul.f32 %v189, %v933
      %v954 = vmul.f32 %v186, %v935
      %v955 = vmul.f32 %v187, %v937
      %v956 = vmul.f32 %v188, %v939
      %v957 = vmul.f32 %v189, %v941
      %v958 = vmul.f32 %v950, 0.5
      %v959 = vmul.f32 %v951, 0.5
      %v960 = vmul.f32 %v952, 0.5
      %v961 = vmul.f32 %v953, 0.5
      %v962 = vmul.f32 %v954, 0.5
      %v963 = vmul.f32 %v955, 0.5
      %v964 = vmul.f32 %v956, 0.5
      %v965 = vmul.f32 %v957, 0.5
      %v966 = vtanh.pop %v958
      %v967 = vtanh.pop %v959
      %v968 = vtanh.pop %v960
      %v969 = vtanh.pop %v961
      %v970 = vtanh.pop %v962
      %v971 = vtanh.pop %v963
      %v972 = vtanh.pop %v964
      %v973 = vtanh.pop %v965
      %v974 = vmul.f32 %v966, 0.5
      %v975 = vmul.f32 %v967, 0.5
      %v976 = vmul.f32 %v968, 0.5
      %v977 = vmul.f32 %v969, 0.5
      %v978 = vmul.f32 %v970, 0.5
      %v979 = vmul.f32 %v971, 0.5
      %v980 = vmul.f32 %v972, 0.5
      %v981 = vmul.f32 %v973, 0.5
      %v982 = vadd.f32 %v974, 0.5
      %v983 = vadd.f32 %v975, 0.5
      %v984 = vadd.f32 %v976, 0.5
      %v985 = vadd.f32 %v977, 0.5
      %v986 = vadd.f32 %v978, 0.5
      %v987 = vadd.f32 %v979, 0.5
      %v988 = vadd.f32 %v980, 0.5
      %v989 = vadd.f32 %v981, 0.5
      %998 = vrot.lane.b32.xlu0 %v982, 96
      %v999 = vpop.permute.xlu0 %998
      %1000 = vrot.lane.b32.xlu0 %v983, 96
      %v1001 = vpop.permute.xlu0 %1000
      %1002 = vrot.lane.b32.xlu0 %v984, 96
      %v1003 = vpop.permute.xlu0 %1002
      %1004 = vrot.lane.b32.xlu0 %v985, 96
      %v1005 = vpop.permute.xlu0 %1004
      %1006 = vrot.lane.b32.xlu0 %v986, 96
      %v1007 = vpop.permute.xlu0 %1006
      %1008 = vrot.lane.b32.xlu0 %v987, 96
      %v1009 = vpop.permute.xlu0 %1008
      %1010 = vrot.lane.b32.xlu0 %v988, 96
      %v1011 = vpop.permute.xlu0 %1010
      %1012 = vrot.lane.b32.xlu0 %v989, 96
      %v1013 = vpop.permute.xlu0 %1012
      %v1022 = vsel %vm357, %v999, %v982
      %v1023 = vsel %vm357, %v1001, %v983
      %v1024 = vsel %vm357, %v1003, %v984
      %v1025 = vsel %vm357, %v1005, %v985
      %v1026 = vsel %vm357, %v1007, %v986
      %v1027 = vsel %vm357, %v1009, %v987
      %v1028 = vsel %vm357, %v1011, %v988
      %v1029 = vsel %vm357, %v1013, %v989
      %v1030 = vmul.f32 %v1022, %v371
      %v1031 = vmul.f32 %v1023, %v373
      %v1032 = vmul.f32 %v1024, %v375
      %v1033 = vmul.f32 %v1025, %v377
      %v1034 = vmul.f32 %v1026, %v371
      %v1035 = vmul.f32 %v1027, %v373
      %v1036 = vmul.f32 %v1028, %v375
      %v1037 = vmul.f32 %v1029, %v377
      %v1038 = vsel %vm390, %v1030, 0.0
      %v1039 = vsel %vm390, %v1031, 0.0
      %v1040 = vadd.f32 %v1038, %v1039
      %v1041 = vsel %vm390, %v1032, 0.0
      %v1042 = vadd.f32 %v1040, %v1041
      %v1043 = vsel %vm390, %v1033, 0.0
      %v1044 = vadd.f32 %v1042, %v1043
      %v1045 = vrot.slane %v1044, 4
      %v1046 = vadd.f32 %v1044, %v1045
      %v1047 = vrot.slane %v1046, 2
      %v1048 = vadd.f32 %v1046, %v1047
      %v1049 = vrot.slane %v1048, 1
      %v1050 = vadd.f32 %v1048, %v1049
      %v1051 = vsel %vm390, %v1034, 0.0
      %v1052 = vsel %vm390, %v1035, 0.0
      %v1053 = vadd.f32 %v1051, %v1052
      %v1054 = vsel %vm390, %v1036, 0.0
      %v1055 = vadd.f32 %v1053, %v1054
      %v1056 = vsel %vm390, %v1037, 0.0
      %v1057 = vadd.f32 %v1055, %v1056
      %v1058 = vrot.slane %v1057, 4
      %v1059 = vadd.f32 %v1057, %v1058
      %v1060 = vrot.slane %v1059, 2
      %v1061 = vadd.f32 %v1059, %v1060
      %v1062 = vrot.slane %v1061, 1
      %v1063 = vadd.f32 %v1061, %v1062
      %v1064 = vmul.f32 %v420, %v871
      %v1065 = vadd.f32 %v1064, %v425
      %v1068 = vsel %vm429, %v1063, %v1050
      %v1070 = vadd.f32 %v1065, %v1068
      %v1071 = vadd.f32 %v1070, %v206
      %1072 = vrot.lane.b32.xlu0 %v1068, 96
      %v1073 = vpop.permute.xlu0 %1072
      %v1075 = vadd.f32 %v437, %v1073
      %v1076 = vadd.f32 %v1075, %v444
      %v1077 = vrcp.pop %v1076
      %v1078 = vmul.f32 %v1076, %v1077
      %v1079 = vsub.f32 2.0, %v1078
      %v1080 = vmul.f32 %v1077, %v1079
      %v1081 = vmul.f32 %v1071, %v1080
      %v1082 = vlaneseq
      %v1083 = vshrl.u32 %v1082, 7
      %v1084 = vsub.s32 0, %v1083
      %v1085 = vrot.slane %v1081, %v1084
      %1087 = vbcast.lane.b32.xlu0 %v1085, 256
      %v1088 = vpop.permute.xlu0 %1087
      %s1090 = sor.u32 256, 8
      %1091 = vbcast.lane.b32.xlu0 %v1085, %s1090
      %v1092 = vpop.permute.xlu0 %1091
      %s1094 = sor.u32 256, 16
      %1095 = vbcast.lane.b32.xlu0 %v1085, %s1094
      %v1096 = vpop.permute.xlu0 %1095
      %s1098 = sor.u32 256, 24
      %1099 = vbcast.lane.b32.xlu0 %v1085, %s1098
      %v1100 = vpop.permute.xlu0 %1099
      %v1101 = vlaneseq
      %v1102 = vshrl.u32 %v1101, 7
      %v1103 = vsub.s32 1, %v1102
      %v1104 = vrot.slane %v1081, %v1103
      %1106 = vbcast.lane.b32.xlu0 %v1104, 256
      %v1107 = vpop.permute.xlu0 %1106
      %s1109 = sor.u32 256, 8
      %1110 = vbcast.lane.b32.xlu0 %v1104, %s1109
      %v1111 = vpop.permute.xlu0 %1110
      %s1113 = sor.u32 256, 16
      %1114 = vbcast.lane.b32.xlu0 %v1104, %s1113
      %v1115 = vpop.permute.xlu0 %1114
      %s1117 = sor.u32 256, 24
      %1118 = vbcast.lane.b32.xlu0 %v1104, %s1117
      %v1119 = vpop.permute.xlu0 %1118
      %v1120 = vsub.f32 %v1088, %v186
      %v1121 = vsub.f32 %v1092, %v187
      %v1122 = vsub.f32 %v1096, %v188
      %v1123 = vsub.f32 %v1100, %v189
      %v1124 = vsub.f32 %v1107, %v186
      %v1125 = vsub.f32 %v1111, %v187
      %v1126 = vsub.f32 %v1115, %v188
      %v1127 = vsub.f32 %v1119, %v189
      %1136 = vrot.lane.b32.xlu0 %v1120, 32
      %v1137 = vpop.permute.xlu0 %1136
      %1138 = vrot.lane.b32.xlu0 %v1121, 32
      %v1139 = vpop.permute.xlu0 %1138
      %1140 = vrot.lane.b32.xlu0 %v1122, 32
      %v1141 = vpop.permute.xlu0 %1140
      %1142 = vrot.lane.b32.xlu0 %v1123, 32
      %v1143 = vpop.permute.xlu0 %1142
      %1144 = vrot.lane.b32.xlu0 %v1124, 32
      %v1145 = vpop.permute.xlu0 %1144
      %1146 = vrot.lane.b32.xlu0 %v1125, 32
      %v1147 = vpop.permute.xlu0 %1146
      %1148 = vrot.lane.b32.xlu0 %v1126, 32
      %v1149 = vpop.permute.xlu0 %1148
      %1150 = vrot.lane.b32.xlu0 %v1127, 32
      %v1151 = vpop.permute.xlu0 %1150
      %v1160 = vmul.f32 %v186, %v1137
      %v1161 = vmul.f32 %v187, %v1139
      %v1162 = vmul.f32 %v188, %v1141
      %v1163 = vmul.f32 %v189, %v1143
      %v1164 = vmul.f32 %v186, %v1145
      %v1165 = vmul.f32 %v187, %v1147
      %v1166 = vmul.f32 %v188, %v1149
      %v1167 = vmul.f32 %v189, %v1151
      %v1168 = vmul.f32 %v1160, 0.5
      %v1169 = vmul.f32 %v1161, 0.5
      %v1170 = vmul.f32 %v1162, 0.5
      %v1171 = vmul.f32 %v1163, 0.5
      %v1172 = vmul.f32 %v1164, 0.5
      %v1173 = vmul.f32 %v1165, 0.5
      %v1174 = vmul.f32 %v1166, 0.5
      %v1175 = vmul.f32 %v1167, 0.5
      %v1176 = vtanh.pop %v1168
      %v1177 = vtanh.pop %v1169
      %v1178 = vtanh.pop %v1170
      %v1179 = vtanh.pop %v1171
      %v1180 = vtanh.pop %v1172
      %v1181 = vtanh.pop %v1173
      %v1182 = vtanh.pop %v1174
      %v1183 = vtanh.pop %v1175
      %v1184 = vmul.f32 %v1176, 0.5
      %v1185 = vmul.f32 %v1177, 0.5
      %v1186 = vmul.f32 %v1178, 0.5
      %v1187 = vmul.f32 %v1179, 0.5
      %v1188 = vmul.f32 %v1180, 0.5
      %v1189 = vmul.f32 %v1181, 0.5
      %v1190 = vmul.f32 %v1182, 0.5
      %v1191 = vmul.f32 %v1183, 0.5
      %v1192 = vadd.f32 %v1184, 0.5
      %v1193 = vadd.f32 %v1185, 0.5
      %v1194 = vadd.f32 %v1186, 0.5
      %v1195 = vadd.f32 %v1187, 0.5
      %v1196 = vadd.f32 %v1188, 0.5
      %v1197 = vadd.f32 %v1189, 0.5
      %v1198 = vadd.f32 %v1190, 0.5
      %v1199 = vadd.f32 %v1191, 0.5
      %1208 = vrot.lane.b32.xlu0 %v1192, 96
      %v1209 = vpop.permute.xlu0 %1208
      %1210 = vrot.lane.b32.xlu0 %v1193, 96
      %v1211 = vpop.permute.xlu0 %1210
      %1212 = vrot.lane.b32.xlu0 %v1194, 96
      %v1213 = vpop.permute.xlu0 %1212
      %1214 = vrot.lane.b32.xlu0 %v1195, 96
      %v1215 = vpop.permute.xlu0 %1214
      %1216 = vrot.lane.b32.xlu0 %v1196, 96
      %v1217 = vpop.permute.xlu0 %1216
      %1218 = vrot.lane.b32.xlu0 %v1197, 96
      %v1219 = vpop.permute.xlu0 %1218
      %1220 = vrot.lane.b32.xlu0 %v1198, 96
      %v1221 = vpop.permute.xlu0 %1220
      %1222 = vrot.lane.b32.xlu0 %v1199, 96
      %v1223 = vpop.permute.xlu0 %1222
      %v1232 = vsel %vm357, %v1209, %v1192
      %v1233 = vsel %vm357, %v1211, %v1193
      %v1234 = vsel %vm357, %v1213, %v1194
      %v1235 = vsel %vm357, %v1215, %v1195
      %v1236 = vsel %vm357, %v1217, %v1196
      %v1237 = vsel %vm357, %v1219, %v1197
      %v1238 = vsel %vm357, %v1221, %v1198
      %v1239 = vsel %vm357, %v1223, %v1199
      %v1240 = vmul.f32 %v1232, %v371
      %v1241 = vmul.f32 %v1233, %v373
      %v1242 = vmul.f32 %v1234, %v375
      %v1243 = vmul.f32 %v1235, %v377
      %v1244 = vmul.f32 %v1236, %v371
      %v1245 = vmul.f32 %v1237, %v373
      %v1246 = vmul.f32 %v1238, %v375
      %v1247 = vmul.f32 %v1239, %v377
      %v1248 = vsel %vm390, %v1240, 0.0
      %v1249 = vsel %vm390, %v1241, 0.0
      %v1250 = vadd.f32 %v1248, %v1249
      %v1251 = vsel %vm390, %v1242, 0.0
      %v1252 = vadd.f32 %v1250, %v1251
      %v1253 = vsel %vm390, %v1243, 0.0
      %v1254 = vadd.f32 %v1252, %v1253
      %v1255 = vrot.slane %v1254, 4
      %v1256 = vadd.f32 %v1254, %v1255
      %v1257 = vrot.slane %v1256, 2
      %v1258 = vadd.f32 %v1256, %v1257
      %v1259 = vrot.slane %v1258, 1
      %v1260 = vadd.f32 %v1258, %v1259
      %v1261 = vsel %vm390, %v1244, 0.0
      %v1262 = vsel %vm390, %v1245, 0.0
      %v1263 = vadd.f32 %v1261, %v1262
      %v1264 = vsel %vm390, %v1246, 0.0
      %v1265 = vadd.f32 %v1263, %v1264
      %v1266 = vsel %vm390, %v1247, 0.0
      %v1267 = vadd.f32 %v1265, %v1266
      %v1268 = vrot.slane %v1267, 4
      %v1269 = vadd.f32 %v1267, %v1268
      %v1270 = vrot.slane %v1269, 2
      %v1271 = vadd.f32 %v1269, %v1270
      %v1272 = vrot.slane %v1271, 1
      %v1273 = vadd.f32 %v1271, %v1272
      %v1274 = vmul.f32 %v420, %v1081
      %v1275 = vadd.f32 %v1274, %v425
      %v1278 = vsel %vm429, %v1273, %v1260
      %v1280 = vadd.f32 %v1275, %v1278
      %v1281 = vadd.f32 %v1280, %v206
      %1282 = vrot.lane.b32.xlu0 %v1278, 96
      %v1283 = vpop.permute.xlu0 %1282
      %v1285 = vadd.f32 %v437, %v1283
      %v1286 = vadd.f32 %v1285, %v444
      %v1287 = vrcp.pop %v1286
      %v1288 = vmul.f32 %v1286, %v1287
      %v1289 = vsub.f32 2.0, %v1288
      %v1290 = vmul.f32 %v1287, %v1289
      %v1291 = vmul.f32 %v1281, %v1290
      %v1292 = vlaneseq
      %v1293 = vshrl.u32 %v1292, 7
      %v1294 = vsub.s32 0, %v1293
      %v1295 = vrot.slane %v1291, %v1294
      %1297 = vbcast.lane.b32.xlu0 %v1295, 256
      %v1298 = vpop.permute.xlu0 %1297
      %s1300 = sor.u32 256, 8
      %1301 = vbcast.lane.b32.xlu0 %v1295, %s1300
      %v1302 = vpop.permute.xlu0 %1301
      %s1304 = sor.u32 256, 16
      %1305 = vbcast.lane.b32.xlu0 %v1295, %s1304
      %v1306 = vpop.permute.xlu0 %1305
      %s1308 = sor.u32 256, 24
      %1309 = vbcast.lane.b32.xlu0 %v1295, %s1308
      %v1310 = vpop.permute.xlu0 %1309
      %v1311 = vlaneseq
      %v1312 = vshrl.u32 %v1311, 7
      %v1313 = vsub.s32 1, %v1312
      %v1314 = vrot.slane %v1291, %v1313
      %1316 = vbcast.lane.b32.xlu0 %v1314, 256
      %v1317 = vpop.permute.xlu0 %1316
      %s1319 = sor.u32 256, 8
      %1320 = vbcast.lane.b32.xlu0 %v1314, %s1319
      %v1321 = vpop.permute.xlu0 %1320
      %s1323 = sor.u32 256, 16
      %1324 = vbcast.lane.b32.xlu0 %v1314, %s1323
      %v1325 = vpop.permute.xlu0 %1324
      %s1327 = sor.u32 256, 24
      %1328 = vbcast.lane.b32.xlu0 %v1314, %s1327
      %v1329 = vpop.permute.xlu0 %1328
      %v1330 = vsub.f32 %v1298, %v186
      %v1331 = vsub.f32 %v1302, %v187
      %v1332 = vsub.f32 %v1306, %v188
      %v1333 = vsub.f32 %v1310, %v189
      %v1334 = vsub.f32 %v1317, %v186
      %v1335 = vsub.f32 %v1321, %v187
      %v1336 = vsub.f32 %v1325, %v188
      %v1337 = vsub.f32 %v1329, %v189
      %1346 = vrot.lane.b32.xlu0 %v1330, 32
      %v1347 = vpop.permute.xlu0 %1346
      %1348 = vrot.lane.b32.xlu0 %v1331, 32
      %v1349 = vpop.permute.xlu0 %1348
      %1350 = vrot.lane.b32.xlu0 %v1332, 32
      %v1351 = vpop.permute.xlu0 %1350
      %1352 = vrot.lane.b32.xlu0 %v1333, 32
      %v1353 = vpop.permute.xlu0 %1352
      %1354 = vrot.lane.b32.xlu0 %v1334, 32
      %v1355 = vpop.permute.xlu0 %1354
      %1356 = vrot.lane.b32.xlu0 %v1335, 32
      %v1357 = vpop.permute.xlu0 %1356
      %1358 = vrot.lane.b32.xlu0 %v1336, 32
      %v1359 = vpop.permute.xlu0 %1358
      %1360 = vrot.lane.b32.xlu0 %v1337, 32
      %v1361 = vpop.permute.xlu0 %1360
      %v1370 = vmul.f32 %v186, %v1347
      %v1371 = vmul.f32 %v187, %v1349
      %v1372 = vmul.f32 %v188, %v1351
      %v1373 = vmul.f32 %v189, %v1353
      %v1374 = vmul.f32 %v186, %v1355
      %v1375 = vmul.f32 %v187, %v1357
      %v1376 = vmul.f32 %v188, %v1359
      %v1377 = vmul.f32 %v189, %v1361
      %v1378 = vmul.f32 %v1370, 0.5
      %v1379 = vmul.f32 %v1371, 0.5
      %v1380 = vmul.f32 %v1372, 0.5
      %v1381 = vmul.f32 %v1373, 0.5
      %v1382 = vmul.f32 %v1374, 0.5
      %v1383 = vmul.f32 %v1375, 0.5
      %v1384 = vmul.f32 %v1376, 0.5
      %v1385 = vmul.f32 %v1377, 0.5
      %v1386 = vtanh.pop %v1378
      %v1387 = vtanh.pop %v1379
      %v1388 = vtanh.pop %v1380
      %v1389 = vtanh.pop %v1381
      %v1390 = vtanh.pop %v1382
      %v1391 = vtanh.pop %v1383
      %v1392 = vtanh.pop %v1384
      %v1393 = vtanh.pop %v1385
      %v1394 = vmul.f32 %v1386, 0.5
      %v1395 = vmul.f32 %v1387, 0.5
      %v1396 = vmul.f32 %v1388, 0.5
      %v1397 = vmul.f32 %v1389, 0.5
      %v1398 = vmul.f32 %v1390, 0.5
      %v1399 = vmul.f32 %v1391, 0.5
      %v1400 = vmul.f32 %v1392, 0.5
      %v1401 = vmul.f32 %v1393, 0.5
      %v1402 = vadd.f32 %v1394, 0.5
      %v1403 = vadd.f32 %v1395, 0.5
      %v1404 = vadd.f32 %v1396, 0.5
      %v1405 = vadd.f32 %v1397, 0.5
      %v1406 = vadd.f32 %v1398, 0.5
      %v1407 = vadd.f32 %v1399, 0.5
      %v1408 = vadd.f32 %v1400, 0.5
      %v1409 = vadd.f32 %v1401, 0.5
      %1418 = vrot.lane.b32.xlu0 %v1402, 96
      %v1419 = vpop.permute.xlu0 %1418
      %1420 = vrot.lane.b32.xlu0 %v1403, 96
      %v1421 = vpop.permute.xlu0 %1420
      %1422 = vrot.lane.b32.xlu0 %v1404, 96
      %v1423 = vpop.permute.xlu0 %1422
      %1424 = vrot.lane.b32.xlu0 %v1405, 96
      %v1425 = vpop.permute.xlu0 %1424
      %1426 = vrot.lane.b32.xlu0 %v1406, 96
      %v1427 = vpop.permute.xlu0 %1426
      %1428 = vrot.lane.b32.xlu0 %v1407, 96
      %v1429 = vpop.permute.xlu0 %1428
      %1430 = vrot.lane.b32.xlu0 %v1408, 96
      %v1431 = vpop.permute.xlu0 %1430
      %1432 = vrot.lane.b32.xlu0 %v1409, 96
      %v1433 = vpop.permute.xlu0 %1432
      %v1442 = vsel %vm357, %v1419, %v1402
      %v1443 = vsel %vm357, %v1421, %v1403
      %v1444 = vsel %vm357, %v1423, %v1404
      %v1445 = vsel %vm357, %v1425, %v1405
      %v1446 = vsel %vm357, %v1427, %v1406
      %v1447 = vsel %vm357, %v1429, %v1407
      %v1448 = vsel %vm357, %v1431, %v1408
      %v1449 = vsel %vm357, %v1433, %v1409
      %v1450 = vmul.f32 %v1442, %v371
      %v1451 = vmul.f32 %v1443, %v373
      %v1452 = vmul.f32 %v1444, %v375
      %v1453 = vmul.f32 %v1445, %v377
      %v1454 = vmul.f32 %v1446, %v371
      %v1455 = vmul.f32 %v1447, %v373
      %v1456 = vmul.f32 %v1448, %v375
      %v1457 = vmul.f32 %v1449, %v377
      %v1458 = vsel %vm390, %v1450, 0.0
      %v1459 = vsel %vm390, %v1451, 0.0
      %v1460 = vadd.f32 %v1458, %v1459
      %v1461 = vsel %vm390, %v1452, 0.0
      %v1462 = vadd.f32 %v1460, %v1461
      %v1463 = vsel %vm390, %v1453, 0.0
      %v1464 = vadd.f32 %v1462, %v1463
      %v1465 = vrot.slane %v1464, 4
      %v1466 = vadd.f32 %v1464, %v1465
      %v1467 = vrot.slane %v1466, 2
      %v1468 = vadd.f32 %v1466, %v1467
      %v1469 = vrot.slane %v1468, 1
      %v1470 = vadd.f32 %v1468, %v1469
      %v1471 = vsel %vm390, %v1454, 0.0
      %v1472 = vsel %vm390, %v1455, 0.0
      %v1473 = vadd.f32 %v1471, %v1472
      %v1474 = vsel %vm390, %v1456, 0.0
      %v1475 = vadd.f32 %v1473, %v1474
      %v1476 = vsel %vm390, %v1457, 0.0
      %v1477 = vadd.f32 %v1475, %v1476
      %v1478 = vrot.slane %v1477, 4
      %v1479 = vadd.f32 %v1477, %v1478
      %v1480 = vrot.slane %v1479, 2
      %v1481 = vadd.f32 %v1479, %v1480
      %v1482 = vrot.slane %v1481, 1
      %v1483 = vadd.f32 %v1481, %v1482
      %v1484 = vmul.f32 %v420, %v1291
      %v1485 = vadd.f32 %v1484, %v425
      %v1488 = vsel %vm429, %v1483, %v1470
      %v1490 = vadd.f32 %v1485, %v1488
      %v1491 = vadd.f32 %v1490, %v206
      %1492 = vrot.lane.b32.xlu0 %v1488, 96
      %v1493 = vpop.permute.xlu0 %1492
      %v1495 = vadd.f32 %v437, %v1493
      %v1496 = vadd.f32 %v1495, %v444
      %v1497 = vrcp.pop %v1496
      %v1498 = vmul.f32 %v1496, %v1497
      %v1499 = vsub.f32 2.0, %v1498
      %v1500 = vmul.f32 %v1497, %v1499
      %v1501 = vmul.f32 %v1491, %v1500
      %s1502 = scalar_lea.vmem [#allocation3], %s204
      %vm1503 = vcmask 254976
      %1504 = vst.msk [vmem:[%s1502] sm:$0x3] %vm1503, %v1501
    $region29: #{tpu_custom_call.1} parent=1 // loop_footer
      %s202 = sadd.s32 1, %s198
    $region30: #{tpu_custom_call.1} parent=1 // loop_footer_branch
      %197 = sbr.rel target = $region26
    $region31: #{tpu_custom_call.1} parent=1 // loop_exit
      _
    %v1505 = vld [vmem:[#allocation7 + $0x78] sm:$0x1]
    %v1506 = vld [vmem:[#allocation7 + $0x79] sm:$0x1]
    %v1507 = vld [vmem:[#allocation7 + $0x38] sm:$0xff]
    %v1508 = vld [vmem:[#allocation7 + $0x40] sm:$0xff]
    %v1509 = vld [vmem:[#allocation7 + $0x48] sm:$0xff]
    %v1510 = vld [vmem:[#allocation7 + $0x50] sm:$0xff]
    loop: start=0, step=1, limit=8
    $region32: #{tpu_custom_call.1} parent=1 // loop_pre_header
      _
    $region33: #{tpu_custom_call.1} parent=1 // loop_header
      %s1512 = sphi 0, %s1516
      %p1513 = scmp.ge.s32.totalorder %s1512, 8
    $region34: #{tpu_custom_call.1} parent=1 // loop_header_branch
      %1515 = sbr.rel (%p1513) target = $region38
    $region35: #{tpu_custom_call.1} parent=1 // loop_body
      %s1517 = smul.u32 %s1512, 2
      %s1518 = scalar_lea.vmem [#allocation3], %s1517
      %v1519 = vld [vmem:[%s1518] sm:$0x3]
      %v1520 = vlaneseq
      %v1521 = vshrl.u32 %v1520, 7
      %v1522 = vsub.s32 0, %v1521
      %v1523 = vrot.slane %v1505, %v1522
      %v1524 = vmul.f32 %v1519, %v1523
      %v1525 = vlaneseq
      %v1526 = vshrl.u32 %v1525, 7
      %v1527 = vsub.s32 0, %v1526
      %v1528 = vrot.slane %v1506, %v1527
      %v1529 = vadd.f32 %v1524, %v1528
      %v1530 = vlaneseq
      %v1531 = vshrl.u32 %v1530, 7
      %v1532 = vsub.s32 0, %v1531
      %v1533 = vrot.slane %v1529, %v1532
      %1535 = vbcast.lane.b32.xlu0 %v1533, 256
      %v1536 = vpop.permute.xlu0 %1535
      %s1538 = sor.u32 256, 8
      %1539 = vbcast.lane.b32.xlu0 %v1533, %s1538
      %v1540 = vpop.permute.xlu0 %1539
      %s1542 = sor.u32 256, 16
      %1543 = vbcast.lane.b32.xlu0 %v1533, %s1542
      %v1544 = vpop.permute.xlu0 %1543
      %s1546 = sor.u32 256, 24
      %1547 = vbcast.lane.b32.xlu0 %v1533, %s1546
      %v1548 = vpop.permute.xlu0 %1547
      %v1549 = vlaneseq
      %v1550 = vshrl.u32 %v1549, 7
      %v1551 = vsub.s32 1, %v1550
      %v1552 = vrot.slane %v1529, %v1551
      %1554 = vbcast.lane.b32.xlu0 %v1552, 256
      %v1555 = vpop.permute.xlu0 %1554
      %s1557 = sor.u32 256, 8
      %1558 = vbcast.lane.b32.xlu0 %v1552, %s1557
      %v1559 = vpop.permute.xlu0 %1558
      %s1561 = sor.u32 256, 16
      %1562 = vbcast.lane.b32.xlu0 %v1552, %s1561
      %v1563 = vpop.permute.xlu0 %1562
      %s1565 = sor.u32 256, 24
      %1566 = vbcast.lane.b32.xlu0 %v1552, %s1565
      %v1567 = vpop.permute.xlu0 %1566
      %v1568 = vsub.f32 %v1536, %v1507
      %v1569 = vsub.f32 %v1540, %v1508
      %v1570 = vsub.f32 %v1544, %v1509
      %v1571 = vsub.f32 %v1548, %v1510
      %v1572 = vsub.f32 %v1555, %v1507
      %v1573 = vsub.f32 %v1559, %v1508
      %v1574 = vsub.f32 %v1563, %v1509
      %v1575 = vsub.f32 %v1567, %v1510
      %1584 = vrot.lane.b32.xlu0 %v1568, 32
      %v1585 = vpop.permute.xlu0 %1584
      %1586 = vrot.lane.b32.xlu0 %v1569, 32
      %v1587 = vpop.permute.xlu0 %1586
      %1588 = vrot.lane.b32.xlu0 %v1570, 32
      %v1589 = vpop.permute.xlu0 %1588
      %1590 = vrot.lane.b32.xlu0 %v1571, 32
      %v1591 = vpop.permute.xlu0 %1590
      %1592 = vrot.lane.b32.xlu0 %v1572, 32
      %v1593 = vpop.permute.xlu0 %1592
      %1594 = vrot.lane.b32.xlu0 %v1573, 32
      %v1595 = vpop.permute.xlu0 %1594
      %1596 = vrot.lane.b32.xlu0 %v1574, 32
      %v1597 = vpop.permute.xlu0 %1596
      %1598 = vrot.lane.b32.xlu0 %v1575, 32
      %v1599 = vpop.permute.xlu0 %1598
      %v1608 = vmul.f32 %v1507, %v1585
      %v1609 = vmul.f32 %v1508, %v1587
      %v1610 = vmul.f32 %v1509, %v1589
      %v1611 = vmul.f32 %v1510, %v1591
      %v1612 = vmul.f32 %v1507, %v1593
      %v1613 = vmul.f32 %v1508, %v1595
      %v1614 = vmul.f32 %v1509, %v1597
      %v1615 = vmul.f32 %v1510, %v1599
      %v1616 = vmul.f32 %v1608, 0.5
      %v1617 = vmul.f32 %v1609, 0.5
      %v1618 = vmul.f32 %v1610, 0.5
      %v1619 = vmul.f32 %v1611, 0.5
      %v1620 = vmul.f32 %v1612, 0.5
      %v1621 = vmul.f32 %v1613, 0.5
      %v1622 = vmul.f32 %v1614, 0.5
      %v1623 = vmul.f32 %v1615, 0.5
      %v1624 = vtanh.pop %v1616
      %v1625 = vtanh.pop %v1617
      %v1626 = vtanh.pop %v1618
      %v1627 = vtanh.pop %v1619
      %v1628 = vtanh.pop %v1620
      %v1629 = vtanh.pop %v1621
      %v1630 = vtanh.pop %v1622
      %v1631 = vtanh.pop %v1623
      %v1632 = vmul.f32 %v1624, 0.5
      %v1633 = vmul.f32 %v1625, 0.5
      %v1634 = vmul.f32 %v1626, 0.5
      %v1635 = vmul.f32 %v1627, 0.5
      %v1636 = vmul.f32 %v1628, 0.5
      %v1637 = vmul.f32 %v1629, 0.5
      %v1638 = vmul.f32 %v1630, 0.5
      %v1639 = vmul.f32 %v1631, 0.5
      %v1640 = vadd.f32 %v1632, 0.5
      %v1641 = vadd.f32 %v1633, 0.5
      %v1642 = vadd.f32 %v1634, 0.5
      %v1643 = vadd.f32 %v1635, 0.5
      %v1644 = vadd.f32 %v1636, 0.5
      %v1645 = vadd.f32 %v1637, 0.5
      %v1646 = vadd.f32 %v1638, 0.5
      %v1647 = vadd.f32 %v1639, 0.5
      %1656 = vrot.lane.b32.xlu0 %v1640, 96
      %v1657 = vpop.permute.xlu0 %1656
      %1658 = vrot.lane.b32.xlu0 %v1641, 96
      %v1659 = vpop.permute.xlu0 %1658
      %1660 = vrot.lane.b32.xlu0 %v1642, 96
      %v1661 = vpop.permute.xlu0 %1660
      %1662 = vrot.lane.b32.xlu0 %v1643, 96
      %v1663 = vpop.permute.xlu0 %1662
      %1664 = vrot.lane.b32.xlu0 %v1644, 96
      %v1665 = vpop.permute.xlu0 %1664
      %1666 = vrot.lane.b32.xlu0 %v1645, 96
      %v1667 = vpop.permute.xlu0 %1666
      %1668 = vrot.lane.b32.xlu0 %v1646, 96
      %v1669 = vpop.permute.xlu0 %1668
      %1670 = vrot.lane.b32.xlu0 %v1647, 96
      %v1671 = vpop.permute.xlu0 %1670
      %vm1680 = vcmask 261120
      %v1681 = vsel %vm1680, %v1657, %v1640
      %v1682 = vsel %vm1680, %v1659, %v1641
      %v1683 = vsel %vm1680, %v1661, %v1642
      %v1684 = vsel %vm1680, %v1663, %v1643
      %v1685 = vsel %vm1680, %v1665, %v1644
      %v1686 = vsel %vm1680, %v1667, %v1645
      %v1687 = vsel %vm1680, %v1669, %v1646
      %v1688 = vsel %vm1680, %v1671, %v1647
      %1693 = vrot.lane.b32.xlu0 %v1507, 64
      %v1694 = vpop.permute.xlu0 %1693
      %1695 = vrot.lane.b32.xlu0 %v1508, 64
      %v1696 = vpop.permute.xlu0 %1695
      %1697 = vrot.lane.b32.xlu0 %v1509, 64
      %v1698 = vpop.permute.xlu0 %1697
      %1699 = vrot.lane.b32.xlu0 %v1510, 64
      %v1700 = vpop.permute.xlu0 %1699
      %v1705 = vmul.f32 %v1681, %v1694
      %v1706 = vmul.f32 %v1682, %v1696
      %v1707 = vmul.f32 %v1683, %v1698
      %v1708 = vmul.f32 %v1684, %v1700
      %v1709 = vmul.f32 %v1685, %v1694
      %v1710 = vmul.f32 %v1686, %v1696
      %v1711 = vmul.f32 %v1687, %v1698
      %v1712 = vmul.f32 %v1688, %v1700
      %vm1713 = vcmask 523264
      %v1714 = vsel %vm1713, %v1705, 0.0
      %v1715 = vsel %vm1713, %v1706, 0.0
      %v1716 = vadd.f32 %v1714, %v1715
      %v1717 = vsel %vm1713, %v1707, 0.0
      %v1718 = vadd.f32 %v1716, %v1717
      %v1719 = vsel %vm1713, %v1708, 0.0
      %v1720 = vadd.f32 %v1718, %v1719
      %v1721 = vrot.slane %v1720, 4
      %v1722 = vadd.f32 %v1720, %v1721
      %v1723 = vrot.slane %v1722, 2
      %v1724 = vadd.f32 %v1722, %v1723
      %v1725 = vrot.slane %v1724, 1
      %v1726 = vadd.f32 %v1724, %v1725
      %v1727 = vsel %vm1713, %v1709, 0.0
      %v1728 = vsel %vm1713, %v1710, 0.0
      %v1729 = vadd.f32 %v1727, %v1728
      %v1730 = vsel %vm1713, %v1711, 0.0
      %v1731 = vadd.f32 %v1729, %v1730
      %v1732 = vsel %vm1713, %v1712, 0.0
      %v1733 = vadd.f32 %v1731, %v1732
      %v1734 = vrot.slane %v1733, 4
      %v1735 = vadd.f32 %v1733, %v1734
      %v1736 = vrot.slane %v1735, 2
      %v1737 = vadd.f32 %v1735, %v1736
      %v1738 = vrot.slane %v1737, 1
      %v1739 = vadd.f32 %v1737, %v1738
      %vm1742 = vcmask 1041409
      %v1743 = vsel %vm1742, %v1739, %v1726
      %s1745 = scalar_lea.vmem [#allocation2], %s1517
      %vm1746 = vcmask 517120
      %1747 = vst.msk [vmem:[%s1745] sm:$0x3] %vm1746, %v1743
    $region36: #{tpu_custom_call.1} parent=1 // loop_footer
      %s1516 = sadd.s32 1, %s1512
    $region37: #{tpu_custom_call.1} parent=1 // loop_footer_branch
      %1511 = sbr.rel target = $region33
    $region38: #{tpu_custom_call.1} parent=1 // loop_exit
      _
    %v1748 = vld [vmem:[#allocation7 + $0x58] sm:$0xff]
    %v1749 = vld [vmem:[#allocation7 + $0x60] sm:$0xff]
    %v1750 = vld [vmem:[#allocation7 + $0x68] sm:$0xff]
    %v1751 = vld [vmem:[#allocation7 + $0x70] sm:$0xff]
    %v1752 = vld [vmem:[#allocation7 + $0x7a] sm:$0x1]
    %v1753 = vld [vmem:[#allocation7 + $0x7b] sm:$0x1]
    %v1754 = vld [vmem:[#allocation7 + $0x7c] sm:$0x1]
    %v1755 = vmul.f32 %v1754, 6.0
    %v1756 = vmul.f32 %v1752, %v1753
    %v1757 = vadd.f32 %v1755, %v1752
    %v1758 = vadd.f32 %v1757, 1e-08
    loop: start=0, step=1, limit=8
    $region39: #{tpu_custom_call.1} parent=1 // loop_pre_header
      _
    $region40: #{tpu_custom_call.1} parent=1 // loop_header
      %s1760 = sphi 0, %s1764
      %p1761 = scmp.ge.s32.totalorder %s1760, 8
      %v1765 = vphi 0.0, %v3063
    $region41: #{tpu_custom_call.1} parent=1 // loop_header_branch
      %1763 = sbr.rel (%p1761) target = $region45
    $region42: #{tpu_custom_call.1} parent=1 // loop_body
      %s1766 = smul.u32 %s1760, 2
      %s1767 = scalar_lea.vmem [#allocation2], %s1766
      %v1768 = vld [vmem:[%s1767] sm:$0x3]
      %v1769 = vlaneseq
      %v1770 = vshrl.u32 %v1769, 7
      %v1771 = vsub.s32 0, %v1770
      %v1772 = vrot.slane %v1765, %v1771
      %1774 = vbcast.lane.b32.xlu0 %v1772, 256
      %v1775 = vpop.permute.xlu0 %1774
      %s1777 = sor.u32 256, 8
      %1778 = vbcast.lane.b32.xlu0 %v1772, %s1777
      %v1779 = vpop.permute.xlu0 %1778
      %s1781 = sor.u32 256, 16
      %1782 = vbcast.lane.b32.xlu0 %v1772, %s1781
      %v1783 = vpop.permute.xlu0 %1782
      %s1785 = sor.u32 256, 24
      %1786 = vbcast.lane.b32.xlu0 %v1772, %s1785
      %v1787 = vpop.permute.xlu0 %1786
      %v1788 = vlaneseq
      %v1789 = vshrl.u32 %v1788, 7
      %v1790 = vsub.s32 1, %v1789
      %v1791 = vrot.slane %v1765, %v1790
      %1793 = vbcast.lane.b32.xlu0 %v1791, 256
      %v1794 = vpop.permute.xlu0 %1793
      %s1796 = sor.u32 256, 8
      %1797 = vbcast.lane.b32.xlu0 %v1791, %s1796
      %v1798 = vpop.permute.xlu0 %1797
      %s1800 = sor.u32 256, 16
      %1801 = vbcast.lane.b32.xlu0 %v1791, %s1800
      %v1802 = vpop.permute.xlu0 %1801
      %s1804 = sor.u32 256, 24
      %1805 = vbcast.lane.b32.xlu0 %v1791, %s1804
      %v1806 = vpop.permute.xlu0 %1805
      %v1807 = vsub.f32 %v1775, %v1748
      %v1808 = vsub.f32 %v1779, %v1749
      %v1809 = vsub.f32 %v1783, %v1750
      %v1810 = vsub.f32 %v1787, %v1751
      %v1811 = vsub.f32 %v1794, %v1748
      %v1812 = vsub.f32 %v1798, %v1749
      %v1813 = vsub.f32 %v1802, %v1750
      %v1814 = vsub.f32 %v1806, %v1751
      %1823 = vrot.lane.b32.xlu0 %v1807, 32
      %v1824 = vpop.permute.xlu0 %1823
      %1825 = vrot.lane.b32.xlu0 %v1808, 32
      %v1826 = vpop.permute.xlu0 %1825
      %1827 = vrot.lane.b32.xlu0 %v1809, 32
      %v1828 = vpop.permute.xlu0 %1827
      %1829 = vrot.lane.b32.xlu0 %v1810, 32
      %v1830 = vpop.permute.xlu0 %1829
      %1831 = vrot.lane.b32.xlu0 %v1811, 32
      %v1832 = vpop.permute.xlu0 %1831
      %1833 = vrot.lane.b32.xlu0 %v1812, 32
      %v1834 = vpop.permute.xlu0 %1833
      %1835 = vrot.lane.b32.xlu0 %v1813, 32
      %v1836 = vpop.permute.xlu0 %1835
      %1837 = vrot.lane.b32.xlu0 %v1814, 32
      %v1838 = vpop.permute.xlu0 %1837
      %v1847 = vmul.f32 %v1748, %v1824
      %v1848 = vmul.f32 %v1749, %v1826
      %v1849 = vmul.f32 %v1750, %v1828
      %v1850 = vmul.f32 %v1751, %v1830
      %v1851 = vmul.f32 %v1748, %v1832
      %v1852 = vmul.f32 %v1749, %v1834
      %v1853 = vmul.f32 %v1750, %v1836
      %v1854 = vmul.f32 %v1751, %v1838
      %v1855 = vmul.f32 %v1847, 0.5
      %v1856 = vmul.f32 %v1848, 0.5
      %v1857 = vmul.f32 %v1849, 0.5
      %v1858 = vmul.f32 %v1850, 0.5
      %v1859 = vmul.f32 %v1851, 0.5
      %v1860 = vmul.f32 %v1852, 0.5
      %v1861 = vmul.f32 %v1853, 0.5
      %v1862 = vmul.f32 %v1854, 0.5
      %v1863 = vtanh.pop %v1855
      %v1864 = vtanh.pop %v1856
      %v1865 = vtanh.pop %v1857
      %v1866 = vtanh.pop %v1858
      %v1867 = vtanh.pop %v1859
      %v1868 = vtanh.pop %v1860
      %v1869 = vtanh.pop %v1861
      %v1870 = vtanh.pop %v1862
      %v1871 = vmul.f32 %v1863, 0.5
      %v1872 = vmul.f32 %v1864, 0.5
      %v1873 = vmul.f32 %v1865, 0.5
      %v1874 = vmul.f32 %v1866, 0.5
      %v1875 = vmul.f32 %v1867, 0.5
      %v1876 = vmul.f32 %v1868, 0.5
      %v1877 = vmul.f32 %v1869, 0.5
      %v1878 = vmul.f32 %v1870, 0.5
      %v1879 = vadd.f32 %v1871, 0.5
      %v1880 = vadd.f32 %v1872, 0.5
      %v1881 = vadd.f32 %v1873, 0.5
      %v1882 = vadd.f32 %v1874, 0.5
      %v1883 = vadd.f32 %v1875, 0.5
      %v1884 = vadd.f32 %v1876, 0.5
      %v1885 = vadd.f32 %v1877, 0.5
      %v1886 = vadd.f32 %v1878, 0.5
      %1895 = vrot.lane.b32.xlu0 %v1879, 96
      %v1896 = vpop.permute.xlu0 %1895
      %1897 = vrot.lane.b32.xlu0 %v1880, 96
      %v1898 = vpop.permute.xlu0 %1897
      %1899 = vrot.lane.b32.xlu0 %v1881, 96
      %v1900 = vpop.permute.xlu0 %1899
      %1901 = vrot.lane.b32.xlu0 %v1882, 96
      %v1902 = vpop.permute.xlu0 %1901
      %1903 = vrot.lane.b32.xlu0 %v1883, 96
      %v1904 = vpop.permute.xlu0 %1903
      %1905 = vrot.lane.b32.xlu0 %v1884, 96
      %v1906 = vpop.permute.xlu0 %1905
      %1907 = vrot.lane.b32.xlu0 %v1885, 96
      %v1908 = vpop.permute.xlu0 %1907
      %1909 = vrot.lane.b32.xlu0 %v1886, 96
      %v1910 = vpop.permute.xlu0 %1909
      %vm1919 = vcmask 261120
      %v1920 = vsel %vm1919, %v1896, %v1879
      %v1921 = vsel %vm1919, %v1898, %v1880
      %v1922 = vsel %vm1919, %v1900, %v1881
      %v1923 = vsel %vm1919, %v1902, %v1882
      %v1924 = vsel %vm1919, %v1904, %v1883
      %v1925 = vsel %vm1919, %v1906, %v1884
      %v1926 = vsel %vm1919, %v1908, %v1885
      %v1927 = vsel %vm1919, %v1910, %v1886
      %1932 = vrot.lane.b32.xlu0 %v1748, 64
      %v1933 = vpop.permute.xlu0 %1932
      %1934 = vrot.lane.b32.xlu0 %v1749, 64
      %v1935 = vpop.permute.xlu0 %1934
      %1936 = vrot.lane.b32.xlu0 %v1750, 64
      %v1937 = vpop.permute.xlu0 %1936
      %1938 = vrot.lane.b32.xlu0 %v1751, 64
      %v1939 = vpop.permute.xlu0 %1938
      %v1944 = vmul.f32 %v1920, %v1933
      %v1945 = vmul.f32 %v1921, %v1935
      %v1946 = vmul.f32 %v1922, %v1937
      %v1947 = vmul.f32 %v1923, %v1939
      %v1948 = vmul.f32 %v1924, %v1933
      %v1949 = vmul.f32 %v1925, %v1935
      %v1950 = vmul.f32 %v1926, %v1937
      %v1951 = vmul.f32 %v1927, %v1939
      %vm1952 = vcmask 523264
      %v1953 = vsel %vm1952, %v1944, 0.0
      %v1954 = vsel %vm1952, %v1945, 0.0
      %v1955 = vadd.f32 %v1953, %v1954
      %v1956 = vsel %vm1952, %v1946, 0.0
      %v1957 = vadd.f32 %v1955, %v1956
      %v1958 = vsel %vm1952, %v1947, 0.0
      %v1959 = vadd.f32 %v1957, %v1958
      %v1960 = vrot.slane %v1959, 4
      %v1961 = vadd.f32 %v1959, %v1960
      %v1962 = vrot.slane %v1961, 2
      %v1963 = vadd.f32 %v1961, %v1962
      %v1964 = vrot.slane %v1963, 1
      %v1965 = vadd.f32 %v1963, %v1964
      %v1966 = vsel %vm1952, %v1948, 0.0
      %v1967 = vsel %vm1952, %v1949, 0.0
      %v1968 = vadd.f32 %v1966, %v1967
      %v1969 = vsel %vm1952, %v1950, 0.0
      %v1970 = vadd.f32 %v1968, %v1969
      %v1971 = vsel %vm1952, %v1951, 0.0
      %v1972 = vadd.f32 %v1970, %v1971
      %v1973 = vrot.slane %v1972, 4
      %v1974 = vadd.f32 %v1972, %v1973
      %v1975 = vrot.slane %v1974, 2
      %v1976 = vadd.f32 %v1974, %v1975
      %v1977 = vrot.slane %v1976, 1
      %v1978 = vadd.f32 %v1976, %v1977
      %v1979 = vlaneseq
      %v1980 = vshrl.u32 %v1979, 7
      %v1981 = vsub.s32 0, %v1980
      %v1982 = vrot.slane %v1755, %v1981
      %v1983 = vmul.f32 %v1982, %v1765
      %v1984 = vlaneseq
      %v1985 = vshrl.u32 %v1984, 7
      %v1986 = vsub.s32 0, %v1985
      %v1987 = vrot.slane %v1756, %v1986
      %v1988 = vadd.f32 %v1983, %v1987
      %vm1991 = vcmask 1041409
      %v1992 = vsel %vm1991, %v1978, %v1965
      %v1994 = vadd.f32 %v1988, %v1992
      %v1995 = vadd.f32 %v1994, %v1768
      %v1996 = vlaneseq
      %v1997 = vshrl.u32 %v1996, 7
      %v1998 = vsub.s32 0, %v1997
      %v1999 = vrot.slane %v1758, %v1998
      %2000 = vrot.lane.b32.xlu0 %v1992, 96
      %v2001 = vpop.permute.xlu0 %2000
      %v2003 = vadd.f32 %v1999, %v2001
      %2005 = vrot.lane.b32.xlu0 %v1768, 96
      %v2006 = vpop.permute.xlu0 %2005
      %v2008 = vadd.f32 %v2003, %v2006
      %v2009 = vrcp.pop %v2008
      %v2010 = vmul.f32 %v2008, %v2009
      %v2011 = vsub.f32 2.0, %v2010
      %v2012 = vmul.f32 %v2009, %v2011
      %v2013 = vmul.f32 %v1995, %v2012
      %v2014 = vlaneseq
      %v2015 = vshrl.u32 %v2014, 7
      %v2016 = vsub.s32 0, %v2015
      %v2017 = vrot.slane %v2013, %v2016
      %2019 = vbcast.lane.b32.xlu0 %v2017, 256
      %v2020 = vpop.permute.xlu0 %2019
      %s2022 = sor.u32 256, 8
      %2023 = vbcast.lane.b32.xlu0 %v2017, %s2022
      %v2024 = vpop.permute.xlu0 %2023
      %s2026 = sor.u32 256, 16
      %2027 = vbcast.lane.b32.xlu0 %v2017, %s2026
      %v2028 = vpop.permute.xlu0 %2027
      %s2030 = sor.u32 256, 24
      %2031 = vbcast.lane.b32.xlu0 %v2017, %s2030
      %v2032 = vpop.permute.xlu0 %2031
      %v2033 = vlaneseq
      %v2034 = vshrl.u32 %v2033, 7
      %v2035 = vsub.s32 1, %v2034
      %v2036 = vrot.slane %v2013, %v2035
      %2038 = vbcast.lane.b32.xlu0 %v2036, 256
      %v2039 = vpop.permute.xlu0 %2038
      %s2041 = sor.u32 256, 8
      %2042 = vbcast.lane.b32.xlu0 %v2036, %s2041
      %v2043 = vpop.permute.xlu0 %2042
      %s2045 = sor.u32 256, 16
      %2046 = vbcast.lane.b32.xlu0 %v2036, %s2045
      %v2047 = vpop.permute.xlu0 %2046
      %s2049 = sor.u32 256, 24
      %2050 = vbcast.lane.b32.xlu0 %v2036, %s2049
      %v2051 = vpop.permute.xlu0 %2050
      %v2052 = vsub.f32 %v2020, %v1748
      %v2053 = vsub.f32 %v2024, %v1749
      %v2054 = vsub.f32 %v2028, %v1750
      %v2055 = vsub.f32 %v2032, %v1751
      %v2056 = vsub.f32 %v2039, %v1748
      %v2057 = vsub.f32 %v2043, %v1749
      %v2058 = vsub.f32 %v2047, %v1750
      %v2059 = vsub.f32 %v2051, %v1751
      %2068 = vrot.lane.b32.xlu0 %v2052, 32
      %v2069 = vpop.permute.xlu0 %2068
      %2070 = vrot.lane.b32.xlu0 %v2053, 32
      %v2071 = vpop.permute.xlu0 %2070
      %2072 = vrot.lane.b32.xlu0 %v2054, 32
      %v2073 = vpop.permute.xlu0 %2072
      %2074 = vrot.lane.b32.xlu0 %v2055, 32
      %v2075 = vpop.permute.xlu0 %2074
      %2076 = vrot.lane.b32.xlu0 %v2056, 32
      %v2077 = vpop.permute.xlu0 %2076
      %2078 = vrot.lane.b32.xlu0 %v2057, 32
      %v2079 = vpop.permute.xlu0 %2078
      %2080 = vrot.lane.b32.xlu0 %v2058, 32
      %v2081 = vpop.permute.xlu0 %2080
      %2082 = vrot.lane.b32.xlu0 %v2059, 32
      %v2083 = vpop.permute.xlu0 %2082
      %v2092 = vmul.f32 %v1748, %v2069
      %v2093 = vmul.f32 %v1749, %v2071
      %v2094 = vmul.f32 %v1750, %v2073
      %v2095 = vmul.f32 %v1751, %v2075
      %v2096 = vmul.f32 %v1748, %v2077
      %v2097 = vmul.f32 %v1749, %v2079
      %v2098 = vmul.f32 %v1750, %v2081
      %v2099 = vmul.f32 %v1751, %v2083
      %v2100 = vmul.f32 %v2092, 0.5
      %v2101 = vmul.f32 %v2093, 0.5
      %v2102 = vmul.f32 %v2094, 0.5
      %v2103 = vmul.f32 %v2095, 0.5
      %v2104 = vmul.f32 %v2096, 0.5
      %v2105 = vmul.f32 %v2097, 0.5
      %v2106 = vmul.f32 %v2098, 0.5
      %v2107 = vmul.f32 %v2099, 0.5
      %v2108 = vtanh.pop %v2100
      %v2109 = vtanh.pop %v2101
      %v2110 = vtanh.pop %v2102
      %v2111 = vtanh.pop %v2103
      %v2112 = vtanh.pop %v2104
      %v2113 = vtanh.pop %v2105
      %v2114 = vtanh.pop %v2106
      %v2115 = vtanh.pop %v2107
      %v2116 = vmul.f32 %v2108, 0.5
      %v2117 = vmul.f32 %v2109, 0.5
      %v2118 = vmul.f32 %v2110, 0.5
      %v2119 = vmul.f32 %v2111, 0.5
      %v2120 = vmul.f32 %v2112, 0.5
      %v2121 = vmul.f32 %v2113, 0.5
      %v2122 = vmul.f32 %v2114, 0.5
      %v2123 = vmul.f32 %v2115, 0.5
      %v2124 = vadd.f32 %v2116, 0.5
      %v2125 = vadd.f32 %v2117, 0.5
      %v2126 = vadd.f32 %v2118, 0.5
      %v2127 = vadd.f32 %v2119, 0.5
      %v2128 = vadd.f32 %v2120, 0.5
      %v2129 = vadd.f32 %v2121, 0.5
      %v2130 = vadd.f32 %v2122, 0.5
      %v2131 = vadd.f32 %v2123, 0.5
      %2140 = vrot.lane.b32.xlu0 %v2124, 96
      %v2141 = vpop.permute.xlu0 %2140
      %2142 = vrot.lane.b32.xlu0 %v2125, 96
      %v2143 = vpop.permute.xlu0 %2142
      %2144 = vrot.lane.b32.xlu0 %v2126, 96
      %v2145 = vpop.permute.xlu0 %2144
      %2146 = vrot.lane.b32.xlu0 %v2127, 96
      %v2147 = vpop.permute.xlu0 %2146
      %2148 = vrot.lane.b32.xlu0 %v2128, 96
      %v2149 = vpop.permute.xlu0 %2148
      %2150 = vrot.lane.b32.xlu0 %v2129, 96
      %v2151 = vpop.permute.xlu0 %2150
      %2152 = vrot.lane.b32.xlu0 %v2130, 96
      %v2153 = vpop.permute.xlu0 %2152
      %2154 = vrot.lane.b32.xlu0 %v2131, 96
      %v2155 = vpop.permute.xlu0 %2154
      %v2164 = vsel %vm1919, %v2141, %v2124
      %v2165 = vsel %vm1919, %v2143, %v2125
      %v2166 = vsel %vm1919, %v2145, %v2126
      %v2167 = vsel %vm1919, %v2147, %v2127
      %v2168 = vsel %vm1919, %v2149, %v2128
      %v2169 = vsel %vm1919, %v2151, %v2129
      %v2170 = vsel %vm1919, %v2153, %v2130
      %v2171 = vsel %vm1919, %v2155, %v2131
      %v2172 = vmul.f32 %v2164, %v1933
      %v2173 = vmul.f32 %v2165, %v1935
      %v2174 = vmul.f32 %v2166, %v1937
      %v2175 = vmul.f32 %v2167, %v1939
      %v2176 = vmul.f32 %v2168, %v1933
      %v2177 = vmul.f32 %v2169, %v1935
      %v2178 = vmul.f32 %v2170, %v1937
      %v2179 = vmul.f32 %v2171, %v1939
      %v2180 = vsel %vm1952, %v2172, 0.0
      %v2181 = vsel %vm1952, %v2173, 0.0
      %v2182 = vadd.f32 %v2180, %v2181
      %v2183 = vsel %vm1952, %v2174, 0.0
      %v2184 = vadd.f32 %v2182, %v2183
      %v2185 = vsel %vm1952, %v2175, 0.0
      %v2186 = vadd.f32 %v2184, %v2185
      %v2187 = vrot.slane %v2186, 4
      %v2188 = vadd.f32 %v2186, %v2187
      %v2189 = vrot.slane %v2188, 2
      %v2190 = vadd.f32 %v2188, %v2189
      %v2191 = vrot.slane %v2190, 1
      %v2192 = vadd.f32 %v2190, %v2191
      %v2193 = vsel %vm1952, %v2176, 0.0
      %v2194 = vsel %vm1952, %v2177, 0.0
      %v2195 = vadd.f32 %v2193, %v2194
      %v2196 = vsel %vm1952, %v2178, 0.0
      %v2197 = vadd.f32 %v2195, %v2196
      %v2198 = vsel %vm1952, %v2179, 0.0
      %v2199 = vadd.f32 %v2197, %v2198
      %v2200 = vrot.slane %v2199, 4
      %v2201 = vadd.f32 %v2199, %v2200
      %v2202 = vrot.slane %v2201, 2
      %v2203 = vadd.f32 %v2201, %v2202
      %v2204 = vrot.slane %v2203, 1
      %v2205 = vadd.f32 %v2203, %v2204
      %v2206 = vmul.f32 %v1982, %v2013
      %v2207 = vadd.f32 %v2206, %v1987
      %v2210 = vsel %vm1991, %v2205, %v2192
      %v2212 = vadd.f32 %v2207, %v2210
      %v2213 = vadd.f32 %v2212, %v1768
      %2214 = vrot.lane.b32.xlu0 %v2210, 96
      %v2215 = vpop.permute.xlu0 %2214
      %v2217 = vadd.f32 %v1999, %v2215
      %v2218 = vadd.f32 %v2217, %v2006
      %v2219 = vrcp.pop %v2218
      %v2220 = vmul.f32 %v2218, %v2219
      %v2221 = vsub.f32 2.0, %v2220
      %v2222 = vmul.f32 %v2219, %v2221
      %v2223 = vmul.f32 %v2213, %v2222
      %v2224 = vlaneseq
      %v2225 = vshrl.u32 %v2224, 7
      %v2226 = vsub.s32 0, %v2225
      %v2227 = vrot.slane %v2223, %v2226
      %2229 = vbcast.lane.b32.xlu0 %v2227, 256
      %v2230 = vpop.permute.xlu0 %2229
      %s2232 = sor.u32 256, 8
      %2233 = vbcast.lane.b32.xlu0 %v2227, %s2232
      %v2234 = vpop.permute.xlu0 %2233
      %s2236 = sor.u32 256, 16
      %2237 = vbcast.lane.b32.xlu0 %v2227, %s2236
      %v2238 = vpop.permute.xlu0 %2237
      %s2240 = sor.u32 256, 24
      %2241 = vbcast.lane.b32.xlu0 %v2227, %s2240
      %v2242 = vpop.permute.xlu0 %2241
      %v2243 = vlaneseq
      %v2244 = vshrl.u32 %v2243, 7
      %v2245 = vsub.s32 1, %v2244
      %v2246 = vrot.slane %v2223, %v2245
      %2248 = vbcast.lane.b32.xlu0 %v2246, 256
      %v2249 = vpop.permute.xlu0 %2248
      %s2251 = sor.u32 256, 8
      %2252 = vbcast.lane.b32.xlu0 %v2246, %s2251
      %v2253 = vpop.permute.xlu0 %2252
      %s2255 = sor.u32 256, 16
      %2256 = vbcast.lane.b32.xlu0 %v2246, %s2255
      %v2257 = vpop.permute.xlu0 %2256
      %s2259 = sor.u32 256, 24
      %2260 = vbcast.lane.b32.xlu0 %v2246, %s2259
      %v2261 = vpop.permute.xlu0 %2260
      %v2262 = vsub.f32 %v2230, %v1748
      %v2263 = vsub.f32 %v2234, %v1749
      %v2264 = vsub.f32 %v2238, %v1750
      %v2265 = vsub.f32 %v2242, %v1751
      %v2266 = vsub.f32 %v2249, %v1748
      %v2267 = vsub.f32 %v2253, %v1749
      %v2268 = vsub.f32 %v2257, %v1750
      %v2269 = vsub.f32 %v2261, %v1751
      %2278 = vrot.lane.b32.xlu0 %v2262, 32
      %v2279 = vpop.permute.xlu0 %2278
      %2280 = vrot.lane.b32.xlu0 %v2263, 32
      %v2281 = vpop.permute.xlu0 %2280
      %2282 = vrot.lane.b32.xlu0 %v2264, 32
      %v2283 = vpop.permute.xlu0 %2282
      %2284 = vrot.lane.b32.xlu0 %v2265, 32
      %v2285 = vpop.permute.xlu0 %2284
      %2286 = vrot.lane.b32.xlu0 %v2266, 32
      %v2287 = vpop.permute.xlu0 %2286
      %2288 = vrot.lane.b32.xlu0 %v2267, 32
      %v2289 = vpop.permute.xlu0 %2288
      %2290 = vrot.lane.b32.xlu0 %v2268, 32
      %v2291 = vpop.permute.xlu0 %2290
      %2292 = vrot.lane.b32.xlu0 %v2269, 32
      %v2293 = vpop.permute.xlu0 %2292
      %v2302 = vmul.f32 %v1748, %v2279
      %v2303 = vmul.f32 %v1749, %v2281
      %v2304 = vmul.f32 %v1750, %v2283
      %v2305 = vmul.f32 %v1751, %v2285
      %v2306 = vmul.f32 %v1748, %v2287
      %v2307 = vmul.f32 %v1749, %v2289
      %v2308 = vmul.f32 %v1750, %v2291
      %v2309 = vmul.f32 %v1751, %v2293
      %v2310 = vmul.f32 %v2302, 0.5
      %v2311 = vmul.f32 %v2303, 0.5
      %v2312 = vmul.f32 %v2304, 0.5
      %v2313 = vmul.f32 %v2305, 0.5
      %v2314 = vmul.f32 %v2306, 0.5
      %v2315 = vmul.f32 %v2307, 0.5
      %v2316 = vmul.f32 %v2308, 0.5
      %v2317 = vmul.f32 %v2309, 0.5
      %v2318 = vtanh.pop %v2310
      %v2319 = vtanh.pop %v2311
      %v2320 = vtanh.pop %v2312
      %v2321 = vtanh.pop %v2313
      %v2322 = vtanh.pop %v2314
      %v2323 = vtanh.pop %v2315
      %v2324 = vtanh.pop %v2316
      %v2325 = vtanh.pop %v2317
      %v2326 = vmul.f32 %v2318, 0.5
      %v2327 = vmul.f32 %v2319, 0.5
      %v2328 = vmul.f32 %v2320, 0.5
      %v2329 = vmul.f32 %v2321, 0.5
      %v2330 = vmul.f32 %v2322, 0.5
      %v2331 = vmul.f32 %v2323, 0.5
      %v2332 = vmul.f32 %v2324, 0.5
      %v2333 = vmul.f32 %v2325, 0.5
      %v2334 = vadd.f32 %v2326, 0.5
      %v2335 = vadd.f32 %v2327, 0.5
      %v2336 = vadd.f32 %v2328, 0.5
      %v2337 = vadd.f32 %v2329, 0.5
      %v2338 = vadd.f32 %v2330, 0.5
      %v2339 = vadd.f32 %v2331, 0.5
      %v2340 = vadd.f32 %v2332, 0.5
      %v2341 = vadd.f32 %v2333, 0.5
      %2350 = vrot.lane.b32.xlu0 %v2334, 96
      %v2351 = vpop.permute.xlu0 %2350
      %2352 = vrot.lane.b32.xlu0 %v2335, 96
      %v2353 = vpop.permute.xlu0 %2352
      %2354 = vrot.lane.b32.xlu0 %v2336, 96
      %v2355 = vpop.permute.xlu0 %2354
      %2356 = vrot.lane.b32.xlu0 %v2337, 96
      %v2357 = vpop.permute.xlu0 %2356
      %2358 = vrot.lane.b32.xlu0 %v2338, 96
      %v2359 = vpop.permute.xlu0 %2358
      %2360 = vrot.lane.b32.xlu0 %v2339, 96
      %v2361 = vpop.permute.xlu0 %2360
      %2362 = vrot.lane.b32.xlu0 %v2340, 96
      %v2363 = vpop.permute.xlu0 %2362
      %2364 = vrot.lane.b32.xlu0 %v2341, 96
      %v2365 = vpop.permute.xlu0 %2364
      %v2374 = vsel %vm1919, %v2351, %v2334
      %v2375 = vsel %vm1919, %v2353, %v2335
      %v2376 = vsel %vm1919, %v2355, %v2336
      %v2377 = vsel %vm1919, %v2357, %v2337
      %v2378 = vsel %vm1919, %v2359, %v2338
      %v2379 = vsel %vm1919, %v2361, %v2339
      %v2380 = vsel %vm1919, %v2363, %v2340
      %v2381 = vsel %vm1919, %v2365, %v2341
      %v2382 = vmul.f32 %v2374, %v1933
      %v2383 = vmul.f32 %v2375, %v1935
      %v2384 = vmul.f32 %v2376, %v1937
      %v2385 = vmul.f32 %v2377, %v1939
      %v2386 = vmul.f32 %v2378, %v1933
      %v2387 = vmul.f32 %v2379, %v1935
      %v2388 = vmul.f32 %v2380, %v1937
      %v2389 = vmul.f32 %v2381, %v1939
      %v2390 = vsel %vm1952, %v2382, 0.0
      %v2391 = vsel %vm1952, %v2383, 0.0
      %v2392 = vadd.f32 %v2390, %v2391
      %v2393 = vsel %vm1952, %v2384, 0.0
      %v2394 = vadd.f32 %v2392, %v2393
      %v2395 = vsel %vm1952, %v2385, 0.0
      %v2396 = vadd.f32 %v2394, %v2395
      %v2397 = vrot.slane %v2396, 4
      %v2398 = vadd.f32 %v2396, %v2397
      %v2399 = vrot.slane %v2398, 2
      %v2400 = vadd.f32 %v2398, %v2399
      %v2401 = vrot.slane %v2400, 1
      %v2402 = vadd.f32 %v2400, %v2401
      %v2403 = vsel %vm1952, %v2386, 0.0
      %v2404 = vsel %vm1952, %v2387, 0.0
      %v2405 = vadd.f32 %v2403, %v2404
      %v2406 = vsel %vm1952, %v2388, 0.0
      %v2407 = vadd.f32 %v2405, %v2406
      %v2408 = vsel %vm1952, %v2389, 0.0
      %v2409 = vadd.f32 %v2407, %v2408
      %v2410 = vrot.slane %v2409, 4
      %v2411 = vadd.f32 %v2409, %v2410
      %v2412 = vrot.slane %v2411, 2
      %v2413 = vadd.f32 %v2411, %v2412
      %v2414 = vrot.slane %v2413, 1
      %v2415 = vadd.f32 %v2413, %v2414
      %v2416 = vmul.f32 %v1982, %v2223
      %v2417 = vadd.f32 %v2416, %v1987
      %v2420 = vsel %vm1991, %v2415, %v2402
      %v2422 = vadd.f32 %v2417, %v2420
      %v2423 = vadd.f32 %v2422, %v1768
      %2424 = vrot.lane.b32.xlu0 %v2420, 96
      %v2425 = vpop.permute.xlu0 %2424
      %v2427 = vadd.f32 %v1999, %v2425
      %v2428 = vadd.f32 %v2427, %v2006
      %v2429 = vrcp.pop %v2428
      %v2430 = vmul.f32 %v2428, %v2429
      %v2431 = vsub.f32 2.0, %v2430
      %v2432 = vmul.f32 %v2429, %v2431
      %v2433 = vmul.f32 %v2423, %v2432
      %v2434 = vlaneseq
      %v2435 = vshrl.u32 %v2434, 7
      %v2436 = vsub.s32 0, %v2435
      %v2437 = vrot.slane %v2433, %v2436
      %2439 = vbcast.lane.b32.xlu0 %v2437, 256
      %v2440 = vpop.permute.xlu0 %2439
      %s2442 = sor.u32 256, 8
      %2443 = vbcast.lane.b32.xlu0 %v2437, %s2442
      %v2444 = vpop.permute.xlu0 %2443
      %s2446 = sor.u32 256, 16
      %2447 = vbcast.lane.b32.xlu0 %v2437, %s2446
      %v2448 = vpop.permute.xlu0 %2447
      %s2450 = sor.u32 256, 24
      %2451 = vbcast.lane.b32.xlu0 %v2437, %s2450
      %v2452 = vpop.permute.xlu0 %2451
      %v2453 = vlaneseq
      %v2454 = vshrl.u32 %v2453, 7
      %v2455 = vsub.s32 1, %v2454
      %v2456 = vrot.slane %v2433, %v2455
      %2458 = vbcast.lane.b32.xlu0 %v2456, 256
      %v2459 = vpop.permute.xlu0 %2458
      %s2461 = sor.u32 256, 8
      %2462 = vbcast.lane.b32.xlu0 %v2456, %s2461
      %v2463 = vpop.permute.xlu0 %2462
      %s2465 = sor.u32 256, 16
      %2466 = vbcast.lane.b32.xlu0 %v2456, %s2465
      %v2467 = vpop.permute.xlu0 %2466
      %s2469 = sor.u32 256, 24
      %2470 = vbcast.lane.b32.xlu0 %v2456, %s2469
      %v2471 = vpop.permute.xlu0 %2470
      %v2472 = vsub.f32 %v2440, %v1748
      %v2473 = vsub.f32 %v2444, %v1749
      %v2474 = vsub.f32 %v2448, %v1750
      %v2475 = vsub.f32 %v2452, %v1751
      %v2476 = vsub.f32 %v2459, %v1748
      %v2477 = vsub.f32 %v2463, %v1749
      %v2478 = vsub.f32 %v2467, %v1750
      %v2479 = vsub.f32 %v2471, %v1751
      %2488 = vrot.lane.b32.xlu0 %v2472, 32
      %v2489 = vpop.permute.xlu0 %2488
      %2490 = vrot.lane.b32.xlu0 %v2473, 32
      %v2491 = vpop.permute.xlu0 %2490
      %2492 = vrot.lane.b32.xlu0 %v2474, 32
      %v2493 = vpop.permute.xlu0 %2492
      %2494 = vrot.lane.b32.xlu0 %v2475, 32
      %v2495 = vpop.permute.xlu0 %2494
      %2496 = vrot.lane.b32.xlu0 %v2476, 32
      %v2497 = vpop.permute.xlu0 %2496
      %2498 = vrot.lane.b32.xlu0 %v2477, 32
      %v2499 = vpop.permute.xlu0 %2498
      %2500 = vrot.lane.b32.xlu0 %v2478, 32
      %v2501 = vpop.permute.xlu0 %2500
      %2502 = vrot.lane.b32.xlu0 %v2479, 32
      %v2503 = vpop.permute.xlu0 %2502
      %v2512 = vmul.f32 %v1748, %v2489
      %v2513 = vmul.f32 %v1749, %v2491
      %v2514 = vmul.f32 %v1750, %v2493
      %v2515 = vmul.f32 %v1751, %v2495
      %v2516 = vmul.f32 %v1748, %v2497
      %v2517 = vmul.f32 %v1749, %v2499
      %v2518 = vmul.f32 %v1750, %v2501
      %v2519 = vmul.f32 %v1751, %v2503
      %v2520 = vmul.f32 %v2512, 0.5
      %v2521 = vmul.f32 %v2513, 0.5
      %v2522 = vmul.f32 %v2514, 0.5
      %v2523 = vmul.f32 %v2515, 0.5
      %v2524 = vmul.f32 %v2516, 0.5
      %v2525 = vmul.f32 %v2517, 0.5
      %v2526 = vmul.f32 %v2518, 0.5
      %v2527 = vmul.f32 %v2519, 0.5
      %v2528 = vtanh.pop %v2520
      %v2529 = vtanh.pop %v2521
      %v2530 = vtanh.pop %v2522
      %v2531 = vtanh.pop %v2523
      %v2532 = vtanh.pop %v2524
      %v2533 = vtanh.pop %v2525
      %v2534 = vtanh.pop %v2526
      %v2535 = vtanh.pop %v2527
      %v2536 = vmul.f32 %v2528, 0.5
      %v2537 = vmul.f32 %v2529, 0.5
      %v2538 = vmul.f32 %v2530, 0.5
      %v2539 = vmul.f32 %v2531, 0.5
      %v2540 = vmul.f32 %v2532, 0.5
      %v2541 = vmul.f32 %v2533, 0.5
      %v2542 = vmul.f32 %v2534, 0.5
      %v2543 = vmul.f32 %v2535, 0.5
      %v2544 = vadd.f32 %v2536, 0.5
      %v2545 = vadd.f32 %v2537, 0.5
      %v2546 = vadd.f32 %v2538, 0.5
      %v2547 = vadd.f32 %v2539, 0.5
      %v2548 = vadd.f32 %v2540, 0.5
      %v2549 = vadd.f32 %v2541, 0.5
      %v2550 = vadd.f32 %v2542, 0.5
      %v2551 = vadd.f32 %v2543, 0.5
      %2560 = vrot.lane.b32.xlu0 %v2544, 96
      %v2561 = vpop.permute.xlu0 %2560
      %2562 = vrot.lane.b32.xlu0 %v2545, 96
      %v2563 = vpop.permute.xlu0 %2562
      %2564 = vrot.lane.b32.xlu0 %v2546, 96
      %v2565 = vpop.permute.xlu0 %2564
      %2566 = vrot.lane.b32.xlu0 %v2547, 96
      %v2567 = vpop.permute.xlu0 %2566
      %2568 = vrot.lane.b32.xlu0 %v2548, 96
      %v2569 = vpop.permute.xlu0 %2568
      %2570 = vrot.lane.b32.xlu0 %v2549, 96
      %v2571 = vpop.permute.xlu0 %2570
      %2572 = vrot.lane.b32.xlu0 %v2550, 96
      %v2573 = vpop.permute.xlu0 %2572
      %2574 = vrot.lane.b32.xlu0 %v2551, 96
      %v2575 = vpop.permute.xlu0 %2574
      %v2584 = vsel %vm1919, %v2561, %v2544
      %v2585 = vsel %vm1919, %v2563, %v2545
      %v2586 = vsel %vm1919, %v2565, %v2546
      %v2587 = vsel %vm1919, %v2567, %v2547
      %v2588 = vsel %vm1919, %v2569, %v2548
      %v2589 = vsel %vm1919, %v2571, %v2549
      %v2590 = vsel %vm1919, %v2573, %v2550
      %v2591 = vsel %vm1919, %v2575, %v2551
      %v2592 = vmul.f32 %v2584, %v1933
      %v2593 = vmul.f32 %v2585, %v1935
      %v2594 = vmul.f32 %v2586, %v1937
      %v2595 = vmul.f32 %v2587, %v1939
      %v2596 = vmul.f32 %v2588, %v1933
      %v2597 = vmul.f32 %v2589, %v1935
      %v2598 = vmul.f32 %v2590, %v1937
      %v2599 = vmul.f32 %v2591, %v1939
      %v2600 = vsel %vm1952, %v2592, 0.0
      %v2601 = vsel %vm1952, %v2593, 0.0
      %v2602 = vadd.f32 %v2600, %v2601
      %v2603 = vsel %vm1952, %v2594, 0.0
      %v2604 = vadd.f32 %v2602, %v2603
      %v2605 = vsel %vm1952, %v2595, 0.0
      %v2606 = vadd.f32 %v2604, %v2605
      %v2607 = vrot.slane %v2606, 4
      %v2608 = vadd.f32 %v2606, %v2607
      %v2609 = vrot.slane %v2608, 2
      %v2610 = vadd.f32 %v2608, %v2609
      %v2611 = vrot.slane %v2610, 1
      %v2612 = vadd.f32 %v2610, %v2611
      %v2613 = vsel %vm1952, %v2596, 0.0
      %v2614 = vsel %vm1952, %v2597, 0.0
      %v2615 = vadd.f32 %v2613, %v2614
      %v2616 = vsel %vm1952, %v2598, 0.0
      %v2617 = vadd.f32 %v2615, %v2616
      %v2618 = vsel %vm1952, %v2599, 0.0
      %v2619 = vadd.f32 %v2617, %v2618
      %v2620 = vrot.slane %v2619, 4
      %v2621 = vadd.f32 %v2619, %v2620
      %v2622 = vrot.slane %v2621, 2
      %v2623 = vadd.f32 %v2621, %v2622
      %v2624 = vrot.slane %v2623, 1
      %v2625 = vadd.f32 %v2623, %v2624
      %v2626 = vmul.f32 %v1982, %v2433
      %v2627 = vadd.f32 %v2626, %v1987
      %v2630 = vsel %vm1991, %v2625, %v2612
      %v2632 = vadd.f32 %v2627, %v2630
      %v2633 = vadd.f32 %v2632, %v1768
      %2634 = vrot.lane.b32.xlu0 %v2630, 96
      %v2635 = vpop.permute.xlu0 %2634
      %v2637 = vadd.f32 %v1999, %v2635
      %v2638 = vadd.f32 %v2637, %v2006
      %v2639 = vrcp.pop %v2638
      %v2640 = vmul.f32 %v2638, %v2639
      %v2641 = vsub.f32 2.0, %v2640
      %v2642 = vmul.f32 %v2639, %v2641
      %v2643 = vmul.f32 %v2633, %v2642
      %v2644 = vlaneseq
      %v2645 = vshrl.u32 %v2644, 7
      %v2646 = vsub.s32 0, %v2645
      %v2647 = vrot.slane %v2643, %v2646
      %2649 = vbcast.lane.b32.xlu0 %v2647, 256
      %v2650 = vpop.permute.xlu0 %2649
      %s2652 = sor.u32 256, 8
      %2653 = vbcast.lane.b32.xlu0 %v2647, %s2652
      %v2654 = vpop.permute.xlu0 %2653
      %s2656 = sor.u32 256, 16
      %2657 = vbcast.lane.b32.xlu0 %v2647, %s2656
      %v2658 = vpop.permute.xlu0 %2657
      %s2660 = sor.u32 256, 24
      %2661 = vbcast.lane.b32.xlu0 %v2647, %s2660
      %v2662 = vpop.permute.xlu0 %2661
      %v2663 = vlaneseq
      %v2664 = vshrl.u32 %v2663, 7
      %v2665 = vsub.s32 1, %v2664
      %v2666 = vrot.slane %v2643, %v2665
      %2668 = vbcast.lane.b32.xlu0 %v2666, 256
      %v2669 = vpop.permute.xlu0 %2668
      %s2671 = sor.u32 256, 8
      %2672 = vbcast.lane.b32.xlu0 %v2666, %s2671
      %v2673 = vpop.permute.xlu0 %2672
      %s2675 = sor.u32 256, 16
      %2676 = vbcast.lane.b32.xlu0 %v2666, %s2675
      %v2677 = vpop.permute.xlu0 %2676
      %s2679 = sor.u32 256, 24
      %2680 = vbcast.lane.b32.xlu0 %v2666, %s2679
      %v2681 = vpop.permute.xlu0 %2680
      %v2682 = vsub.f32 %v2650, %v1748
      %v2683 = vsub.f32 %v2654, %v1749
      %v2684 = vsub.f32 %v2658, %v1750
      %v2685 = vsub.f32 %v2662, %v1751
      %v2686 = vsub.f32 %v2669, %v1748
      %v2687 = vsub.f32 %v2673, %v1749
      %v2688 = vsub.f32 %v2677, %v1750
      %v2689 = vsub.f32 %v2681, %v1751
      %2698 = vrot.lane.b32.xlu0 %v2682, 32
      %v2699 = vpop.permute.xlu0 %2698
      %2700 = vrot.lane.b32.xlu0 %v2683, 32
      %v2701 = vpop.permute.xlu0 %2700
      %2702 = vrot.lane.b32.xlu0 %v2684, 32
      %v2703 = vpop.permute.xlu0 %2702
      %2704 = vrot.lane.b32.xlu0 %v2685, 32
      %v2705 = vpop.permute.xlu0 %2704
      %2706 = vrot.lane.b32.xlu0 %v2686, 32
      %v2707 = vpop.permute.xlu0 %2706
      %2708 = vrot.lane.b32.xlu0 %v2687, 32
      %v2709 = vpop.permute.xlu0 %2708
      %2710 = vrot.lane.b32.xlu0 %v2688, 32
      %v2711 = vpop.permute.xlu0 %2710
      %2712 = vrot.lane.b32.xlu0 %v2689, 32
      %v2713 = vpop.permute.xlu0 %2712
      %v2722 = vmul.f32 %v1748, %v2699
      %v2723 = vmul.f32 %v1749, %v2701
      %v2724 = vmul.f32 %v1750, %v2703
      %v2725 = vmul.f32 %v1751, %v2705
      %v2726 = vmul.f32 %v1748, %v2707
      %v2727 = vmul.f32 %v1749, %v2709
      %v2728 = vmul.f32 %v1750, %v2711
      %v2729 = vmul.f32 %v1751, %v2713
      %v2730 = vmul.f32 %v2722, 0.5
      %v2731 = vmul.f32 %v2723, 0.5
      %v2732 = vmul.f32 %v2724, 0.5
      %v2733 = vmul.f32 %v2725, 0.5
      %v2734 = vmul.f32 %v2726, 0.5
      %v2735 = vmul.f32 %v2727, 0.5
      %v2736 = vmul.f32 %v2728, 0.5
      %v2737 = vmul.f32 %v2729, 0.5
      %v2738 = vtanh.pop %v2730
      %v2739 = vtanh.pop %v2731
      %v2740 = vtanh.pop %v2732
      %v2741 = vtanh.pop %v2733
      %v2742 = vtanh.pop %v2734
      %v2743 = vtanh.pop %v2735
      %v2744 = vtanh.pop %v2736
      %v2745 = vtanh.pop %v2737
      %v2746 = vmul.f32 %v2738, 0.5
      %v2747 = vmul.f32 %v2739, 0.5
      %v2748 = vmul.f32 %v2740, 0.5
      %v2749 = vmul.f32 %v2741, 0.5
      %v2750 = vmul.f32 %v2742, 0.5
      %v2751 = vmul.f32 %v2743, 0.5
      %v2752 = vmul.f32 %v2744, 0.5
      %v2753 = vmul.f32 %v2745, 0.5
      %v2754 = vadd.f32 %v2746, 0.5
      %v2755 = vadd.f32 %v2747, 0.5
      %v2756 = vadd.f32 %v2748, 0.5
      %v2757 = vadd.f32 %v2749, 0.5
      %v2758 = vadd.f32 %v2750, 0.5
      %v2759 = vadd.f32 %v2751, 0.5
      %v2760 = vadd.f32 %v2752, 0.5
      %v2761 = vadd.f32 %v2753, 0.5
      %2770 = vrot.lane.b32.xlu0 %v2754, 96
      %v2771 = vpop.permute.xlu0 %2770
      %2772 = vrot.lane.b32.xlu0 %v2755, 96
      %v2773 = vpop.permute.xlu0 %2772
      %2774 = vrot.lane.b32.xlu0 %v2756, 96
      %v2775 = vpop.permute.xlu0 %2774
      %2776 = vrot.lane.b32.xlu0 %v2757, 96
      %v2777 = vpop.permute.xlu0 %2776
      %2778 = vrot.lane.b32.xlu0 %v2758, 96
      %v2779 = vpop.permute.xlu0 %2778
      %2780 = vrot.lane.b32.xlu0 %v2759, 96
      %v2781 = vpop.permute.xlu0 %2780
      %2782 = vrot.lane.b32.xlu0 %v2760, 96
      %v2783 = vpop.permute.xlu0 %2782
      %2784 = vrot.lane.b32.xlu0 %v2761, 96
      %v2785 = vpop.permute.xlu0 %2784
      %v2794 = vsel %vm1919, %v2771, %v2754
      %v2795 = vsel %vm1919, %v2773, %v2755
      %v2796 = vsel %vm1919, %v2775, %v2756
      %v2797 = vsel %vm1919, %v2777, %v2757
      %v2798 = vsel %vm1919, %v2779, %v2758
      %v2799 = vsel %vm1919, %v2781, %v2759
      %v2800 = vsel %vm1919, %v2783, %v2760
      %v2801 = vsel %vm1919, %v2785, %v2761
      %v2802 = vmul.f32 %v2794, %v1933
      %v2803 = vmul.f32 %v2795, %v1935
      %v2804 = vmul.f32 %v2796, %v1937
      %v2805 = vmul.f32 %v2797, %v1939
      %v2806 = vmul.f32 %v2798, %v1933
      %v2807 = vmul.f32 %v2799, %v1935
      %v2808 = vmul.f32 %v2800, %v1937
      %v2809 = vmul.f32 %v2801, %v1939
      %v2810 = vsel %vm1952, %v2802, 0.0
      %v2811 = vsel %vm1952, %v2803, 0.0
      %v2812 = vadd.f32 %v2810, %v2811
      %v2813 = vsel %vm1952, %v2804, 0.0
      %v2814 = vadd.f32 %v2812, %v2813
      %v2815 = vsel %vm1952, %v2805, 0.0
      %v2816 = vadd.f32 %v2814, %v2815
      %v2817 = vrot.slane %v2816, 4
      %v2818 = vadd.f32 %v2816, %v2817
      %v2819 = vrot.slane %v2818, 2
      %v2820 = vadd.f32 %v2818, %v2819
      %v2821 = vrot.slane %v2820, 1
      %v2822 = vadd.f32 %v2820, %v2821
      %v2823 = vsel %vm1952, %v2806, 0.0
      %v2824 = vsel %vm1952, %v2807, 0.0
      %v2825 = vadd.f32 %v2823, %v2824
      %v2826 = vsel %vm1952, %v2808, 0.0
      %v2827 = vadd.f32 %v2825, %v2826
      %v2828 = vsel %vm1952, %v2809, 0.0
      %v2829 = vadd.f32 %v2827, %v2828
      %v2830 = vrot.slane %v2829, 4
      %v2831 = vadd.f32 %v2829, %v2830
      %v2832 = vrot.slane %v2831, 2
      %v2833 = vadd.f32 %v2831, %v2832
      %v2834 = vrot.slane %v2833, 1
      %v2835 = vadd.f32 %v2833, %v2834
      %v2836 = vmul.f32 %v1982, %v2643
      %v2837 = vadd.f32 %v2836, %v1987
      %v2840 = vsel %vm1991, %v2835, %v2822
      %v2842 = vadd.f32 %v2837, %v2840
      %v2843 = vadd.f32 %v2842, %v1768
      %2844 = vrot.lane.b32.xlu0 %v2840, 96
      %v2845 = vpop.permute.xlu0 %2844
      %v2847 = vadd.f32 %v1999, %v2845
      %v2848 = vadd.f32 %v2847, %v2006
      %v2849 = vrcp.pop %v2848
      %v2850 = vmul.f32 %v2848, %v2849
      %v2851 = vsub.f32 2.0, %v2850
      %v2852 = vmul.f32 %v2849, %v2851
      %v2853 = vmul.f32 %v2843, %v2852
      %v2854 = vlaneseq
      %v2855 = vshrl.u32 %v2854, 7
      %v2856 = vsub.s32 0, %v2855
      %v2857 = vrot.slane %v2853, %v2856
      %2859 = vbcast.lane.b32.xlu0 %v2857, 256
      %v2860 = vpop.permute.xlu0 %2859
      %s2862 = sor.u32 256, 8
      %2863 = vbcast.lane.b32.xlu0 %v2857, %s2862
      %v2864 = vpop.permute.xlu0 %2863
      %s2866 = sor.u32 256, 16
      %2867 = vbcast.lane.b32.xlu0 %v2857, %s2866
      %v2868 = vpop.permute.xlu0 %2867
      %s2870 = sor.u32 256, 24
      %2871 = vbcast.lane.b32.xlu0 %v2857, %s2870
      %v2872 = vpop.permute.xlu0 %2871
      %v2873 = vlaneseq
      %v2874 = vshrl.u32 %v2873, 7
      %v2875 = vsub.s32 1, %v2874
      %v2876 = vrot.slane %v2853, %v2875
      %2878 = vbcast.lane.b32.xlu0 %v2876, 256
      %v2879 = vpop.permute.xlu0 %2878
      %s2881 = sor.u32 256, 8
      %2882 = vbcast.lane.b32.xlu0 %v2876, %s2881
      %v2883 = vpop.permute.xlu0 %2882
      %s2885 = sor.u32 256, 16
      %2886 = vbcast.lane.b32.xlu0 %v2876, %s2885
      %v2887 = vpop.permute.xlu0 %2886
      %s2889 = sor.u32 256, 24
      %2890 = vbcast.lane.b32.xlu0 %v2876, %s2889
      %v2891 = vpop.permute.xlu0 %2890
      %v2892 = vsub.f32 %v2860, %v1748
      %v2893 = vsub.f32 %v2864, %v1749
      %v2894 = vsub.f32 %v2868, %v1750
      %v2895 = vsub.f32 %v2872, %v1751
      %v2896 = vsub.f32 %v2879, %v1748
      %v2897 = vsub.f32 %v2883, %v1749
      %v2898 = vsub.f32 %v2887, %v1750
      %v2899 = vsub.f32 %v2891, %v1751
      %2908 = vrot.lane.b32.xlu0 %v2892, 32
      %v2909 = vpop.permute.xlu0 %2908
      %2910 = vrot.lane.b32.xlu0 %v2893, 32
      %v2911 = vpop.permute.xlu0 %2910
      %2912 = vrot.lane.b32.xlu0 %v2894, 32
      %v2913 = vpop.permute.xlu0 %2912
      %2914 = vrot.lane.b32.xlu0 %v2895, 32
      %v2915 = vpop.permute.xlu0 %2914
      %2916 = vrot.lane.b32.xlu0 %v2896, 32
      %v2917 = vpop.permute.xlu0 %2916
      %2918 = vrot.lane.b32.xlu0 %v2897, 32
      %v2919 = vpop.permute.xlu0 %2918
      %2920 = vrot.lane.b32.xlu0 %v2898, 32
      %v2921 = vpop.permute.xlu0 %2920
      %2922 = vrot.lane.b32.xlu0 %v2899, 32
      %v2923 = vpop.permute.xlu0 %2922
      %v2932 = vmul.f32 %v1748, %v2909
      %v2933 = vmul.f32 %v1749, %v2911
      %v2934 = vmul.f32 %v1750, %v2913
      %v2935 = vmul.f32 %v1751, %v2915
      %v2936 = vmul.f32 %v1748, %v2917
      %v2937 = vmul.f32 %v1749, %v2919
      %v2938 = vmul.f32 %v1750, %v2921
      %v2939 = vmul.f32 %v1751, %v2923
      %v2940 = vmul.f32 %v2932, 0.5
      %v2941 = vmul.f32 %v2933, 0.5
      %v2942 = vmul.f32 %v2934, 0.5
      %v2943 = vmul.f32 %v2935, 0.5
      %v2944 = vmul.f32 %v2936, 0.5
      %v2945 = vmul.f32 %v2937, 0.5
      %v2946 = vmul.f32 %v2938, 0.5
      %v2947 = vmul.f32 %v2939, 0.5
      %v2948 = vtanh.pop %v2940
      %v2949 = vtanh.pop %v2941
      %v2950 = vtanh.pop %v2942
      %v2951 = vtanh.pop %v2943
      %v2952 = vtanh.pop %v2944
      %v2953 = vtanh.pop %v2945
      %v2954 = vtanh.pop %v2946
      %v2955 = vtanh.pop %v2947
      %v2956 = vmul.f32 %v2948, 0.5
      %v2957 = vmul.f32 %v2949, 0.5
      %v2958 = vmul.f32 %v2950, 0.5
      %v2959 = vmul.f32 %v2951, 0.5
      %v2960 = vmul.f32 %v2952, 0.5
      %v2961 = vmul.f32 %v2953, 0.5
      %v2962 = vmul.f32 %v2954, 0.5
      %v2963 = vmul.f32 %v2955, 0.5
      %v2964 = vadd.f32 %v2956, 0.5
      %v2965 = vadd.f32 %v2957, 0.5
      %v2966 = vadd.f32 %v2958, 0.5
      %v2967 = vadd.f32 %v2959, 0.5
      %v2968 = vadd.f32 %v2960, 0.5
      %v2969 = vadd.f32 %v2961, 0.5
      %v2970 = vadd.f32 %v2962, 0.5
      %v2971 = vadd.f32 %v2963, 0.5
      %2980 = vrot.lane.b32.xlu0 %v2964, 96
      %v2981 = vpop.permute.xlu0 %2980
      %2982 = vrot.lane.b32.xlu0 %v2965, 96
      %v2983 = vpop.permute.xlu0 %2982
      %2984 = vrot.lane.b32.xlu0 %v2966, 96
      %v2985 = vpop.permute.xlu0 %2984
      %2986 = vrot.lane.b32.xlu0 %v2967, 96
      %v2987 = vpop.permute.xlu0 %2986
      %2988 = vrot.lane.b32.xlu0 %v2968, 96
      %v2989 = vpop.permute.xlu0 %2988
      %2990 = vrot.lane.b32.xlu0 %v2969, 96
      %v2991 = vpop.permute.xlu0 %2990
      %2992 = vrot.lane.b32.xlu0 %v2970, 96
      %v2993 = vpop.permute.xlu0 %2992
      %2994 = vrot.lane.b32.xlu0 %v2971, 96
      %v2995 = vpop.permute.xlu0 %2994
      %v3004 = vsel %vm1919, %v2981, %v2964
      %v3005 = vsel %vm1919, %v2983, %v2965
      %v3006 = vsel %vm1919, %v2985, %v2966
      %v3007 = vsel %vm1919, %v2987, %v2967
      %v3008 = vsel %vm1919, %v2989, %v2968
      %v3009 = vsel %vm1919, %v2991, %v2969
      %v3010 = vsel %vm1919, %v2993, %v2970
      %v3011 = vsel %vm1919, %v2995, %v2971
      %v3012 = vmul.f32 %v3004, %v1933
      %v3013 = vmul.f32 %v3005, %v1935
      %v3014 = vmul.f32 %v3006, %v1937
      %v3015 = vmul.f32 %v3007, %v1939
      %v3016 = vmul.f32 %v3008, %v1933
      %v3017 = vmul.f32 %v3009, %v1935
      %v3018 = vmul.f32 %v3010, %v1937
      %v3019 = vmul.f32 %v3011, %v1939
      %v3020 = vsel %vm1952, %v3012, 0.0
      %v3021 = vsel %vm1952, %v3013, 0.0
      %v3022 = vadd.f32 %v3020, %v3021
      %v3023 = vsel %vm1952, %v3014, 0.0
      %v3024 = vadd.f32 %v3022, %v3023
      %v3025 = vsel %vm1952, %v3015, 0.0
      %v3026 = vadd.f32 %v3024, %v3025
      %v3027 = vrot.slane %v3026, 4
      %v3028 = vadd.f32 %v3026, %v3027
      %v3029 = vrot.slane %v3028, 2
      %v3030 = vadd.f32 %v3028, %v3029
      %v3031 = vrot.slane %v3030, 1
      %v3032 = vadd.f32 %v3030, %v3031
      %v3033 = vsel %vm1952, %v3016, 0.0
      %v3034 = vsel %vm1952, %v3017, 0.0
      %v3035 = vadd.f32 %v3033, %v3034
      %v3036 = vsel %vm1952, %v3018, 0.0
      %v3037 = vadd.f32 %v3035, %v3036
      %v3038 = vsel %vm1952, %v3019, 0.0
      %v3039 = vadd.f32 %v3037, %v3038
      %v3040 = vrot.slane %v3039, 4
      %v3041 = vadd.f32 %v3039, %v3040
      %v3042 = vrot.slane %v3041, 2
      %v3043 = vadd.f32 %v3041, %v3042
      %v3044 = vrot.slane %v3043, 1
      %v3045 = vadd.f32 %v3043, %v3044
      %v3046 = vmul.f32 %v1982, %v2853
      %v3047 = vadd.f32 %v3046, %v1987
      %v3050 = vsel %vm1991, %v3045, %v3032
      %v3052 = vadd.f32 %v3047, %v3050
      %v3053 = vadd.f32 %v3052, %v1768
      %3054 = vrot.lane.b32.xlu0 %v3050, 96
      %v3055 = vpop.permute.xlu0 %3054
      %v3057 = vadd.f32 %v1999, %v3055
      %v3058 = vadd.f32 %v3057, %v2006
      %v3059 = vrcp.pop %v3058
      %v3060 = vmul.f32 %v3058, %v3059
      %v3061 = vsub.f32 2.0, %v3060
      %v3062 = vmul.f32 %v3059, %v3061
      %v3063 = vmul.f32 %v3053, %v3062
    $region43: #{tpu_custom_call.1} parent=1 // loop_footer
      %s1764 = sadd.s32 1, %s1760
    $region44: #{tpu_custom_call.1} parent=1 // loop_footer_branch
      %1759 = sbr.rel target = $region40
    $region45: #{tpu_custom_call.1} parent=1 // loop_exit
      _
    %v3064 = vld [vmem:[#allocation7 + $0x80] sm:$0xff]
    %v3065 = vld [vmem:[#allocation7 + $0x88] sm:$0xff]
    %v3066 = vld [vmem:[#allocation7 + $0x90] sm:$0xff]
    %v3067 = vld [vmem:[#allocation7 + $0x98] sm:$0xff]
    %v3068 = vld [vmem:[#allocation7 + $0xa0] sm:$0x1]
    %v3069 = vlaneseq
    %v3070 = vshrl.u32 %v3069, 7
    %v3071 = vsub.s32 0, %v3070
    %v3072 = vrot.slane %v1765, %v3071
    %3074 = vbcast.lane.b32.xlu0 %v3072, 256
    %v3075 = vpop.permute.xlu0 %3074
    %s3077 = sor.u32 256, 8
    %3078 = vbcast.lane.b32.xlu0 %v3072, %s3077
    %v3079 = vpop.permute.xlu0 %3078
    %s3081 = sor.u32 256, 16
    %3082 = vbcast.lane.b32.xlu0 %v3072, %s3081
    %v3083 = vpop.permute.xlu0 %3082
    %s3085 = sor.u32 256, 24
    %3086 = vbcast.lane.b32.xlu0 %v3072, %s3085
    %v3087 = vpop.permute.xlu0 %3086
    %v3088 = vlaneseq
    %v3089 = vshrl.u32 %v3088, 7
    %v3090 = vsub.s32 1, %v3089
    %v3091 = vrot.slane %v1765, %v3090
    %3093 = vbcast.lane.b32.xlu0 %v3091, 256
    %v3094 = vpop.permute.xlu0 %3093
    %s3096 = sor.u32 256, 8
    %3097 = vbcast.lane.b32.xlu0 %v3091, %s3096
    %v3098 = vpop.permute.xlu0 %3097
    %s3100 = sor.u32 256, 16
    %3101 = vbcast.lane.b32.xlu0 %v3091, %s3100
    %v3102 = vpop.permute.xlu0 %3101
    %s3104 = sor.u32 256, 24
    %3105 = vbcast.lane.b32.xlu0 %v3091, %s3104
    %v3106 = vpop.permute.xlu0 %3105
    %v3107 = vmul.f32 %v3075, %v3064
    %v3108 = vmul.f32 %v3079, %v3065
    %v3109 = vmul.f32 %v3083, %v3066
    %v3110 = vmul.f32 %v3087, %v3067
    %v3111 = vmul.f32 %v3094, %v3064
    %v3112 = vmul.f32 %v3098, %v3065
    %v3113 = vmul.f32 %v3102, %v3066
    %v3114 = vmul.f32 %v3106, %v3067
    %vm3115 = vcmask 80896
    %v3116 = vsel %vm3115, %v3107, 0.0
    %v3117 = vsel %vm3115, %v3108, 0.0
    %v3118 = vadd.f32 %v3116, %v3117
    %v3119 = vsel %vm3115, %v3109, 0.0
    %v3120 = vadd.f32 %v3118, %v3119
    %v3121 = vsel %vm3115, %v3110, 0.0
    %v3122 = vadd.f32 %v3120, %v3121
    %v3123 = vrot.slane %v3122, 4
    %v3124 = vadd.f32 %v3122, %v3123
    %v3125 = vrot.slane %v3124, 2
    %v3126 = vadd.f32 %v3124, %v3125
    %v3127 = vrot.slane %v3126, 1
    %v3128 = vadd.f32 %v3126, %v3127
    %v3129 = vsel %vm3115, %v3111, 0.0
    %v3130 = vsel %vm3115, %v3112, 0.0
    %v3131 = vadd.f32 %v3129, %v3130
    %v3132 = vsel %vm3115, %v3113, 0.0
    %v3133 = vadd.f32 %v3131, %v3132
    %v3134 = vsel %vm3115, %v3114, 0.0
    %v3135 = vadd.f32 %v3133, %v3134
    %v3136 = vrot.slane %v3135, 4
    %v3137 = vadd.f32 %v3135, %v3136
    %v3138 = vrot.slane %v3137, 2
    %v3139 = vadd.f32 %v3137, %v3138
    %v3140 = vrot.slane %v3139, 1
    %v3141 = vadd.f32 %v3139, %v3140
    %v3142 = vlaneseq
    %v3143 = vshrl.u32 %v3142, 7
    %v3144 = vsub.s32 0, %v3143
    %v3145 = vrot.slane %v3068, %v3144
    %v3146 = vadd.f32 %v3128, %v3145
    %v3147 = vadd.f32 %v3141, %v3145
    %v3150 = vrot.slane %v3147, 7
    %vm3151 = vcmask 1041409
    %v3152 = vsel %vm3151, %v3150, %v3146
    %vm3154 = vcmask 74752
    %3155 = vst.msk [vmem:[#allocation9] sm:$0x3] %vm3154, %v3152
    // Predicated region
    $region46: #{tpu_custom_call.1} parent=1 // pred_check
      _
    $region47: #{tpu_custom_call.1} parent=1 // pred_check_branch
      %3157 = sbr.rel (0) target = $region49
    $region48: #{tpu_custom_call.1} parent=1 // pred_region
      %s3159 = ssub.s32 32, 32
      %3160 = vsyncadd [#allocation6], %s3159
      %s3162 = sshll.u32 [#allocation9], 4
      %s3163 = int_to_ptr.vmem [resolvable:$true] %s3162
      %3165 = dma.vmem_to_hbm [thread:$0]  %s3163, 32, %s2, [#allocation6]
    $region49: #{tpu_custom_call.1} parent=1 // pred_fallthru
      _
    // Predicated region
    $region50: #{tpu_custom_call.1} parent=1 // pred_check
      _
    $region51: #{tpu_custom_call.1} parent=1 // pred_check_branch
      %3167 = sbr.rel (0) target = $region53
    $region52: #{tpu_custom_call.1} parent=1 // pred_region
      %3168 = dma.done [#allocation6], 32
    $region53: #{tpu_custom_call.1} parent=1 // pred_fallthru
      _
    %3169 = vsyncpa [#allocation5], 1
    %3170 = vsyncpa [#allocation8], 1
    %3171 = vsyncpa [#allocation6], 1

</llo_original>
